<compile_context>
chip_gen: v7x
topology: tpu7x:2x2x1
jax: 0.10.0
libtpu: 0.0.40
codegen_flags: <defaults>
</compile_context>

<pallas_src>
import jax
import jax.numpy as jnp
from jax.experimental import pallas as pl
from jax.experimental.pallas import tpu as pltpu

P_DROP = 0.1
# Drop iff top-24 random bits < THRESH  ->  P(drop) = THRESH / 2^24 ~= 0.1.
_DROP_THRESHOLD_24 = int(round(P_DROP * (1 << 24)))


def _wrap_i32(v: int) -> int:
    """Wrap an unsigned 32-bit constant into the signed int32 range."""
    v &= 0xFFFFFFFF
    return v - (1 << 32) if v >= (1 << 31) else v


_GOLDEN = _wrap_i32(0x9E3779B9)
_MIX1 = _wrap_i32(0x7FEB352D)
_MIX2 = _wrap_i32(0x846CA68B)


def _srl(v, shift: int):
    """Logical right shift on int32: arithmetic shift, then mask sign bits."""
    mask = (1 << (32 - shift)) - 1
    return (v >> shift) & jnp.int32(mask)


def _dropout_kernel(seed_ref, x_ref, o_ref):
    tile_rows, cols = x_ref.shape
    row0 = pl.program_id(0) * tile_rows

    # Global element index (counter) for every element of this tile.
    row_ids = jax.lax.broadcasted_iota(jnp.int32, (tile_rows, cols), 0) + row0
    col_ids = jax.lax.broadcasted_iota(jnp.int32, (tile_rows, cols), 1)
    idx = row_ids * jnp.int32(cols) + col_ids

    # Counter-based PRNG: lowbias32 hash of (index, seed).  int32 arithmetic
    # wraps; shifts are logical via _srl.  Runs on Mosaic and interpret mode.
    z = idx ^ (seed_ref[0] * jnp.int32(_GOLDEN))
    z = z ^ _srl(z, 16)
    z = z * jnp.int32(_MIX1)
    z = z ^ _srl(z, 15)
    z = z * jnp.int32(_MIX2)
    z = z ^ _srl(z, 16)

    # Top 24 bits -> non-negative uniform int in [0, 2^24).
    r24 = _srl(z, 8)
    keep = r24 >= _DROP_THRESHOLD_24

    scale = jnp.float32(1.0 / (1.0 - P_DROP))
    xf = x_ref[...].astype(jnp.float32)
    o_ref[...] = jnp.where(keep, xf * scale, jnp.float32(0.0)).astype(o_ref.dtype)


def _choose_cols(total: int, last_dim: int) -> int:
    # Lane-dense layout: prefer a last dim that is a multiple of 128.
    for c in (512, 384, 256, 128):
        if total % c == 0:
            return c
    return last_dim


@jax.jit
def dropout_pallas(x, seed):
    """Dropout(p=0.1), training mode.  `seed` is a traced int32 scalar."""
    orig_shape = x.shape
    total = x.size
    cols = _choose_cols(total, orig_shape[-1])
    rows = total // cols
    x2d = x.reshape(rows, cols)

    # ~1 MiB f32 tiles: big enough to hit HBM roofline, small enough for v5e
    # default scoped VMEM and v7x's 64 MiB chip.
    tile_rows = min(512, rows) if rows % 8 == 0 else rows
    num_tiles = pl.cdiv(rows, tile_rows)

    seed_arr = jnp.asarray(seed, dtype=jnp.int32).reshape((1,))

    out2d = pl.pallas_call(
        _dropout_kernel,
        out_shape=jax.ShapeDtypeStruct((rows, cols), x.dtype),
        grid_spec=pltpu.PrefetchScalarGridSpec(
            num_scalar_prefetch=1,  # seed lands in SMEM
            grid=(num_tiles,),
            in_specs=[pl.BlockSpec((tile_rows, cols), lambda i, seed_ref: (i, 0))],
            out_specs=pl.BlockSpec((tile_rows, cols), lambda i, seed_ref: (i, 0)),
        ),
        compiler_params=pltpu.CompilerParams(
            dimension_semantics=("parallel",),   # shard rows across v7x cores
            vmem_limit_bytes=32 * 1024 * 1024,   # headroom vs v5e 16 MiB default
        ),
    )(seed_arr, x2d)

    return out2d.reshape(orig_shape)


if __name__ == "__main__":
    key = jax.random.PRNGKey(0)
    # Small shape consistent with the module's [1, 12, 384, 384] input.
    x = jax.random.normal(key, (1, 12, 256, 128), dtype=jnp.float32)

    y = dropout_pallas(x, jnp.int32(0))
    y = jax.block_until_ready(y)

    # Sanity: every output is either 0 or x / (1 - p), and ~10% are dropped.
    scaled = x / (1.0 - P_DROP)
    is_zero = (y == 0.0)
    is_scaled = jnp.isclose(y, scaled, rtol=1e-5, atol=1e-6)
    assert bool(jnp.all(is_zero | is_scaled)), "output is not a valid dropout of x"
    drop_frac = float(jnp.mean(is_zero.astype(jnp.float32)))
    assert 0.07 < drop_frac < 0.13, f"unexpected drop fraction {drop_frac}"

    # Different seeds give different masks; same seed is reproducible.
    y1 = jax.block_until_ready(dropout_pallas(x, jnp.int32(1)))
    y0 = jax.block_until_ready(dropout_pallas(x, jnp.int32(0)))
    assert bool(jnp.any(y1 != y)), "seed change did not change the mask"
    assert bool(jnp.all(y0 == y)), "same seed is not reproducible"

    print("KERNEL_OK")
</pallas_src>

<mosaic_0001>
module attributes {stable_mosaic.version = 11 : i64} {
  func.func @_dropout_kernel(%arg0: i32, %arg1: memref<1xi32, #tpu.memory_space<smem>>, %arg2: memref<512x512xf32, #tpu.memory_space<vmem>>, %arg3: memref<512x512xf32, #tpu.memory_space<vmem>>) attributes {dimension_semantics = [#tpu.dimension_semantics<parallel>], iteration_bounds = array<i64: 2>, scalar_prefetch = 1 : i64, scratch_operands = 0 : i64, tpu.core_type = #tpu.core_type<tc>, window_params = [{transform_indices = @transform_0, window_bounds = array<i64: 512, 512>}, {transform_indices = @transform_1, window_bounds = array<i64: 512, 512>}]} {
    %c512_i32 = arith.constant 512 : i32
    %0 = arith.muli %arg0, %c512_i32 : i32
    %1 = tpu.iota {dimensions = array<i32: 0>} : vector<512x512xi32>
    %2 = vector.broadcast %0 : i32 to vector<512x512xi32>
    %3 = arith.addi %1, %2 : vector<512x512xi32>
    %4 = tpu.iota {dimensions = array<i32: 1>} : vector<512x512xi32>
    %c512_i32_0 = arith.constant 512 : i32
    %5 = vector.broadcast %c512_i32_0 : i32 to vector<512x512xi32>
    %6 = arith.muli %3, %5 : vector<512x512xi32>
    %7 = arith.addi %6, %4 : vector<512x512xi32>
    %c0 = arith.constant 0 : index
    %8 = memref.load %arg1[%c0] : memref<1xi32, #tpu.memory_space<smem>>
    %c-1640531527_i32 = arith.constant -1640531527 : i32
    %9 = arith.muli %8, %c-1640531527_i32 : i32
    %10 = vector.broadcast %9 : i32 to vector<512x512xi32>
    %11 = arith.xori %7, %10 : vector<512x512xi32>
    %c16_i32 = arith.constant 16 : i32
    %12 = vector.broadcast %c16_i32 : i32 to vector<512x512xi32>
    %13 = arith.shrsi %11, %12 : vector<512x512xi32>
    %c65535_i32 = arith.constant 65535 : i32
    %14 = vector.broadcast %c65535_i32 : i32 to vector<512x512xi32>
    %15 = arith.andi %13, %14 : vector<512x512xi32>
    %16 = arith.xori %11, %15 : vector<512x512xi32>
    %c2146121005_i32 = arith.constant 2146121005 : i32
    %17 = vector.broadcast %c2146121005_i32 : i32 to vector<512x512xi32>
    %18 = arith.muli %16, %17 : vector<512x512xi32>
    %c15_i32 = arith.constant 15 : i32
    %19 = vector.broadcast %c15_i32 : i32 to vector<512x512xi32>
    %20 = arith.shrsi %18, %19 : vector<512x512xi32>
    %c131071_i32 = arith.constant 131071 : i32
    %21 = vector.broadcast %c131071_i32 : i32 to vector<512x512xi32>
    %22 = arith.andi %20, %21 : vector<512x512xi32>
    %23 = arith.xori %18, %22 : vector<512x512xi32>
    %c-2073254261_i32 = arith.constant -2073254261 : i32
    %24 = vector.broadcast %c-2073254261_i32 : i32 to vector<512x512xi32>
    %25 = arith.muli %23, %24 : vector<512x512xi32>
    %c16_i32_1 = arith.constant 16 : i32
    %26 = vector.broadcast %c16_i32_1 : i32 to vector<512x512xi32>
    %27 = arith.shrsi %25, %26 : vector<512x512xi32>
    %c65535_i32_2 = arith.constant 65535 : i32
    %28 = vector.broadcast %c65535_i32_2 : i32 to vector<512x512xi32>
    %29 = arith.andi %27, %28 : vector<512x512xi32>
    %30 = arith.xori %25, %29 : vector<512x512xi32>
    %c8_i32 = arith.constant 8 : i32
    %31 = vector.broadcast %c8_i32 : i32 to vector<512x512xi32>
    %32 = arith.shrsi %30, %31 : vector<512x512xi32>
    %c16777215_i32 = arith.constant 16777215 : i32
    %33 = vector.broadcast %c16777215_i32 : i32 to vector<512x512xi32>
    %34 = arith.andi %32, %33 : vector<512x512xi32>
    %c1677722_i32 = arith.constant 1677722 : i32
    %35 = vector.broadcast %c1677722_i32 : i32 to vector<512x512xi32>
    %36 = arith.cmpi sge, %34, %35 : vector<512x512xi32>
    %c0_3 = arith.constant 0 : index
    %c0_4 = arith.constant 0 : index
    %37 = vector.load %arg2[%c0_3, %c0_4] : memref<512x512xf32, #tpu.memory_space<vmem>>, vector<512x512xf32>
    %cst = arith.constant 1.11111116 : f32
    %38 = vector.broadcast %cst : f32 to vector<512x512xf32>
    %39 = arith.mulf %37, %38 : vector<512x512xf32>
    %cst_5 = arith.constant 0.000000e+00 : f32
    %40 = vector.broadcast %cst_5 : f32 to vector<512x512xf32>
    %41 = arith.select %36, %39, %40 : vector<512x512xi1>, vector<512x512xf32>
    %c0_6 = arith.constant 0 : index
    %c0_7 = arith.constant 0 : index
    %42 = vector.load %arg3[%c0_6, %c0_7] : memref<512x512xf32, #tpu.memory_space<vmem>>, vector<512x512xf32>
    tpu.vector_store %arg3[%c0_6, %c0_7], %41 {strides = array<i32>} : memref<512x512xf32, #tpu.memory_space<vmem>>, vector<512x512xf32>,
    return
  }
  func.func @transform_0(%arg0: i32, %arg1: memref<1xi32, #tpu.memory_space<smem>>) -> (i32, i32) {
    %c0_i32 = arith.constant 0 : i32
    %c0_i32_0 = arith.constant 0 : i32
    return %arg0, %c0_i32 : i32, i32
  }
  func.func @transform_1(%arg0: i32, %arg1: memref<1xi32, #tpu.memory_space<smem>>) -> (i32, i32) {
    %c0_i32 = arith.constant 0 : i32
    %c0_i32_0 = arith.constant 0 : i32
    return %arg0, %c0_i32 : i32, i32
  }
}

</mosaic_0001>

<llo_original>
// kernel: dropout_pallas.1
$region0: #{dropout_pallas.1}
  #allocation0 [shape = 'u32[]', space=smem, size = 0x4, offset = 0x4, fixed_abs, tag = 'smem constant byte address 0x4 - core index']
  #allocation1 [shape = 'u32[144,128]{1,0:T(1,128)}', space=vmem, size = 0x12000, scoped, tag = 'internal scratch']
  #allocation2 [shape = 's32[1]{0}', space=sflag, size = 0x4, scoped, tag = 'scoped memory for dropout_pallas.1']
  #allocation3 [shape = 's32[1]{0:T(128)S(6)}', space=smem, size = 0x200, scoped, tag = 'prefetched SMEM operand 0']
  %s0 = inlined_call_operand.<no memory space> [shape: s32[1], index: 0, kind: input, shape index: {}]
  %s1 = inlined_call_operand.vmem [shape: f32[768,512], index: 1, kind: input, shape index: {}]
  %s2 = inlined_call_operand.vmem [shape: f32[768,512], index: 2, kind: output, shape index: {}]
  %s3 = sld [smem:[#allocation0]]
  $region63: #{dropout_pallas.1} parent=0
    _
  %s5 = ssub.s32 1, %s3
  %s6 = scalar_select 0, %s5, %s3
  %7 = sst [smem:[#allocation3]] %s0
  $region1: #{dropout_pallas.1} parent=0
    #allocation4 [shape = 'u8[2097152]{0}', space=vmem, size = 0x200000, scoped, tag = 'output window, operand 0']
    loop: start=0, step=1, limit=4
    $region2: #{dropout_pallas.1} parent=1 // loop_pre_header
      _
    $region3: #{dropout_pallas.1} parent=1 // loop_header
      %s9 = sphi 0, %s13
      %p10 = scmp.ge.s32.totalorder %s9, 4
      %s19 = sphi 0, %s21
      %s22 = sphi 0, %s19
      %s23 = sphi 0, %s22
      %s39 = sphi 0, %s23
      %s45 = sphi 0, %s47
      %s48 = sphi 0, %s45
      %s49 = sphi 0, %s48
      %s65 = sphi 0, %s49
    $region4: #{dropout_pallas.1} parent=1 // loop_header_branch
      %12 = sbr.rel (%p10) target = $region8
    $region5: #{dropout_pallas.1} parent=1 // loop_body
      %s14 = ssub.s32 %s9, 1
      %s15 = ssub.s32 %s9, 2
      %s16 = sadd.s32 %s9, 1
      %s17 = ssub.s32 %s9, %s16
      %p18 = scmp.eq.s32.totalorder %s17, 0
      %s20 = sadd.s32 %s19, 1
      %s21 = scalar_select %p18, %s19, %s20
      %p24 = pneg %p18
      %p25 = scmp.eq.s32.totalorder %s9, 1
      %p26 = por %p24, %p25
      %p27 = scmp.ne.s32.totalorder %s19, %s22
      %p28 = scmp.eq.s32.totalorder %s9, 0
      %p29 = por %p27, %p28
      %p30 = scmp.ne.s32.totalorder %s19, %s22
      %p31 = scmp.eq.s32.totalorder %s14, 1
      %p32 = por %p30, %p31
      %p33 = scmp.ne.s32.totalorder %s22, %s23
      %p34 = scmp.eq.s32.totalorder %s14, 0
      %p35 = por %p33, %p34
      %p36 = scmp.ne.s32.totalorder %s22, %s23
      %p37 = scmp.eq.s32.totalorder %s15, 1
      %p38 = por %p36, %p37
      %p40 = scmp.ne.s32.totalorder %s23, %s39
      %p41 = scmp.eq.s32.totalorder %s15, 0
      %p42 = por %p40, %p41
      %s43 = ssub.s32 %s9, %s16
      %p44 = scmp.eq.s32.totalorder %s43, 0
      %s46 = sadd.s32 %s45, 1
      %s47 = scalar_select %p44, %s45, %s46
      %p50 = pneg %p44
      %p51 = scmp.eq.s32.totalorder %s9, 1
      %p52 = por %p50, %p51
      %p53 = scmp.ne.s32.totalorder %s45, %s48
      %p54 = scmp.eq.s32.totalorder %s9, 0
      %p55 = por %p53, %p54
      %p56 = scmp.ne.s32.totalorder %s45, %s48
      %p57 = scmp.eq.s32.totalorder %s14, 1
      %p58 = por %p56, %p57
      %p59 = scmp.ne.s32.totalorder %s48, %s49
      %p60 = scmp.eq.s32.totalorder %s14, 0
      %p61 = por %p59, %p60
      %p62 = scmp.ne.s32.totalorder %s48, %s49
      %p63 = scmp.eq.s32.totalorder %s15, 1
      %p64 = por %p62, %p63
      %p66 = scmp.ne.s32.totalorder %s49, %s65
      %p67 = scmp.eq.s32.totalorder %s15, 0
      %p68 = por %p66, %p67
      %p69 = scmp.le.s32.totalorder 1, %s9
      %p70 = scmp.lt.s32.totalorder %s9, 3
      %p71 = pnand %p69, %p70
      %p72 = pneg %p71
      // Predicated region
      $region9: #{dropout_pallas.1} parent=5 // pred_check
        _
      $region10: #{dropout_pallas.1} parent=5 // pred_check_branch
        %74 = sbr.rel (%p71) target = $region12
      $region11: #{dropout_pallas.1} parent=5 // pred_region
        %s75 = ssub.s32 %s9, 1
      $region12: #{dropout_pallas.1} parent=5 // pred_fallthru
        _
      %p76 = scmp.lt.s32.totalorder %s9, 2
      // Predicated region
      $region13: #{dropout_pallas.1} parent=5 // pred_check
        %p77 = pneg %p76
      $region14: #{dropout_pallas.1} parent=5 // pred_check_branch
        %79 = sbr.rel (%p77) target = $region16
      $region15: #{dropout_pallas.1} parent=5 // pred_region
        // Predicated region
        $region17: #{dropout_pallas.1} parent=15 // pred_check
          %p80 = pneg %p29
        $region18: #{dropout_pallas.1} parent=15 // pred_check_branch
          %82 = sbr.rel (%p80) target = $region20
        $region19: #{dropout_pallas.1} parent=15 // pred_region
          %s83 = smul.u32 64, %s9
          %s84 = ssub.s32 96, %s83
          %p85 = scmp.lt.s32.totalorder %s84, 64
          %s86 = scalar_select %p85, %s84, 64
          %s87 = smul.u32 128, %s86
          %s88 = smul.u32 %s87, 4
          %p89 = scmp.lt.s32.totalorder %s83, 95
          %s90 = scalar_select %p89, %s83, 95
          %s91 = smul.addr %s90, 4
          %s92 = smul.addr %s91, 8
          %s93 = scalar_lea.vmem %s1, %s92
          %s94 = smul.u32 64, %s9
          %s95 = ssub.s32 96, %s94
          %p96 = scmp.lt.s32.totalorder %s95, 64
          %s97 = scalar_select %p96, %s95, 64
          %s98 = smul.u32 128, %s97
          %s99 = smul.u32 %s98, 4
        $region20: #{dropout_pallas.1} parent=15 // pred_fallthru
          _
      $region16: #{dropout_pallas.1} parent=5 // pred_fallthru
        _
      %p100 = scmp.le.s32.totalorder 1, %s9
      %p101 = scmp.lt.s32.totalorder %s9, 3
      %p102 = pnand %p100, %p101
      %p103 = pneg %p102
      // Predicated region
      $region21: #{dropout_pallas.1} parent=5 // pred_check
        _
      $region22: #{dropout_pallas.1} parent=5 // pred_check_branch
        %105 = sbr.rel (%p102) target = $region24
      $region23: #{dropout_pallas.1} parent=5 // pred_region
        %s106 = ssub.s32 %s9, 1
        %s107 = smul.u32 64, %s14
        %s108 = ssub.s32 96, %s107
        %p109 = scmp.lt.s32.totalorder %s108, 64
        %s110 = scalar_select %p109, %s108, 64
        %s111 = smul.u32 128, %s110
        %s112 = smul.u32 %s111, 4
        %p113 = scmp.lt.s32.totalorder %s107, 95
        %s114 = scalar_select %p113, %s107, 95
        %s115 = smul.addr %s114, 4
        %s116 = smul.addr %s115, 8
        %s117 = scalar_lea.vmem %s1, %s116
        %p118 = pneg %p35
        %p119 = pneg %p32
        %p120 = pneg %p61
        %p121 = pneg %p58
        %s122 = sand.u32 %s48, 1
        %s123 = sand.u32 %s48, 1
        %s124 = smul.addr %s123, 2048
        %s125 = scalar_lea.vmem [#allocation4], %s124
        %s126 = smul.u32 64, %s14
        %s127 = ssub.s32 96, %s126
        %p128 = scmp.lt.s32.totalorder %s127, 64
        %s129 = scalar_select %p128, %s127, 64
        %s130 = smul.u32 128, %s129
        %s131 = smul.u32 %s130, 4
        %p132 = scmp.lt.s32.totalorder %s126, 95
        %s133 = scalar_select %p132, %s126, 95
        %s134 = smul.addr %s133, 4
        %s135 = smul.addr %s134, 8
        %s136 = scalar_lea.vmem %s1, %s135
        %s137 = smul.u32 64, %s14
        %s138 = ssub.s32 96, %s137
        %p139 = scmp.lt.s32.totalorder %s138, 64
        %s140 = scalar_select %p139, %s138, 64
        %s141 = smul.u32 128, %s140
        %s142 = smul.u32 %s141, 4
        %s143 = smul.u32 64, %s14
        %s144 = ssub.s32 96, %s143
        %p145 = scmp.lt.s32.totalorder %s144, 64
        %s146 = scalar_select %p145, %s144, 64
        %s147 = smul.u32 128, %s146
        %s148 = smul.u32 %s147, 4
        %s149 = smul.u32 %s14, 512
        %v150 = vlaneseq
        %v151 = vshrl.u32 %v150, 7
        %v152 = vadd.s32 %v151, 8
        %v153 = vadd.s32 %v151, 16
        %v154 = vadd.s32 %v151, 24
        %v155 = vadd.s32 %v151, 32
        %v156 = vadd.s32 %v151, 40
        %v157 = vadd.s32 %v151, 48
        %v158 = vadd.s32 %v151, 56
        %v159 = vadd.s32 %v151, 64
        %v160 = vadd.s32 %v151, 72
        %v161 = vadd.s32 %v151, 80
        %v162 = vadd.s32 %v151, 88
        %v163 = vadd.s32 %v151, 96
        %v164 = vadd.s32 %v151, 104
        %v165 = vadd.s32 %v151, 112
        %v166 = vadd.s32 %v151, 120
        %v167 = vadd.s32 %v151, 128
        %v168 = vadd.s32 %v151, 136
        %v169 = vadd.s32 %v151, 144
        %v170 = vadd.s32 %v151, 152
        %v171 = vadd.s32 %v151, 160
        %v172 = vadd.s32 %v151, 168
        %v173 = vadd.s32 %v151, 176
        %v174 = vadd.s32 %v151, 184
        %v175 = vadd.s32 %v151, 192
        %v176 = vadd.s32 %v151, 200
        %v177 = vadd.s32 %v151, 208
        %v178 = vadd.s32 %v151, 216
        %v179 = vadd.s32 %v151, 224
        %v180 = vadd.s32 %v151, 232
        %v181 = vadd.s32 %v151, 240
        %v182 = vadd.s32 %v151, 248
        %v183 = vadd.s32 %v151, 256
        %v184 = vadd.s32 %v151, 264
        %v185 = vadd.s32 %v151, 272
        %v186 = vadd.s32 %v151, 280
        %v187 = vadd.s32 %v151, 288
        %v188 = vadd.s32 %v151, 296
        %v189 = vadd.s32 %v151, 304
        %v190 = vadd.s32 %v151, 312
        %v191 = vadd.s32 %v151, 320
        %v192 = vadd.s32 %v151, 328
        %v193 = vadd.s32 %v151, 336
        %v194 = vadd.s32 %v151, 344
        %v195 = vadd.s32 %v151, 352
        %v196 = vadd.s32 %v151, 360
        %v197 = vadd.s32 %v151, 368
        %v198 = vadd.s32 %v151, 376
        %v199 = vadd.s32 %v151, 384
        %v200 = vadd.s32 %v151, 392
        %v201 = vadd.s32 %v151, 400
        %v202 = vadd.s32 %v151, 408
        %v203 = vadd.s32 %v151, 416
        %v204 = vadd.s32 %v151, 424
        %v205 = vadd.s32 %v151, 432
        %v206 = vadd.s32 %v151, 440
        %v207 = vadd.s32 %v151, 448
        %v208 = vadd.s32 %v151, 456
        %v209 = vadd.s32 %v151, 464
        %v210 = vadd.s32 %v151, 472
        %v211 = vadd.s32 %v151, 480
        %v212 = vadd.s32 %v151, 488
        %v213 = vadd.s32 %v151, 496
        %v214 = vadd.s32 %v151, 504
        %v215 = vstv %s149
        %v216 = vadd.s32 %v151, %v215
        %v217 = vadd.s32 %v152, %v215
        %v218 = vadd.s32 %v153, %v215
        %v219 = vadd.s32 %v154, %v215
        %v220 = vadd.s32 %v155, %v215
        %v221 = vadd.s32 %v156, %v215
        %v222 = vadd.s32 %v157, %v215
        %v223 = vadd.s32 %v158, %v215
        %v224 = vadd.s32 %v159, %v215
        %v225 = vadd.s32 %v160, %v215
        %v226 = vadd.s32 %v161, %v215
        %v227 = vadd.s32 %v162, %v215
        %v228 = vadd.s32 %v163, %v215
        %v229 = vadd.s32 %v164, %v215
        %v230 = vadd.s32 %v165, %v215
        %v231 = vadd.s32 %v166, %v215
        %v232 = vadd.s32 %v167, %v215
        %v233 = vadd.s32 %v168, %v215
        %v234 = vadd.s32 %v169, %v215
        %v235 = vadd.s32 %v170, %v215
        %v236 = vadd.s32 %v171, %v215
        %v237 = vadd.s32 %v172, %v215
        %v238 = vadd.s32 %v173, %v215
        %v239 = vadd.s32 %v174, %v215
        %v240 = vadd.s32 %v175, %v215
        %v241 = vadd.s32 %v176, %v215
        %v242 = vadd.s32 %v177, %v215
        %v243 = vadd.s32 %v178, %v215
        %v244 = vadd.s32 %v179, %v215
        %v245 = vadd.s32 %v180, %v215
        %v246 = vadd.s32 %v181, %v215
        %v247 = vadd.s32 %v182, %v215
        %v248 = vadd.s32 %v183, %v215
        %v249 = vadd.s32 %v184, %v215
        %v250 = vadd.s32 %v185, %v215
        %v251 = vadd.s32 %v186, %v215
        %v252 = vadd.s32 %v187, %v215
        %v253 = vadd.s32 %v188, %v215
        %v254 = vadd.s32 %v189, %v215
        %v255 = vadd.s32 %v190, %v215
        %v256 = vadd.s32 %v191, %v215
        %v257 = vadd.s32 %v192, %v215
        %v258 = vadd.s32 %v193, %v215
        %v259 = vadd.s32 %v194, %v215
        %v260 = vadd.s32 %v195, %v215
        %v261 = vadd.s32 %v196, %v215
        %v262 = vadd.s32 %v197, %v215
        %v263 = vadd.s32 %v198, %v215
        %v264 = vadd.s32 %v199, %v215
        %v265 = vadd.s32 %v200, %v215
        %v266 = vadd.s32 %v201, %v215
        %v267 = vadd.s32 %v202, %v215
        %v268 = vadd.s32 %v203, %v215
        %v269 = vadd.s32 %v204, %v215
        %v270 = vadd.s32 %v205, %v215
        %v271 = vadd.s32 %v206, %v215
        %v272 = vadd.s32 %v207, %v215
        %v273 = vadd.s32 %v208, %v215
        %v274 = vadd.s32 %v209, %v215
        %v275 = vadd.s32 %v210, %v215
        %v276 = vadd.s32 %v211, %v215
        %v277 = vadd.s32 %v212, %v215
        %v278 = vadd.s32 %v213, %v215
        %v279 = vadd.s32 %v214, %v215
        %v280 = vlaneseq
        %v281 = vand.u32 %v280, 127
        %v282 = vadd.s32 %v281, 128
        %v283 = vadd.s32 %v281, 256
        %v284 = vadd.s32 %v281, 384
        %v285 = vmul.u32 %v216, 512
        %v286 = vmul.u32 %v217, 512
        %v287 = vmul.u32 %v218, 512
        %v288 = vmul.u32 %v219, 512
        %v289 = vmul.u32 %v220, 512
        %v290 = vmul.u32 %v221, 512
        %v291 = vmul.u32 %v222, 512
        %v292 = vmul.u32 %v223, 512
        %v293 = vmul.u32 %v224, 512
        %v294 = vmul.u32 %v225, 512
        %v295 = vmul.u32 %v226, 512
        %v296 = vmul.u32 %v227, 512
        %v297 = vmul.u32 %v228, 512
        %v298 = vmul.u32 %v229, 512
        %v299 = vmul.u32 %v230, 512
        %v300 = vmul.u32 %v231, 512
        %v301 = vmul.u32 %v232, 512
        %v302 = vmul.u32 %v233, 512
        %v303 = vmul.u32 %v234, 512
        %v304 = vmul.u32 %v235, 512
        %v305 = vmul.u32 %v236, 512
        %v306 = vmul.u32 %v237, 512
        %v307 = vmul.u32 %v238, 512
        %v308 = vmul.u32 %v239, 512
        %v309 = vmul.u32 %v240, 512
        %v310 = vmul.u32 %v241, 512
        %v311 = vmul.u32 %v242, 512
        %v312 = vmul.u32 %v243, 512
        %v313 = vmul.u32 %v244, 512
        %v314 = vmul.u32 %v245, 512
        %v315 = vmul.u32 %v246, 512
        %v316 = vmul.u32 %v247, 512
        %v317 = vmul.u32 %v248, 512
        %v318 = vmul.u32 %v249, 512
        %v319 = vmul.u32 %v250, 512
        %v320 = vmul.u32 %v251, 512
        %v321 = vmul.u32 %v252, 512
        %v322 = vmul.u32 %v253, 512
        %v323 = vmul.u32 %v254, 512
        %v324 = vmul.u32 %v255, 512
        %v325 = vmul.u32 %v256, 512
        %v326 = vmul.u32 %v257, 512
        %v327 = vmul.u32 %v258, 512
        %v328 = vmul.u32 %v259, 512
        %v329 = vmul.u32 %v260, 512
        %v330 = vmul.u32 %v261, 512
        %v331 = vmul.u32 %v262, 512
        %v332 = vmul.u32 %v263, 512
        %v333 = vmul.u32 %v264, 512
        %v334 = vmul.u32 %v265, 512
        %v335 = vmul.u32 %v266, 512
        %v336 = vmul.u32 %v267, 512
        %v337 = vmul.u32 %v268, 512
        %v338 = vmul.u32 %v269, 512
        %v339 = vmul.u32 %v270, 512
        %v340 = vmul.u32 %v271, 512
        %v341 = vmul.u32 %v272, 512
        %v342 = vmul.u32 %v273, 512
        %v343 = vmul.u32 %v274, 512
        %v344 = vmul.u32 %v275, 512
        %v345 = vmul.u32 %v276, 512
        %v346 = vmul.u32 %v277, 512
        %v347 = vmul.u32 %v278, 512
        %v348 = vmul.u32 %v279, 512
        %v349 = vadd.s32 %v285, %v281
        %v350 = vadd.s32 %v285, %v282
        %v351 = vadd.s32 %v285, %v283
        %v352 = vadd.s32 %v285, %v284
        %v353 = vadd.s32 %v286, %v281
        %v354 = vadd.s32 %v286, %v282
        %v355 = vadd.s32 %v286, %v283
        %v356 = vadd.s32 %v286, %v284
        %v357 = vadd.s32 %v287, %v281
        %v358 = vadd.s32 %v287, %v282
        %v359 = vadd.s32 %v287, %v283
        %v360 = vadd.s32 %v287, %v284
        %v361 = vadd.s32 %v288, %v281
        %v362 = vadd.s32 %v288, %v282
        %v363 = vadd.s32 %v288, %v283
        %v364 = vadd.s32 %v288, %v284
        %v365 = vadd.s32 %v289, %v281
        %v366 = vadd.s32 %v289, %v282
        %v367 = vadd.s32 %v289, %v283
        %v368 = vadd.s32 %v289, %v284
        %v369 = vadd.s32 %v290, %v281
        %v370 = vadd.s32 %v290, %v282
        %v371 = vadd.s32 %v290, %v283
        %v372 = vadd.s32 %v290, %v284
        %v373 = vadd.s32 %v291, %v281
        %v374 = vadd.s32 %v291, %v282
        %v375 = vadd.s32 %v291, %v283
        %v376 = vadd.s32 %v291, %v284
        %v377 = vadd.s32 %v292, %v281
        %v378 = vadd.s32 %v292, %v282
        %v379 = vadd.s32 %v292, %v283
        %v380 = vadd.s32 %v292, %v284
        %v381 = vadd.s32 %v293, %v281
        %v382 = vadd.s32 %v293, %v282
        %v383 = vadd.s32 %v293, %v283
        %v384 = vadd.s32 %v293, %v284
        %v385 = vadd.s32 %v294, %v281
        %v386 = vadd.s32 %v294, %v282
        %v387 = vadd.s32 %v294, %v283
        %v388 = vadd.s32 %v294, %v284
        %v389 = vadd.s32 %v295, %v281
        %v390 = vadd.s32 %v295, %v282
        %v391 = vadd.s32 %v295, %v283
        %v392 = vadd.s32 %v295, %v284
        %v393 = vadd.s32 %v296, %v281
        %v394 = vadd.s32 %v296, %v282
        %v395 = vadd.s32 %v296, %v283
        %v396 = vadd.s32 %v296, %v284
        %v397 = vadd.s32 %v297, %v281
        %v398 = vadd.s32 %v297, %v282
        %v399 = vadd.s32 %v297, %v283
        %v400 = vadd.s32 %v297, %v284
        %v401 = vadd.s32 %v298, %v281
        %v402 = vadd.s32 %v298, %v282
        %v403 = vadd.s32 %v298, %v283
        %v404 = vadd.s32 %v298, %v284
        %v405 = vadd.s32 %v299, %v281
        %v406 = vadd.s32 %v299, %v282
        %v407 = vadd.s32 %v299, %v283
        %v408 = vadd.s32 %v299, %v284
        %v409 = vadd.s32 %v300, %v281
        %v410 = vadd.s32 %v300, %v282
        %v411 = vadd.s32 %v300, %v283
        %v412 = vadd.s32 %v300, %v284
        %v413 = vadd.s32 %v301, %v281
        %v414 = vadd.s32 %v301, %v282
        %v415 = vadd.s32 %v301, %v283
        %v416 = vadd.s32 %v301, %v284
        %v417 = vadd.s32 %v302, %v281
        %v418 = vadd.s32 %v302, %v282
        %v419 = vadd.s32 %v302, %v283
        %v420 = vadd.s32 %v302, %v284
        %v421 = vadd.s32 %v303, %v281
        %v422 = vadd.s32 %v303, %v282
        %v423 = vadd.s32 %v303, %v283
        %v424 = vadd.s32 %v303, %v284
        %v425 = vadd.s32 %v304, %v281
        %v426 = vadd.s32 %v304, %v282
        %v427 = vadd.s32 %v304, %v283
        %v428 = vadd.s32 %v304, %v284
        %v429 = vadd.s32 %v305, %v281
        %v430 = vadd.s32 %v305, %v282
        %v431 = vadd.s32 %v305, %v283
        %v432 = vadd.s32 %v305, %v284
        %v433 = vadd.s32 %v306, %v281
        %v434 = vadd.s32 %v306, %v282
        %v435 = vadd.s32 %v306, %v283
        %v436 = vadd.s32 %v306, %v284
        %v437 = vadd.s32 %v307, %v281
        %v438 = vadd.s32 %v307, %v282
        %v439 = vadd.s32 %v307, %v283
        %v440 = vadd.s32 %v307, %v284
        %v441 = vadd.s32 %v308, %v281
        %v442 = vadd.s32 %v308, %v282
        %v443 = vadd.s32 %v308, %v283
        %v444 = vadd.s32 %v308, %v284
        %v445 = vadd.s32 %v309, %v281
        %v446 = vadd.s32 %v309, %v282
        %v447 = vadd.s32 %v309, %v283
        %v448 = vadd.s32 %v309, %v284
        %v449 = vadd.s32 %v310, %v281
        %v450 = vadd.s32 %v310, %v282
        %v451 = vadd.s32 %v310, %v283
        %v452 = vadd.s32 %v310, %v284
        %v453 = vadd.s32 %v311, %v281
        %v454 = vadd.s32 %v311, %v282
        %v455 = vadd.s32 %v311, %v283
        %v456 = vadd.s32 %v311, %v284
        %v457 = vadd.s32 %v312, %v281
        %v458 = vadd.s32 %v312, %v282
        %v459 = vadd.s32 %v312, %v283
        %v460 = vadd.s32 %v312, %v284
        %v461 = vadd.s32 %v313, %v281
        %v462 = vadd.s32 %v313, %v282
        %v463 = vadd.s32 %v313, %v283
        %v464 = vadd.s32 %v313, %v284
        %v465 = vadd.s32 %v314, %v281
        %v466 = vadd.s32 %v314, %v282
        %v467 = vadd.s32 %v314, %v283
        %v468 = vadd.s32 %v314, %v284
        %v469 = vadd.s32 %v315, %v281
        %v470 = vadd.s32 %v315, %v282
        %v471 = vadd.s32 %v315, %v283
        %v472 = vadd.s32 %v315, %v284
        %v473 = vadd.s32 %v316, %v281
        %v474 = vadd.s32 %v316, %v282
        %v475 = vadd.s32 %v316, %v283
        %v476 = vadd.s32 %v316, %v284
        %v477 = vadd.s32 %v317, %v281
        %v478 = vadd.s32 %v317, %v282
        %v479 = vadd.s32 %v317, %v283
        %v480 = vadd.s32 %v317, %v284
        %v481 = vadd.s32 %v318, %v281
        %v482 = vadd.s32 %v318, %v282
        %v483 = vadd.s32 %v318, %v283
        %v484 = vadd.s32 %v318, %v284
        %v485 = vadd.s32 %v319, %v281
        %v486 = vadd.s32 %v319, %v282
        %v487 = vadd.s32 %v319, %v283
        %v488 = vadd.s32 %v319, %v284
        %v489 = vadd.s32 %v320, %v281
        %v490 = vadd.s32 %v320, %v282
        %v491 = vadd.s32 %v320, %v283
        %v492 = vadd.s32 %v320, %v284
        %v493 = vadd.s32 %v321, %v281
        %v494 = vadd.s32 %v321, %v282
        %v495 = vadd.s32 %v321, %v283
        %v496 = vadd.s32 %v321, %v284
        %v497 = vadd.s32 %v322, %v281
        %v498 = vadd.s32 %v322, %v282
        %v499 = vadd.s32 %v322, %v283
        %v500 = vadd.s32 %v322, %v284
        %v501 = vadd.s32 %v323, %v281
        %v502 = vadd.s32 %v323, %v282
        %v503 = vadd.s32 %v323, %v283
        %v504 = vadd.s32 %v323, %v284
        %v505 = vadd.s32 %v324, %v281
        %v506 = vadd.s32 %v324, %v282
        %v507 = vadd.s32 %v324, %v283
        %v508 = vadd.s32 %v324, %v284
        %v509 = vadd.s32 %v325, %v281
        %v510 = vadd.s32 %v325, %v282
        %v511 = vadd.s32 %v325, %v283
        %v512 = vadd.s32 %v325, %v284
        %v513 = vadd.s32 %v326, %v281
        %v514 = vadd.s32 %v326, %v282
        %v515 = vadd.s32 %v326, %v283
        %v516 = vadd.s32 %v326, %v284
        %v517 = vadd.s32 %v327, %v281
        %v518 = vadd.s32 %v327, %v282
        %v519 = vadd.s32 %v327, %v283
        %v520 = vadd.s32 %v327, %v284
        %v521 = vadd.s32 %v328, %v281
        %v522 = vadd.s32 %v328, %v282
        %v523 = vadd.s32 %v328, %v283
        %v524 = vadd.s32 %v328, %v284
        %v525 = vadd.s32 %v329, %v281
        %v526 = vadd.s32 %v329, %v282
        %v527 = vadd.s32 %v329, %v283
        %v528 = vadd.s32 %v329, %v284
        %v529 = vadd.s32 %v330, %v281
        %v530 = vadd.s32 %v330, %v282
        %v531 = vadd.s32 %v330, %v283
        %v532 = vadd.s32 %v330, %v284
        %v533 = vadd.s32 %v331, %v281
        %v534 = vadd.s32 %v331, %v282
        %v535 = vadd.s32 %v331, %v283
        %v536 = vadd.s32 %v331, %v284
        %v537 = vadd.s32 %v332, %v281
        %v538 = vadd.s32 %v332, %v282
        %v539 = vadd.s32 %v332, %v283
        %v540 = vadd.s32 %v332, %v284
        %v541 = vadd.s32 %v333, %v281
        %v542 = vadd.s32 %v333, %v282
        %v543 = vadd.s32 %v333, %v283
        %v544 = vadd.s32 %v333, %v284
        %v545 = vadd.s32 %v334, %v281
        %v546 = vadd.s32 %v334, %v282
        %v547 = vadd.s32 %v334, %v283
        %v548 = vadd.s32 %v334, %v284
        %v549 = vadd.s32 %v335, %v281
        %v550 = vadd.s32 %v335, %v282
        %v551 = vadd.s32 %v335, %v283
        %v552 = vadd.s32 %v335, %v284
        %v553 = vadd.s32 %v336, %v281
        %v554 = vadd.s32 %v336, %v282
        %v555 = vadd.s32 %v336, %v283
        %v556 = vadd.s32 %v336, %v284
        %v557 = vadd.s32 %v337, %v281
        %v558 = vadd.s32 %v337, %v282
        %v559 = vadd.s32 %v337, %v283
        %v560 = vadd.s32 %v337, %v284
        %v561 = vadd.s32 %v338, %v281
        %v562 = vadd.s32 %v338, %v282
        %v563 = vadd.s32 %v338, %v283
        %v564 = vadd.s32 %v338, %v284
        %v565 = vadd.s32 %v339, %v281
        %v566 = vadd.s32 %v339, %v282
        %v567 = vadd.s32 %v339, %v283
        %v568 = vadd.s32 %v339, %v284
        %v569 = vadd.s32 %v340, %v281
        %v570 = vadd.s32 %v340, %v282
        %v571 = vadd.s32 %v340, %v283
        %v572 = vadd.s32 %v340, %v284
        %v573 = vadd.s32 %v341, %v281
        %v574 = vadd.s32 %v341, %v282
        %v575 = vadd.s32 %v341, %v283
        %v576 = vadd.s32 %v341, %v284
        %v577 = vadd.s32 %v342, %v281
        %v578 = vadd.s32 %v342, %v282
        %v579 = vadd.s32 %v342, %v283
        %v580 = vadd.s32 %v342, %v284
        %v581 = vadd.s32 %v343, %v281
        %v582 = vadd.s32 %v343, %v282
        %v583 = vadd.s32 %v343, %v283
        %v584 = vadd.s32 %v343, %v284
        %v585 = vadd.s32 %v344, %v281
        %v586 = vadd.s32 %v344, %v282
        %v587 = vadd.s32 %v344, %v283
        %v588 = vadd.s32 %v344, %v284
        %v589 = vadd.s32 %v345, %v281
        %v590 = vadd.s32 %v345, %v282
        %v591 = vadd.s32 %v345, %v283
        %v592 = vadd.s32 %v345, %v284
        %v593 = vadd.s32 %v346, %v281
        %v594 = vadd.s32 %v346, %v282
        %v595 = vadd.s32 %v346, %v283
        %v596 = vadd.s32 %v346, %v284
        %v597 = vadd.s32 %v347, %v281
        %v598 = vadd.s32 %v347, %v282
        %v599 = vadd.s32 %v347, %v283
        %v600 = vadd.s32 %v347, %v284
        %v601 = vadd.s32 %v348, %v281
        %v602 = vadd.s32 %v348, %v282
        %v603 = vadd.s32 %v348, %v283
        %v604 = vadd.s32 %v348, %v284
        %s605 = sld [smem:[#allocation3]]
        %s606 = smul.u32 %s605, 2654435769
        %v607 = vstv %s606
        %v608 = vxor.u32 %v349, %v607
        %v609 = vxor.u32 %v350, %v607
        %v610 = vxor.u32 %v351, %v607
        %v611 = vxor.u32 %v352, %v607
        %v612 = vxor.u32 %v353, %v607
        %v613 = vxor.u32 %v354, %v607
        %v614 = vxor.u32 %v355, %v607
        %v615 = vxor.u32 %v356, %v607
        %v616 = vxor.u32 %v357, %v607
        %v617 = vxor.u32 %v358, %v607
        %v618 = vxor.u32 %v359, %v607
        %v619 = vxor.u32 %v360, %v607
        %v620 = vxor.u32 %v361, %v607
        %v621 = vxor.u32 %v362, %v607
        %v622 = vxor.u32 %v363, %v607
        %v623 = vxor.u32 %v364, %v607
        %v624 = vxor.u32 %v365, %v607
        %v625 = vxor.u32 %v366, %v607
        %v626 = vxor.u32 %v367, %v607
        %v627 = vxor.u32 %v368, %v607
        %v628 = vxor.u32 %v369, %v607
        %v629 = vxor.u32 %v370, %v607
        %v630 = vxor.u32 %v371, %v607
        %v631 = vxor.u32 %v372, %v607
        %v632 = vxor.u32 %v373, %v607
        %v633 = vxor.u32 %v374, %v607
        %v634 = vxor.u32 %v375, %v607
        %v635 = vxor.u32 %v376, %v607
        %v636 = vxor.u32 %v377, %v607
        %v637 = vxor.u32 %v378, %v607
        %v638 = vxor.u32 %v379, %v607
        %v639 = vxor.u32 %v380, %v607
        %v640 = vxor.u32 %v381, %v607
        %v641 = vxor.u32 %v382, %v607
        %v642 = vxor.u32 %v383, %v607
        %v643 = vxor.u32 %v384, %v607
        %v644 = vxor.u32 %v385, %v607
        %v645 = vxor.u32 %v386, %v607
        %v646 = vxor.u32 %v387, %v607
        %v647 = vxor.u32 %v388, %v607
        %v648 = vxor.u32 %v389, %v607
        %v649 = vxor.u32 %v390, %v607
        %v650 = vxor.u32 %v391, %v607
        %v651 = vxor.u32 %v392, %v607
        %v652 = vxor.u32 %v393, %v607
        %v653 = vxor.u32 %v394, %v607
        %v654 = vxor.u32 %v395, %v607
        %v655 = vxor.u32 %v396, %v607
        %v656 = vxor.u32 %v397, %v607
        %v657 = vxor.u32 %v398, %v607
        %v658 = vxor.u32 %v399, %v607
        %v659 = vxor.u32 %v400, %v607
        %v660 = vxor.u32 %v401, %v607
        %v661 = vxor.u32 %v402, %v607
        %v662 = vxor.u32 %v403, %v607
        %v663 = vxor.u32 %v404, %v607
        %v664 = vxor.u32 %v405, %v607
        %v665 = vxor.u32 %v406, %v607
        %v666 = vxor.u32 %v407, %v607
        %v667 = vxor.u32 %v408, %v607
        %v668 = vxor.u32 %v409, %v607
        %v669 = vxor.u32 %v410, %v607
        %v670 = vxor.u32 %v411, %v607
        %v671 = vxor.u32 %v412, %v607
        %v672 = vxor.u32 %v413, %v607
        %v673 = vxor.u32 %v414, %v607
        %v674 = vxor.u32 %v415, %v607
        %v675 = vxor.u32 %v416, %v607
        %v676 = vxor.u32 %v417, %v607
        %v677 = vxor.u32 %v418, %v607
        %v678 = vxor.u32 %v419, %v607
        %v679 = vxor.u32 %v420, %v607
        %v680 = vxor.u32 %v421, %v607
        %v681 = vxor.u32 %v422, %v607
        %v682 = vxor.u32 %v423, %v607
        %v683 = vxor.u32 %v424, %v607
        %v684 = vxor.u32 %v425, %v607
        %v685 = vxor.u32 %v426, %v607
        %v686 = vxor.u32 %v427, %v607
        %v687 = vxor.u32 %v428, %v607
        %v688 = vxor.u32 %v429, %v607
        %v689 = vxor.u32 %v430, %v607
        %v690 = vxor.u32 %v431, %v607
        %v691 = vxor.u32 %v432, %v607
        %v692 = vxor.u32 %v433, %v607
        %v693 = vxor.u32 %v434, %v607
        %v694 = vxor.u32 %v435, %v607
        %v695 = vxor.u32 %v436, %v607
        %v696 = vxor.u32 %v437, %v607
        %v697 = vxor.u32 %v438, %v607
        %v698 = vxor.u32 %v439, %v607
        %v699 = vxor.u32 %v440, %v607
        %v700 = vxor.u32 %v441, %v607
        %v701 = vxor.u32 %v442, %v607
        %v702 = vxor.u32 %v443, %v607
        %v703 = vxor.u32 %v444, %v607
        %v704 = vxor.u32 %v445, %v607
        %v705 = vxor.u32 %v446, %v607
        %v706 = vxor.u32 %v447, %v607
        %v707 = vxor.u32 %v448, %v607
        %v708 = vxor.u32 %v449, %v607
        %v709 = vxor.u32 %v450, %v607
        %v710 = vxor.u32 %v451, %v607
        %v711 = vxor.u32 %v452, %v607
        %v712 = vxor.u32 %v453, %v607
        %v713 = vxor.u32 %v454, %v607
        %v714 = vxor.u32 %v455, %v607
        %v715 = vxor.u32 %v456, %v607
        %v716 = vxor.u32 %v457, %v607
        %v717 = vxor.u32 %v458, %v607
        %v718 = vxor.u32 %v459, %v607
        %v719 = vxor.u32 %v460, %v607
        %v720 = vxor.u32 %v461, %v607
        %v721 = vxor.u32 %v462, %v607
        %v722 = vxor.u32 %v463, %v607
        %v723 = vxor.u32 %v464, %v607
        %v724 = vxor.u32 %v465, %v607
        %v725 = vxor.u32 %v466, %v607
        %v726 = vxor.u32 %v467, %v607
        %v727 = vxor.u32 %v468, %v607
        %v728 = vxor.u32 %v469, %v607
        %v729 = vxor.u32 %v470, %v607
        %v730 = vxor.u32 %v471, %v607
        %v731 = vxor.u32 %v472, %v607
        %v732 = vxor.u32 %v473, %v607
        %v733 = vxor.u32 %v474, %v607
        %v734 = vxor.u32 %v475, %v607
        %v735 = vxor.u32 %v476, %v607
        %v736 = vxor.u32 %v477, %v607
        %v737 = vxor.u32 %v478, %v607
        %v738 = vxor.u32 %v479, %v607
        %v739 = vxor.u32 %v480, %v607
        %v740 = vxor.u32 %v481, %v607
        %v741 = vxor.u32 %v482, %v607
        %v742 = vxor.u32 %v483, %v607
        %v743 = vxor.u32 %v484, %v607
        %v744 = vxor.u32 %v485, %v607
        %v745 = vxor.u32 %v486, %v607
        %v746 = vxor.u32 %v487, %v607
        %v747 = vxor.u32 %v488, %v607
        %v748 = vxor.u32 %v489, %v607
        %v749 = vxor.u32 %v490, %v607
        %v750 = vxor.u32 %v491, %v607
        %v751 = vxor.u32 %v492, %v607
        %v752 = vxor.u32 %v493, %v607
        %v753 = vxor.u32 %v494, %v607
        %v754 = vxor.u32 %v495, %v607
        %v755 = vxor.u32 %v496, %v607
        %v756 = vxor.u32 %v497, %v607
        %v757 = vxor.u32 %v498, %v607
        %v758 = vxor.u32 %v499, %v607
        %v759 = vxor.u32 %v500, %v607
        %v760 = vxor.u32 %v501, %v607
        %v761 = vxor.u32 %v502, %v607
        %v762 = vxor.u32 %v503, %v607
        %v763 = vxor.u32 %v504, %v607
        %v764 = vxor.u32 %v505, %v607
        %v765 = vxor.u32 %v506, %v607
        %v766 = vxor.u32 %v507, %v607
        %v767 = vxor.u32 %v508, %v607
        %v768 = vxor.u32 %v509, %v607
        %v769 = vxor.u32 %v510, %v607
        %v770 = vxor.u32 %v511, %v607
        %v771 = vxor.u32 %v512, %v607
        %v772 = vxor.u32 %v513, %v607
        %v773 = vxor.u32 %v514, %v607
        %v774 = vxor.u32 %v515, %v607
        %v775 = vxor.u32 %v516, %v607
        %v776 = vxor.u32 %v517, %v607
        %v777 = vxor.u32 %v518, %v607
        %v778 = vxor.u32 %v519, %v607
        %v779 = vxor.u32 %v520, %v607
        %v780 = vxor.u32 %v521, %v607
        %v781 = vxor.u32 %v522, %v607
        %v782 = vxor.u32 %v523, %v607
        %v783 = vxor.u32 %v524, %v607
        %v784 = vxor.u32 %v525, %v607
        %v785 = vxor.u32 %v526, %v607
        %v786 = vxor.u32 %v527, %v607
        %v787 = vxor.u32 %v528, %v607
        %v788 = vxor.u32 %v529, %v607
        %v789 = vxor.u32 %v530, %v607
        %v790 = vxor.u32 %v531, %v607
        %v791 = vxor.u32 %v532, %v607
        %v792 = vxor.u32 %v533, %v607
        %v793 = vxor.u32 %v534, %v607
        %v794 = vxor.u32 %v535, %v607
        %v795 = vxor.u32 %v536, %v607
        %v796 = vxor.u32 %v537, %v607
        %v797 = vxor.u32 %v538, %v607
        %v798 = vxor.u32 %v539, %v607
        %v799 = vxor.u32 %v540, %v607
        %v800 = vxor.u32 %v541, %v607
        %v801 = vxor.u32 %v542, %v607
        %v802 = vxor.u32 %v543, %v607
        %v803 = vxor.u32 %v544, %v607
        %v804 = vxor.u32 %v545, %v607
        %v805 = vxor.u32 %v546, %v607
        %v806 = vxor.u32 %v547, %v607
        %v807 = vxor.u32 %v548, %v607
        %v808 = vxor.u32 %v549, %v607
        %v809 = vxor.u32 %v550, %v607
        %v810 = vxor.u32 %v551, %v607
        %v811 = vxor.u32 %v552, %v607
        %v812 = vxor.u32 %v553, %v607
        %v813 = vxor.u32 %v554, %v607
        %v814 = vxor.u32 %v555, %v607
        %v815 = vxor.u32 %v556, %v607
        %v816 = vxor.u32 %v557, %v607
        %v817 = vxor.u32 %v558, %v607
        %v818 = vxor.u32 %v559, %v607
        %v819 = vxor.u32 %v560, %v607
        %v820 = vxor.u32 %v561, %v607
        %v821 = vxor.u32 %v562, %v607
        %v822 = vxor.u32 %v563, %v607
        %v823 = vxor.u32 %v564, %v607
        %v824 = vxor.u32 %v565, %v607
        %v825 = vxor.u32 %v566, %v607
        %v826 = vxor.u32 %v567, %v607
        %v827 = vxor.u32 %v568, %v607
        %v828 = vxor.u32 %v569, %v607
        %v829 = vxor.u32 %v570, %v607
        %v830 = vxor.u32 %v571, %v607
        %v831 = vxor.u32 %v572, %v607
        %v832 = vxor.u32 %v573, %v607
        %v833 = vxor.u32 %v574, %v607
        %v834 = vxor.u32 %v575, %v607
        %v835 = vxor.u32 %v576, %v607
        %v836 = vxor.u32 %v577, %v607
        %v837 = vxor.u32 %v578, %v607
        %v838 = vxor.u32 %v579, %v607
        %v839 = vxor.u32 %v580, %v607
        %v840 = vxor.u32 %v581, %v607
        %v841 = vxor.u32 %v582, %v607
        %v842 = vxor.u32 %v583, %v607
        %v843 = vxor.u32 %v584, %v607
        %v844 = vxor.u32 %v585, %v607
        %v845 = vxor.u32 %v586, %v607
        %v846 = vxor.u32 %v587, %v607
        %v847 = vxor.u32 %v588, %v607
        %v848 = vxor.u32 %v589, %v607
        %v849 = vxor.u32 %v590, %v607
        %v850 = vxor.u32 %v591, %v607
        %v851 = vxor.u32 %v592, %v607
        %v852 = vxor.u32 %v593, %v607
        %v853 = vxor.u32 %v594, %v607
        %v854 = vxor.u32 %v595, %v607
        %v855 = vxor.u32 %v596, %v607
        %v856 = vxor.u32 %v597, %v607
        %v857 = vxor.u32 %v598, %v607
        %v858 = vxor.u32 %v599, %v607
        %v859 = vxor.u32 %v600, %v607
        %v860 = vxor.u32 %v601, %v607
        %v861 = vxor.u32 %v602, %v607
        %v862 = vxor.u32 %v603, %v607
        %v863 = vxor.u32 %v604, %v607
        %v864 = vshra.s32 %v608, 16
        %v865 = vshra.s32 %v609, 16
        %v866 = vshra.s32 %v610, 16
        %v867 = vshra.s32 %v611, 16
        %v868 = vshra.s32 %v612, 16
        %v869 = vshra.s32 %v613, 16
        %v870 = vshra.s32 %v614, 16
        %v871 = vshra.s32 %v615, 16
        %v872 = vshra.s32 %v616, 16
        %v873 = vshra.s32 %v617, 16
        %v874 = vshra.s32 %v618, 16
        %v875 = vshra.s32 %v619, 16
        %v876 = vshra.s32 %v620, 16
        %v877 = vshra.s32 %v621, 16
        %v878 = vshra.s32 %v622, 16
        %v879 = vshra.s32 %v623, 16
        %v880 = vshra.s32 %v624, 16
        %v881 = vshra.s32 %v625, 16
        %v882 = vshra.s32 %v626, 16
        %v883 = vshra.s32 %v627, 16
        %v884 = vshra.s32 %v628, 16
        %v885 = vshra.s32 %v629, 16
        %v886 = vshra.s32 %v630, 16
        %v887 = vshra.s32 %v631, 16
        %v888 = vshra.s32 %v632, 16
        %v889 = vshra.s32 %v633, 16
        %v890 = vshra.s32 %v634, 16
        %v891 = vshra.s32 %v635, 16
        %v892 = vshra.s32 %v636, 16
        %v893 = vshra.s32 %v637, 16
        %v894 = vshra.s32 %v638, 16
        %v895 = vshra.s32 %v639, 16
        %v896 = vshra.s32 %v640, 16
        %v897 = vshra.s32 %v641, 16
        %v898 = vshra.s32 %v642, 16
        %v899 = vshra.s32 %v643, 16
        %v900 = vshra.s32 %v644, 16
        %v901 = vshra.s32 %v645, 16
        %v902 = vshra.s32 %v646, 16
        %v903 = vshra.s32 %v647, 16
        %v904 = vshra.s32 %v648, 16
        %v905 = vshra.s32 %v649, 16
        %v906 = vshra.s32 %v650, 16
        %v907 = vshra.s32 %v651, 16
        %v908 = vshra.s32 %v652, 16
        %v909 = vshra.s32 %v653, 16
        %v910 = vshra.s32 %v654, 16
        %v911 = vshra.s32 %v655, 16
        %v912 = vshra.s32 %v656, 16
        %v913 = vshra.s32 %v657, 16
        %v914 = vshra.s32 %v658, 16
        %v915 = vshra.s32 %v659, 16
        %v916 = vshra.s32 %v660, 16
        %v917 = vshra.s32 %v661, 16
        %v918 = vshra.s32 %v662, 16
        %v919 = vshra.s32 %v663, 16
        %v920 = vshra.s32 %v664, 16
        %v921 = vshra.s32 %v665, 16
        %v922 = vshra.s32 %v666, 16
        %v923 = vshra.s32 %v667, 16
        %v924 = vshra.s32 %v668, 16
        %v925 = vshra.s32 %v669, 16
        %v926 = vshra.s32 %v670, 16
        %v927 = vshra.s32 %v671, 16
        %v928 = vshra.s32 %v672, 16
        %v929 = vshra.s32 %v673, 16
        %v930 = vshra.s32 %v674, 16
        %v931 = vshra.s32 %v675, 16
        %v932 = vshra.s32 %v676, 16
        %v933 = vshra.s32 %v677, 16
        %v934 = vshra.s32 %v678, 16
        %v935 = vshra.s32 %v679, 16
        %v936 = vshra.s32 %v680, 16
        %v937 = vshra.s32 %v681, 16
        %v938 = vshra.s32 %v682, 16
        %v939 = vshra.s32 %v683, 16
        %v940 = vshra.s32 %v684, 16
        %v941 = vshra.s32 %v685, 16
        %v942 = vshra.s32 %v686, 16
        %v943 = vshra.s32 %v687, 16
        %v944 = vshra.s32 %v688, 16
        %v945 = vshra.s32 %v689, 16
        %v946 = vshra.s32 %v690, 16
        %v947 = vshra.s32 %v691, 16
        %v948 = vshra.s32 %v692, 16
        %v949 = vshra.s32 %v693, 16
        %v950 = vshra.s32 %v694, 16
        %v951 = vshra.s32 %v695, 16
        %v952 = vshra.s32 %v696, 16
        %v953 = vshra.s32 %v697, 16
        %v954 = vshra.s32 %v698, 16
        %v955 = vshra.s32 %v699, 16
        %v956 = vshra.s32 %v700, 16
        %v957 = vshra.s32 %v701, 16
        %v958 = vshra.s32 %v702, 16
        %v959 = vshra.s32 %v703, 16
        %v960 = vshra.s32 %v704, 16
        %v961 = vshra.s32 %v705, 16
        %v962 = vshra.s32 %v706, 16
        %v963 = vshra.s32 %v707, 16
        %v964 = vshra.s32 %v708, 16
        %v965 = vshra.s32 %v709, 16
        %v966 = vshra.s32 %v710, 16
        %v967 = vshra.s32 %v711, 16
        %v968 = vshra.s32 %v712, 16
        %v969 = vshra.s32 %v713, 16
        %v970 = vshra.s32 %v714, 16
        %v971 = vshra.s32 %v715, 16
        %v972 = vshra.s32 %v716, 16
        %v973 = vshra.s32 %v717, 16
        %v974 = vshra.s32 %v718, 16
        %v975 = vshra.s32 %v719, 16
        %v976 = vshra.s32 %v720, 16
        %v977 = vshra.s32 %v721, 16
        %v978 = vshra.s32 %v722, 16
        %v979 = vshra.s32 %v723, 16
        %v980 = vshra.s32 %v724, 16
        %v981 = vshra.s32 %v725, 16
        %v982 = vshra.s32 %v726, 16
        %v983 = vshra.s32 %v727, 16
        %v984 = vshra.s32 %v728, 16
        %v985 = vshra.s32 %v729, 16
        %v986 = vshra.s32 %v730, 16
        %v987 = vshra.s32 %v731, 16
        %v988 = vshra.s32 %v732, 16
        %v989 = vshra.s32 %v733, 16
        %v990 = vshra.s32 %v734, 16
        %v991 = vshra.s32 %v735, 16
        %v992 = vshra.s32 %v736, 16
        %v993 = vshra.s32 %v737, 16
        %v994 = vshra.s32 %v738, 16
        %v995 = vshra.s32 %v739, 16
        %v996 = vshra.s32 %v740, 16
        %v997 = vshra.s32 %v741, 16
        %v998 = vshra.s32 %v742, 16
        %v999 = vshra.s32 %v743, 16
        %v1000 = vshra.s32 %v744, 16
        %v1001 = vshra.s32 %v745, 16
        %v1002 = vshra.s32 %v746, 16
        %v1003 = vshra.s32 %v747, 16
        %v1004 = vshra.s32 %v748, 16
        %v1005 = vshra.s32 %v749, 16
        %v1006 = vshra.s32 %v750, 16
        %v1007 = vshra.s32 %v751, 16
        %v1008 = vshra.s32 %v752, 16
        %v1009 = vshra.s32 %v753, 16
        %v1010 = vshra.s32 %v754, 16
        %v1011 = vshra.s32 %v755, 16
        %v1012 = vshra.s32 %v756, 16
        %v1013 = vshra.s32 %v757, 16
        %v1014 = vshra.s32 %v758, 16
        %v1015 = vshra.s32 %v759, 16
        %v1016 = vshra.s32 %v760, 16
        %v1017 = vshra.s32 %v761, 16
        %v1018 = vshra.s32 %v762, 16
        %v1019 = vshra.s32 %v763, 16
        %v1020 = vshra.s32 %v764, 16
        %v1021 = vshra.s32 %v765, 16
        %v1022 = vshra.s32 %v766, 16
        %v1023 = vshra.s32 %v767, 16
        %v1024 = vshra.s32 %v768, 16
        %v1025 = vshra.s32 %v769, 16
        %v1026 = vshra.s32 %v770, 16
        %v1027 = vshra.s32 %v771, 16
        %v1028 = vshra.s32 %v772, 16
        %v1029 = vshra.s32 %v773, 16
        %v1030 = vshra.s32 %v774, 16
        %v1031 = vshra.s32 %v775, 16
        %v1032 = vshra.s32 %v776, 16
        %v1033 = vshra.s32 %v777, 16
        %v1034 = vshra.s32 %v778, 16
        %v1035 = vshra.s32 %v779, 16
        %v1036 = vshra.s32 %v780, 16
        %v1037 = vshra.s32 %v781, 16
        %v1038 = vshra.s32 %v782, 16
        %v1039 = vshra.s32 %v783, 16
        %v1040 = vshra.s32 %v784, 16
        %v1041 = vshra.s32 %v785, 16
        %v1042 = vshra.s32 %v786, 16
        %v1043 = vshra.s32 %v787, 16
        %v1044 = vshra.s32 %v788, 16
        %v1045 = vshra.s32 %v789, 16
        %v1046 = vshra.s32 %v790, 16
        %v1047 = vshra.s32 %v791, 16
        %v1048 = vshra.s32 %v792, 16
        %v1049 = vshra.s32 %v793, 16
        %v1050 = vshra.s32 %v794, 16
        %v1051 = vshra.s32 %v795, 16
        %v1052 = vshra.s32 %v796, 16
        %v1053 = vshra.s32 %v797, 16
        %v1054 = vshra.s32 %v798, 16
        %v1055 = vshra.s32 %v799, 16
        %v1056 = vshra.s32 %v800, 16
        %v1057 = vshra.s32 %v801, 16
        %v1058 = vshra.s32 %v802, 16
        %v1059 = vshra.s32 %v803, 16
        %v1060 = vshra.s32 %v804, 16
        %v1061 = vshra.s32 %v805, 16
        %v1062 = vshra.s32 %v806, 16
        %v1063 = vshra.s32 %v807, 16
        %v1064 = vshra.s32 %v808, 16
        %v1065 = vshra.s32 %v809, 16
        %v1066 = vshra.s32 %v810, 16
        %v1067 = vshra.s32 %v811, 16
        %v1068 = vshra.s32 %v812, 16
        %v1069 = vshra.s32 %v813, 16
        %v1070 = vshra.s32 %v814, 16
        %v1071 = vshra.s32 %v815, 16
        %v1072 = vshra.s32 %v816, 16
        %v1073 = vshra.s32 %v817, 16
        %v1074 = vshra.s32 %v818, 16
        %v1075 = vshra.s32 %v819, 16
        %v1076 = vshra.s32 %v820, 16
        %v1077 = vshra.s32 %v821, 16
        %v1078 = vshra.s32 %v822, 16
        %v1079 = vshra.s32 %v823, 16
        %v1080 = vshra.s32 %v824, 16
        %v1081 = vshra.s32 %v825, 16
        %v1082 = vshra.s32 %v826, 16
        %v1083 = vshra.s32 %v827, 16
        %v1084 = vshra.s32 %v828, 16
        %v1085 = vshra.s32 %v829, 16
        %v1086 = vshra.s32 %v830, 16
        %v1087 = vshra.s32 %v831, 16
        %v1088 = vshra.s32 %v832, 16
        %v1089 = vshra.s32 %v833, 16
        %v1090 = vshra.s32 %v834, 16
        %v1091 = vshra.s32 %v835, 16
        %v1092 = vshra.s32 %v836, 16
        %v1093 = vshra.s32 %v837, 16
        %v1094 = vshra.s32 %v838, 16
        %v1095 = vshra.s32 %v839, 16
        %v1096 = vshra.s32 %v840, 16
        %v1097 = vshra.s32 %v841, 16
        %v1098 = vshra.s32 %v842, 16
        %v1099 = vshra.s32 %v843, 16
        %v1100 = vshra.s32 %v844, 16
        %v1101 = vshra.s32 %v845, 16
        %v1102 = vshra.s32 %v846, 16
        %v1103 = vshra.s32 %v847, 16
        %v1104 = vshra.s32 %v848, 16
        %v1105 = vshra.s32 %v849, 16
        %v1106 = vshra.s32 %v850, 16
        %v1107 = vshra.s32 %v851, 16
        %v1108 = vshra.s32 %v852, 16
        %v1109 = vshra.s32 %v853, 16
        %v1110 = vshra.s32 %v854, 16
        %v1111 = vshra.s32 %v855, 16
        %v1112 = vshra.s32 %v856, 16
        %v1113 = vshra.s32 %v857, 16
        %v1114 = vshra.s32 %v858, 16
        %v1115 = vshra.s32 %v859, 16
        %v1116 = vshra.s32 %v860, 16
        %v1117 = vshra.s32 %v861, 16
        %v1118 = vshra.s32 %v862, 16
        %v1119 = vshra.s32 %v863, 16
        %v1120 = vand.u32 %v864, 65535
        %v1121 = vand.u32 %v865, 65535
        %v1122 = vand.u32 %v866, 65535
        %v1123 = vand.u32 %v867, 65535
        %v1124 = vand.u32 %v868, 65535
        %v1125 = vand.u32 %v869, 65535
        %v1126 = vand.u32 %v870, 65535
        %v1127 = vand.u32 %v871, 65535
        %v1128 = vand.u32 %v872, 65535
        %v1129 = vand.u32 %v873, 65535
        %v1130 = vand.u32 %v874, 65535
        %v1131 = vand.u32 %v875, 65535
        %v1132 = vand.u32 %v876, 65535
        %v1133 = vand.u32 %v877, 65535
        %v1134 = vand.u32 %v878, 65535
        %v1135 = vand.u32 %v879, 65535
        %v1136 = vand.u32 %v880, 65535
        %v1137 = vand.u32 %v881, 65535
        %v1138 = vand.u32 %v882, 65535
        %v1139 = vand.u32 %v883, 65535
        %v1140 = vand.u32 %v884, 65535
        %v1141 = vand.u32 %v885, 65535
        %v1142 = vand.u32 %v886, 65535
        %v1143 = vand.u32 %v887, 65535
        %v1144 = vand.u32 %v888, 65535
        %v1145 = vand.u32 %v889, 65535
        %v1146 = vand.u32 %v890, 65535
        %v1147 = vand.u32 %v891, 65535
        %v1148 = vand.u32 %v892, 65535
        %v1149 = vand.u32 %v893, 65535
        %v1150 = vand.u32 %v894, 65535
        %v1151 = vand.u32 %v895, 65535
        %v1152 = vand.u32 %v896, 65535
        %v1153 = vand.u32 %v897, 65535
        %v1154 = vand.u32 %v898, 65535
        %v1155 = vand.u32 %v899, 65535
        %v1156 = vand.u32 %v900, 65535
        %v1157 = vand.u32 %v901, 65535
        %v1158 = vand.u32 %v902, 65535
        %v1159 = vand.u32 %v903, 65535
        %v1160 = vand.u32 %v904, 65535
        %v1161 = vand.u32 %v905, 65535
        %v1162 = vand.u32 %v906, 65535
        %v1163 = vand.u32 %v907, 65535
        %v1164 = vand.u32 %v908, 65535
        %v1165 = vand.u32 %v909, 65535
        %v1166 = vand.u32 %v910, 65535
        %v1167 = vand.u32 %v911, 65535
        %v1168 = vand.u32 %v912, 65535
        %v1169 = vand.u32 %v913, 65535
        %v1170 = vand.u32 %v914, 65535
        %v1171 = vand.u32 %v915, 65535
        %v1172 = vand.u32 %v916, 65535
        %v1173 = vand.u32 %v917, 65535
        %v1174 = vand.u32 %v918, 65535
        %v1175 = vand.u32 %v919, 65535
        %v1176 = vand.u32 %v920, 65535
        %v1177 = vand.u32 %v921, 65535
        %v1178 = vand.u32 %v922, 65535
        %v1179 = vand.u32 %v923, 65535
        %v1180 = vand.u32 %v924, 65535
        %v1181 = vand.u32 %v925, 65535
        %v1182 = vand.u32 %v926, 65535
        %v1183 = vand.u32 %v927, 65535
        %v1184 = vand.u32 %v928, 65535
        %v1185 = vand.u32 %v929, 65535
        %v1186 = vand.u32 %v930, 65535
        %v1187 = vand.u32 %v931, 65535
        %v1188 = vand.u32 %v932, 65535
        %v1189 = vand.u32 %v933, 65535
        %v1190 = vand.u32 %v934, 65535
        %v1191 = vand.u32 %v935, 65535
        %v1192 = vand.u32 %v936, 65535
        %v1193 = vand.u32 %v937, 65535
        %v1194 = vand.u32 %v938, 65535
        %v1195 = vand.u32 %v939, 65535
        %v1196 = vand.u32 %v940, 65535
        %v1197 = vand.u32 %v941, 65535
        %v1198 = vand.u32 %v942, 65535
        %v1199 = vand.u32 %v943, 65535
        %v1200 = vand.u32 %v944, 65535
        %v1201 = vand.u32 %v945, 65535
        %v1202 = vand.u32 %v946, 65535
        %v1203 = vand.u32 %v947, 65535
        %v1204 = vand.u32 %v948, 65535
        %v1205 = vand.u32 %v949, 65535
        %v1206 = vand.u32 %v950, 65535
        %v1207 = vand.u32 %v951, 65535
        %v1208 = vand.u32 %v952, 65535
        %v1209 = vand.u32 %v953, 65535
        %v1210 = vand.u32 %v954, 65535
        %v1211 = vand.u32 %v955, 65535
        %v1212 = vand.u32 %v956, 65535
        %v1213 = vand.u32 %v957, 65535
        %v1214 = vand.u32 %v958, 65535
        %v1215 = vand.u32 %v959, 65535
        %v1216 = vand.u32 %v960, 65535
        %v1217 = vand.u32 %v961, 65535
        %v1218 = vand.u32 %v962, 65535
        %v1219 = vand.u32 %v963, 65535
        %v1220 = vand.u32 %v964, 65535
        %v1221 = vand.u32 %v965, 65535
        %v1222 = vand.u32 %v966, 65535
        %v1223 = vand.u32 %v967, 65535
        %v1224 = vand.u32 %v968, 65535
        %v1225 = vand.u32 %v969, 65535
        %v1226 = vand.u32 %v970, 65535
        %v1227 = vand.u32 %v971, 65535
        %v1228 = vand.u32 %v972, 65535
        %v1229 = vand.u32 %v973, 65535
        %v1230 = vand.u32 %v974, 65535
        %v1231 = vand.u32 %v975, 65535
        %v1232 = vand.u32 %v976, 65535
        %v1233 = vand.u32 %v977, 65535
        %v1234 = vand.u32 %v978, 65535
        %v1235 = vand.u32 %v979, 65535
        %v1236 = vand.u32 %v980, 65535
        %v1237 = vand.u32 %v981, 65535
        %v1238 = vand.u32 %v982, 65535
        %v1239 = vand.u32 %v983, 65535
        %v1240 = vand.u32 %v984, 65535
        %v1241 = vand.u32 %v985, 65535
        %v1242 = vand.u32 %v986, 65535
        %v1243 = vand.u32 %v987, 65535
        %v1244 = vand.u32 %v988, 65535
        %v1245 = vand.u32 %v989, 65535
        %v1246 = vand.u32 %v990, 65535
        %v1247 = vand.u32 %v991, 65535
        %v1248 = vand.u32 %v992, 65535
        %v1249 = vand.u32 %v993, 65535
        %v1250 = vand.u32 %v994, 65535
        %v1251 = vand.u32 %v995, 65535
        %v1252 = vand.u32 %v996, 65535
        %v1253 = vand.u32 %v997, 65535
        %v1254 = vand.u32 %v998, 65535
        %v1255 = vand.u32 %v999, 65535
        %v1256 = vand.u32 %v1000, 65535
        %v1257 = vand.u32 %v1001, 65535
        %v1258 = vand.u32 %v1002, 65535
        %v1259 = vand.u32 %v1003, 65535
        %v1260 = vand.u32 %v1004, 65535
        %v1261 = vand.u32 %v1005, 65535
        %v1262 = vand.u32 %v1006, 65535
        %v1263 = vand.u32 %v1007, 65535
        %v1264 = vand.u32 %v1008, 65535
        %v1265 = vand.u32 %v1009, 65535
        %v1266 = vand.u32 %v1010, 65535
        %v1267 = vand.u32 %v1011, 65535
        %v1268 = vand.u32 %v1012, 65535
        %v1269 = vand.u32 %v1013, 65535
        %v1270 = vand.u32 %v1014, 65535
        %v1271 = vand.u32 %v1015, 65535
        %v1272 = vand.u32 %v1016, 65535
        %v1273 = vand.u32 %v1017, 65535
        %v1274 = vand.u32 %v1018, 65535
        %v1275 = vand.u32 %v1019, 65535
        %v1276 = vand.u32 %v1020, 65535
        %v1277 = vand.u32 %v1021, 65535
        %v1278 = vand.u32 %v1022, 65535
        %v1279 = vand.u32 %v1023, 65535
        %v1280 = vand.u32 %v1024, 65535
        %v1281 = vand.u32 %v1025, 65535
        %v1282 = vand.u32 %v1026, 65535
        %v1283 = vand.u32 %v1027, 65535
        %v1284 = vand.u32 %v1028, 65535
        %v1285 = vand.u32 %v1029, 65535
        %v1286 = vand.u32 %v1030, 65535
        %v1287 = vand.u32 %v1031, 65535
        %v1288 = vand.u32 %v1032, 65535
        %v1289 = vand.u32 %v1033, 65535
        %v1290 = vand.u32 %v1034, 65535
        %v1291 = vand.u32 %v1035, 65535
        %v1292 = vand.u32 %v1036, 65535
        %v1293 = vand.u32 %v1037, 65535
        %v1294 = vand.u32 %v1038, 65535
        %v1295 = vand.u32 %v1039, 65535
        %v1296 = vand.u32 %v1040, 65535
        %v1297 = vand.u32 %v1041, 65535
        %v1298 = vand.u32 %v1042, 65535
        %v1299 = vand.u32 %v1043, 65535
        %v1300 = vand.u32 %v1044, 65535
        %v1301 = vand.u32 %v1045, 65535
        %v1302 = vand.u32 %v1046, 65535
        %v1303 = vand.u32 %v1047, 65535
        %v1304 = vand.u32 %v1048, 65535
        %v1305 = vand.u32 %v1049, 65535
        %v1306 = vand.u32 %v1050, 65535
        %v1307 = vand.u32 %v1051, 65535
        %v1308 = vand.u32 %v1052, 65535
        %v1309 = vand.u32 %v1053, 65535
        %v1310 = vand.u32 %v1054, 65535
        %v1311 = vand.u32 %v1055, 65535
        %v1312 = vand.u32 %v1056, 65535
        %v1313 = vand.u32 %v1057, 65535
        %v1314 = vand.u32 %v1058, 65535
        %v1315 = vand.u32 %v1059, 65535
        %v1316 = vand.u32 %v1060, 65535
        %v1317 = vand.u32 %v1061, 65535
        %v1318 = vand.u32 %v1062, 65535
        %v1319 = vand.u32 %v1063, 65535
        %v1320 = vand.u32 %v1064, 65535
        %v1321 = vand.u32 %v1065, 65535
        %v1322 = vand.u32 %v1066, 65535
        %v1323 = vand.u32 %v1067, 65535
        %v1324 = vand.u32 %v1068, 65535
        %v1325 = vand.u32 %v1069, 65535
        %v1326 = vand.u32 %v1070, 65535
        %v1327 = vand.u32 %v1071, 65535
        %v1328 = vand.u32 %v1072, 65535
        %v1329 = vand.u32 %v1073, 65535
        %v1330 = vand.u32 %v1074, 65535
        %v1331 = vand.u32 %v1075, 65535
        %v1332 = vand.u32 %v1076, 65535
        %v1333 = vand.u32 %v1077, 65535
        %v1334 = vand.u32 %v1078, 65535
        %v1335 = vand.u32 %v1079, 65535
        %v1336 = vand.u32 %v1080, 65535
        %v1337 = vand.u32 %v1081, 65535
        %v1338 = vand.u32 %v1082, 65535
        %v1339 = vand.u32 %v1083, 65535
        %v1340 = vand.u32 %v1084, 65535
        %v1341 = vand.u32 %v1085, 65535
        %v1342 = vand.u32 %v1086, 65535
        %v1343 = vand.u32 %v1087, 65535
        %v1344 = vand.u32 %v1088, 65535
        %v1345 = vand.u32 %v1089, 65535
        %v1346 = vand.u32 %v1090, 65535
        %v1347 = vand.u32 %v1091, 65535
        %v1348 = vand.u32 %v1092, 65535
        %v1349 = vand.u32 %v1093, 65535
        %v1350 = vand.u32 %v1094, 65535
        %v1351 = vand.u32 %v1095, 65535
        %v1352 = vand.u32 %v1096, 65535
        %v1353 = vand.u32 %v1097, 65535
        %v1354 = vand.u32 %v1098, 65535
        %v1355 = vand.u32 %v1099, 65535
        %v1356 = vand.u32 %v1100, 65535
        %v1357 = vand.u32 %v1101, 65535
        %v1358 = vand.u32 %v1102, 65535
        %v1359 = vand.u32 %v1103, 65535
        %v1360 = vand.u32 %v1104, 65535
        %v1361 = vand.u32 %v1105, 65535
        %v1362 = vand.u32 %v1106, 65535
        %v1363 = vand.u32 %v1107, 65535
        %v1364 = vand.u32 %v1108, 65535
        %v1365 = vand.u32 %v1109, 65535
        %v1366 = vand.u32 %v1110, 65535
        %v1367 = vand.u32 %v1111, 65535
        %v1368 = vand.u32 %v1112, 65535
        %v1369 = vand.u32 %v1113, 65535
        %v1370 = vand.u32 %v1114, 65535
        %v1371 = vand.u32 %v1115, 65535
        %v1372 = vand.u32 %v1116, 65535
        %v1373 = vand.u32 %v1117, 65535
        %v1374 = vand.u32 %v1118, 65535
        %v1375 = vand.u32 %v1119, 65535
        %v1376 = vxor.u32 %v608, %v1120
        %v1377 = vxor.u32 %v609, %v1121
        %v1378 = vxor.u32 %v610, %v1122
        %v1379 = vxor.u32 %v611, %v1123
        %v1380 = vxor.u32 %v612, %v1124
        %v1381 = vxor.u32 %v613, %v1125
        %v1382 = vxor.u32 %v614, %v1126
        %v1383 = vxor.u32 %v615, %v1127
        %v1384 = vxor.u32 %v616, %v1128
        %v1385 = vxor.u32 %v617, %v1129
        %v1386 = vxor.u32 %v618, %v1130
        %v1387 = vxor.u32 %v619, %v1131
        %v1388 = vxor.u32 %v620, %v1132
        %v1389 = vxor.u32 %v621, %v1133
        %v1390 = vxor.u32 %v622, %v1134
        %v1391 = vxor.u32 %v623, %v1135
        %v1392 = vxor.u32 %v624, %v1136
        %v1393 = vxor.u32 %v625, %v1137
        %v1394 = vxor.u32 %v626, %v1138
        %v1395 = vxor.u32 %v627, %v1139
        %v1396 = vxor.u32 %v628, %v1140
        %v1397 = vxor.u32 %v629, %v1141
        %v1398 = vxor.u32 %v630, %v1142
        %v1399 = vxor.u32 %v631, %v1143
        %v1400 = vxor.u32 %v632, %v1144
        %v1401 = vxor.u32 %v633, %v1145
        %v1402 = vxor.u32 %v634, %v1146
        %v1403 = vxor.u32 %v635, %v1147
        %v1404 = vxor.u32 %v636, %v1148
        %v1405 = vxor.u32 %v637, %v1149
        %v1406 = vxor.u32 %v638, %v1150
        %v1407 = vxor.u32 %v639, %v1151
        %v1408 = vxor.u32 %v640, %v1152
        %v1409 = vxor.u32 %v641, %v1153
        %v1410 = vxor.u32 %v642, %v1154
        %v1411 = vxor.u32 %v643, %v1155
        %v1412 = vxor.u32 %v644, %v1156
        %v1413 = vxor.u32 %v645, %v1157
        %v1414 = vxor.u32 %v646, %v1158
        %v1415 = vxor.u32 %v647, %v1159
        %v1416 = vxor.u32 %v648, %v1160
        %v1417 = vxor.u32 %v649, %v1161
        %v1418 = vxor.u32 %v650, %v1162
        %v1419 = vxor.u32 %v651, %v1163
        %v1420 = vxor.u32 %v652, %v1164
        %v1421 = vxor.u32 %v653, %v1165
        %v1422 = vxor.u32 %v654, %v1166
        %v1423 = vxor.u32 %v655, %v1167
        %v1424 = vxor.u32 %v656, %v1168
        %v1425 = vxor.u32 %v657, %v1169
        %v1426 = vxor.u32 %v658, %v1170
        %v1427 = vxor.u32 %v659, %v1171
        %v1428 = vxor.u32 %v660, %v1172
        %v1429 = vxor.u32 %v661, %v1173
        %v1430 = vxor.u32 %v662, %v1174
        %v1431 = vxor.u32 %v663, %v1175
        %v1432 = vxor.u32 %v664, %v1176
        %v1433 = vxor.u32 %v665, %v1177
        %v1434 = vxor.u32 %v666, %v1178
        %v1435 = vxor.u32 %v667, %v1179
        %v1436 = vxor.u32 %v668, %v1180
        %v1437 = vxor.u32 %v669, %v1181
        %v1438 = vxor.u32 %v670, %v1182
        %v1439 = vxor.u32 %v671, %v1183
        %v1440 = vxor.u32 %v672, %v1184
        %v1441 = vxor.u32 %v673, %v1185
        %v1442 = vxor.u32 %v674, %v1186
        %v1443 = vxor.u32 %v675, %v1187
        %v1444 = vxor.u32 %v676, %v1188
        %v1445 = vxor.u32 %v677, %v1189
        %v1446 = vxor.u32 %v678, %v1190
        %v1447 = vxor.u32 %v679, %v1191
        %v1448 = vxor.u32 %v680, %v1192
        %v1449 = vxor.u32 %v681, %v1193
        %v1450 = vxor.u32 %v682, %v1194
        %v1451 = vxor.u32 %v683, %v1195
        %v1452 = vxor.u32 %v684, %v1196
        %v1453 = vxor.u32 %v685, %v1197
        %v1454 = vxor.u32 %v686, %v1198
        %v1455 = vxor.u32 %v687, %v1199
        %v1456 = vxor.u32 %v688, %v1200
        %v1457 = vxor.u32 %v689, %v1201
        %v1458 = vxor.u32 %v690, %v1202
        %v1459 = vxor.u32 %v691, %v1203
        %v1460 = vxor.u32 %v692, %v1204
        %v1461 = vxor.u32 %v693, %v1205
        %v1462 = vxor.u32 %v694, %v1206
        %v1463 = vxor.u32 %v695, %v1207
        %v1464 = vxor.u32 %v696, %v1208
        %v1465 = vxor.u32 %v697, %v1209
        %v1466 = vxor.u32 %v698, %v1210
        %v1467 = vxor.u32 %v699, %v1211
        %v1468 = vxor.u32 %v700, %v1212
        %v1469 = vxor.u32 %v701, %v1213
        %v1470 = vxor.u32 %v702, %v1214
        %v1471 = vxor.u32 %v703, %v1215
        %v1472 = vxor.u32 %v704, %v1216
        %v1473 = vxor.u32 %v705, %v1217
        %v1474 = vxor.u32 %v706, %v1218
        %v1475 = vxor.u32 %v707, %v1219
        %v1476 = vxor.u32 %v708, %v1220
        %v1477 = vxor.u32 %v709, %v1221
        %v1478 = vxor.u32 %v710, %v1222
        %v1479 = vxor.u32 %v711, %v1223
        %v1480 = vxor.u32 %v712, %v1224
        %v1481 = vxor.u32 %v713, %v1225
        %v1482 = vxor.u32 %v714, %v1226
        %v1483 = vxor.u32 %v715, %v1227
        %v1484 = vxor.u32 %v716, %v1228
        %v1485 = vxor.u32 %v717, %v1229
        %v1486 = vxor.u32 %v718, %v1230
        %v1487 = vxor.u32 %v719, %v1231
        %v1488 = vxor.u32 %v720, %v1232
        %v1489 = vxor.u32 %v721, %v1233
        %v1490 = vxor.u32 %v722, %v1234
        %v1491 = vxor.u32 %v723, %v1235
        %v1492 = vxor.u32 %v724, %v1236
        %v1493 = vxor.u32 %v725, %v1237
        %v1494 = vxor.u32 %v726, %v1238
        %v1495 = vxor.u32 %v727, %v1239
        %v1496 = vxor.u32 %v728, %v1240
        %v1497 = vxor.u32 %v729, %v1241
        %v1498 = vxor.u32 %v730, %v1242
        %v1499 = vxor.u32 %v731, %v1243
        %v1500 = vxor.u32 %v732, %v1244
        %v1501 = vxor.u32 %v733, %v1245
        %v1502 = vxor.u32 %v734, %v1246
        %v1503 = vxor.u32 %v735, %v1247
        %v1504 = vxor.u32 %v736, %v1248
        %v1505 = vxor.u32 %v737, %v1249
        %v1506 = vxor.u32 %v738, %v1250
        %v1507 = vxor.u32 %v739, %v1251
        %v1508 = vxor.u32 %v740, %v1252
        %v1509 = vxor.u32 %v741, %v1253
        %v1510 = vxor.u32 %v742, %v1254
        %v1511 = vxor.u32 %v743, %v1255
        %v1512 = vxor.u32 %v744, %v1256
        %v1513 = vxor.u32 %v745, %v1257
        %v1514 = vxor.u32 %v746, %v1258
        %v1515 = vxor.u32 %v747, %v1259
        %v1516 = vxor.u32 %v748, %v1260
        %v1517 = vxor.u32 %v749, %v1261
        %v1518 = vxor.u32 %v750, %v1262
        %v1519 = vxor.u32 %v751, %v1263
        %v1520 = vxor.u32 %v752, %v1264
        %v1521 = vxor.u32 %v753, %v1265
        %v1522 = vxor.u32 %v754, %v1266
        %v1523 = vxor.u32 %v755, %v1267
        %v1524 = vxor.u32 %v756, %v1268
        %v1525 = vxor.u32 %v757, %v1269
        %v1526 = vxor.u32 %v758, %v1270
        %v1527 = vxor.u32 %v759, %v1271
        %v1528 = vxor.u32 %v760, %v1272
        %v1529 = vxor.u32 %v761, %v1273
        %v1530 = vxor.u32 %v762, %v1274
        %v1531 = vxor.u32 %v763, %v1275
        %v1532 = vxor.u32 %v764, %v1276
        %v1533 = vxor.u32 %v765, %v1277
        %v1534 = vxor.u32 %v766, %v1278
        %v1535 = vxor.u32 %v767, %v1279
        %v1536 = vxor.u32 %v768, %v1280
        %v1537 = vxor.u32 %v769, %v1281
        %v1538 = vxor.u32 %v770, %v1282
        %v1539 = vxor.u32 %v771, %v1283
        %v1540 = vxor.u32 %v772, %v1284
        %v1541 = vxor.u32 %v773, %v1285
        %v1542 = vxor.u32 %v774, %v1286
        %v1543 = vxor.u32 %v775, %v1287
        %v1544 = vxor.u32 %v776, %v1288
        %v1545 = vxor.u32 %v777, %v1289
        %v1546 = vxor.u32 %v778, %v1290
        %v1547 = vxor.u32 %v779, %v1291
        %v1548 = vxor.u32 %v780, %v1292
        %v1549 = vxor.u32 %v781, %v1293
        %v1550 = vxor.u32 %v782, %v1294
        %v1551 = vxor.u32 %v783, %v1295
        %v1552 = vxor.u32 %v784, %v1296
        %v1553 = vxor.u32 %v785, %v1297
        %v1554 = vxor.u32 %v786, %v1298
        %v1555 = vxor.u32 %v787, %v1299
        %v1556 = vxor.u32 %v788, %v1300
        %v1557 = vxor.u32 %v789, %v1301
        %v1558 = vxor.u32 %v790, %v1302
        %v1559 = vxor.u32 %v791, %v1303
        %v1560 = vxor.u32 %v792, %v1304
        %v1561 = vxor.u32 %v793, %v1305
        %v1562 = vxor.u32 %v794, %v1306
        %v1563 = vxor.u32 %v795, %v1307
        %v1564 = vxor.u32 %v796, %v1308
        %v1565 = vxor.u32 %v797, %v1309
        %v1566 = vxor.u32 %v798, %v1310
        %v1567 = vxor.u32 %v799, %v1311
        %v1568 = vxor.u32 %v800, %v1312
        %v1569 = vxor.u32 %v801, %v1313
        %v1570 = vxor.u32 %v802, %v1314
        %v1571 = vxor.u32 %v803, %v1315
        %v1572 = vxor.u32 %v804, %v1316
        %v1573 = vxor.u32 %v805, %v1317
        %v1574 = vxor.u32 %v806, %v1318
        %v1575 = vxor.u32 %v807, %v1319
        %v1576 = vxor.u32 %v808, %v1320
        %v1577 = vxor.u32 %v809, %v1321
        %v1578 = vxor.u32 %v810, %v1322
        %v1579 = vxor.u32 %v811, %v1323
        %v1580 = vxor.u32 %v812, %v1324
        %v1581 = vxor.u32 %v813, %v1325
        %v1582 = vxor.u32 %v814, %v1326
        %v1583 = vxor.u32 %v815, %v1327
        %v1584 = vxor.u32 %v816, %v1328
        %v1585 = vxor.u32 %v817, %v1329
        %v1586 = vxor.u32 %v818, %v1330
        %v1587 = vxor.u32 %v819, %v1331
        %v1588 = vxor.u32 %v820, %v1332
        %v1589 = vxor.u32 %v821, %v1333
        %v1590 = vxor.u32 %v822, %v1334
        %v1591 = vxor.u32 %v823, %v1335
        %v1592 = vxor.u32 %v824, %v1336
        %v1593 = vxor.u32 %v825, %v1337
        %v1594 = vxor.u32 %v826, %v1338
        %v1595 = vxor.u32 %v827, %v1339
        %v1596 = vxor.u32 %v828, %v1340
        %v1597 = vxor.u32 %v829, %v1341
        %v1598 = vxor.u32 %v830, %v1342
        %v1599 = vxor.u32 %v831, %v1343
        %v1600 = vxor.u32 %v832, %v1344
        %v1601 = vxor.u32 %v833, %v1345
        %v1602 = vxor.u32 %v834, %v1346
        %v1603 = vxor.u32 %v835, %v1347
        %v1604 = vxor.u32 %v836, %v1348
        %v1605 = vxor.u32 %v837, %v1349
        %v1606 = vxor.u32 %v838, %v1350
        %v1607 = vxor.u32 %v839, %v1351
        %v1608 = vxor.u32 %v840, %v1352
        %v1609 = vxor.u32 %v841, %v1353
        %v1610 = vxor.u32 %v842, %v1354
        %v1611 = vxor.u32 %v843, %v1355
        %v1612 = vxor.u32 %v844, %v1356
        %v1613 = vxor.u32 %v845, %v1357
        %v1614 = vxor.u32 %v846, %v1358
        %v1615 = vxor.u32 %v847, %v1359
        %v1616 = vxor.u32 %v848, %v1360
        %v1617 = vxor.u32 %v849, %v1361
        %v1618 = vxor.u32 %v850, %v1362
        %v1619 = vxor.u32 %v851, %v1363
        %v1620 = vxor.u32 %v852, %v1364
        %v1621 = vxor.u32 %v853, %v1365
        %v1622 = vxor.u32 %v854, %v1366
        %v1623 = vxor.u32 %v855, %v1367
        %v1624 = vxor.u32 %v856, %v1368
        %v1625 = vxor.u32 %v857, %v1369
        %v1626 = vxor.u32 %v858, %v1370
        %v1627 = vxor.u32 %v859, %v1371
        %v1628 = vxor.u32 %v860, %v1372
        %v1629 = vxor.u32 %v861, %v1373
        %v1630 = vxor.u32 %v862, %v1374
        %v1631 = vxor.u32 %v863, %v1375
        %v1632 = vmul.u32 %v1376, 2146121005
        %v1633 = vmul.u32 %v1377, 2146121005
        %v1634 = vmul.u32 %v1378, 2146121005
        %v1635 = vmul.u32 %v1379, 2146121005
        %v1636 = vmul.u32 %v1380, 2146121005
        %v1637 = vmul.u32 %v1381, 2146121005
        %v1638 = vmul.u32 %v1382, 2146121005
        %v1639 = vmul.u32 %v1383, 2146121005
        %v1640 = vmul.u32 %v1384, 2146121005
        %v1641 = vmul.u32 %v1385, 2146121005
        %v1642 = vmul.u32 %v1386, 2146121005
        %v1643 = vmul.u32 %v1387, 2146121005
        %v1644 = vmul.u32 %v1388, 2146121005
        %v1645 = vmul.u32 %v1389, 2146121005
        %v1646 = vmul.u32 %v1390, 2146121005
        %v1647 = vmul.u32 %v1391, 2146121005
        %v1648 = vmul.u32 %v1392, 2146121005
        %v1649 = vmul.u32 %v1393, 2146121005
        %v1650 = vmul.u32 %v1394, 2146121005
        %v1651 = vmul.u32 %v1395, 2146121005
        %v1652 = vmul.u32 %v1396, 2146121005
        %v1653 = vmul.u32 %v1397, 2146121005
        %v1654 = vmul.u32 %v1398, 2146121005
        %v1655 = vmul.u32 %v1399, 2146121005
        %v1656 = vmul.u32 %v1400, 2146121005
        %v1657 = vmul.u32 %v1401, 2146121005
        %v1658 = vmul.u32 %v1402, 2146121005
        %v1659 = vmul.u32 %v1403, 2146121005
        %v1660 = vmul.u32 %v1404, 2146121005
        %v1661 = vmul.u32 %v1405, 2146121005
        %v1662 = vmul.u32 %v1406, 2146121005
        %v1663 = vmul.u32 %v1407, 2146121005
        %v1664 = vmul.u32 %v1408, 2146121005
        %v1665 = vmul.u32 %v1409, 2146121005
        %v1666 = vmul.u32 %v1410, 2146121005
        %v1667 = vmul.u32 %v1411, 2146121005
        %v1668 = vmul.u32 %v1412, 2146121005
        %v1669 = vmul.u32 %v1413, 2146121005
        %v1670 = vmul.u32 %v1414, 2146121005
        %v1671 = vmul.u32 %v1415, 2146121005
        %v1672 = vmul.u32 %v1416, 2146121005
        %v1673 = vmul.u32 %v1417, 2146121005
        %v1674 = vmul.u32 %v1418, 2146121005
        %v1675 = vmul.u32 %v1419, 2146121005
        %v1676 = vmul.u32 %v1420, 2146121005
        %v1677 = vmul.u32 %v1421, 2146121005
        %v1678 = vmul.u32 %v1422, 2146121005
        %v1679 = vmul.u32 %v1423, 2146121005
        %v1680 = vmul.u32 %v1424, 2146121005
        %v1681 = vmul.u32 %v1425, 2146121005
        %v1682 = vmul.u32 %v1426, 2146121005
        %v1683 = vmul.u32 %v1427, 2146121005
        %v1684 = vmul.u32 %v1428, 2146121005
        %v1685 = vmul.u32 %v1429, 2146121005
        %v1686 = vmul.u32 %v1430, 2146121005
        %v1687 = vmul.u32 %v1431, 2146121005
        %v1688 = vmul.u32 %v1432, 2146121005
        %v1689 = vmul.u32 %v1433, 2146121005
        %v1690 = vmul.u32 %v1434, 2146121005
        %v1691 = vmul.u32 %v1435, 2146121005
        %v1692 = vmul.u32 %v1436, 2146121005
        %v1693 = vmul.u32 %v1437, 2146121005
        %v1694 = vmul.u32 %v1438, 2146121005
        %v1695 = vmul.u32 %v1439, 2146121005
        %v1696 = vmul.u32 %v1440, 2146121005
        %v1697 = vmul.u32 %v1441, 2146121005
        %v1698 = vmul.u32 %v1442, 2146121005
        %v1699 = vmul.u32 %v1443, 2146121005
        %v1700 = vmul.u32 %v1444, 2146121005
        %v1701 = vmul.u32 %v1445, 2146121005
        %v1702 = vmul.u32 %v1446, 2146121005
        %v1703 = vmul.u32 %v1447, 2146121005
        %v1704 = vmul.u32 %v1448, 2146121005
        %v1705 = vmul.u32 %v1449, 2146121005
        %v1706 = vmul.u32 %v1450, 2146121005
        %v1707 = vmul.u32 %v1451, 2146121005
        %v1708 = vmul.u32 %v1452, 2146121005
        %v1709 = vmul.u32 %v1453, 2146121005
        %v1710 = vmul.u32 %v1454, 2146121005
        %v1711 = vmul.u32 %v1455, 2146121005
        %v1712 = vmul.u32 %v1456, 2146121005
        %v1713 = vmul.u32 %v1457, 2146121005
        %v1714 = vmul.u32 %v1458, 2146121005
        %v1715 = vmul.u32 %v1459, 2146121005
        %v1716 = vmul.u32 %v1460, 2146121005
        %v1717 = vmul.u32 %v1461, 2146121005
        %v1718 = vmul.u32 %v1462, 2146121005
        %v1719 = vmul.u32 %v1463, 2146121005
        %v1720 = vmul.u32 %v1464, 2146121005
        %v1721 = vmul.u32 %v1465, 2146121005
        %v1722 = vmul.u32 %v1466, 2146121005
        %v1723 = vmul.u32 %v1467, 2146121005
        %v1724 = vmul.u32 %v1468, 2146121005
        %v1725 = vmul.u32 %v1469, 2146121005
        %v1726 = vmul.u32 %v1470, 2146121005
        %v1727 = vmul.u32 %v1471, 2146121005
        %v1728 = vmul.u32 %v1472, 2146121005
        %v1729 = vmul.u32 %v1473, 2146121005
        %v1730 = vmul.u32 %v1474, 2146121005
        %v1731 = vmul.u32 %v1475, 2146121005
        %v1732 = vmul.u32 %v1476, 2146121005
        %v1733 = vmul.u32 %v1477, 2146121005
        %v1734 = vmul.u32 %v1478, 2146121005
        %v1735 = vmul.u32 %v1479, 2146121005
        %v1736 = vmul.u32 %v1480, 2146121005
        %v1737 = vmul.u32 %v1481, 2146121005
        %v1738 = vmul.u32 %v1482, 2146121005
        %v1739 = vmul.u32 %v1483, 2146121005
        %v1740 = vmul.u32 %v1484, 2146121005
        %v1741 = vmul.u32 %v1485, 2146121005
        %v1742 = vmul.u32 %v1486, 2146121005
        %v1743 = vmul.u32 %v1487, 2146121005
        %v1744 = vmul.u32 %v1488, 2146121005
        %v1745 = vmul.u32 %v1489, 2146121005
        %v1746 = vmul.u32 %v1490, 2146121005
        %v1747 = vmul.u32 %v1491, 2146121005
        %v1748 = vmul.u32 %v1492, 2146121005
        %v1749 = vmul.u32 %v1493, 2146121005
        %v1750 = vmul.u32 %v1494, 2146121005
        %v1751 = vmul.u32 %v1495, 2146121005
        %v1752 = vmul.u32 %v1496, 2146121005
        %v1753 = vmul.u32 %v1497, 2146121005
        %v1754 = vmul.u32 %v1498, 2146121005
        %v1755 = vmul.u32 %v1499, 2146121005
        %v1756 = vmul.u32 %v1500, 2146121005
        %v1757 = vmul.u32 %v1501, 2146121005
        %v1758 = vmul.u32 %v1502, 2146121005
        %v1759 = vmul.u32 %v1503, 2146121005
        %v1760 = vmul.u32 %v1504, 2146121005
        %v1761 = vmul.u32 %v1505, 2146121005
        %v1762 = vmul.u32 %v1506, 2146121005
        %v1763 = vmul.u32 %v1507, 2146121005
        %v1764 = vmul.u32 %v1508, 2146121005
        %v1765 = vmul.u32 %v1509, 2146121005
        %v1766 = vmul.u32 %v1510, 2146121005
        %v1767 = vmul.u32 %v1511, 2146121005
        %v1768 = vmul.u32 %v1512, 2146121005
        %v1769 = vmul.u32 %v1513, 2146121005
        %v1770 = vmul.u32 %v1514, 2146121005
        %v1771 = vmul.u32 %v1515, 2146121005
        %v1772 = vmul.u32 %v1516, 2146121005
        %v1773 = vmul.u32 %v1517, 2146121005
        %v1774 = vmul.u32 %v1518, 2146121005
        %v1775 = vmul.u32 %v1519, 2146121005
        %v1776 = vmul.u32 %v1520, 2146121005
        %v1777 = vmul.u32 %v1521, 2146121005
        %v1778 = vmul.u32 %v1522, 2146121005
        %v1779 = vmul.u32 %v1523, 2146121005
        %v1780 = vmul.u32 %v1524, 2146121005
        %v1781 = vmul.u32 %v1525, 2146121005
        %v1782 = vmul.u32 %v1526, 2146121005
        %v1783 = vmul.u32 %v1527, 2146121005
        %v1784 = vmul.u32 %v1528, 2146121005
        %v1785 = vmul.u32 %v1529, 2146121005
        %v1786 = vmul.u32 %v1530, 2146121005
        %v1787 = vmul.u32 %v1531, 2146121005
        %v1788 = vmul.u32 %v1532, 2146121005
        %v1789 = vmul.u32 %v1533, 2146121005
        %v1790 = vmul.u32 %v1534, 2146121005
        %v1791 = vmul.u32 %v1535, 2146121005
        %v1792 = vmul.u32 %v1536, 2146121005
        %v1793 = vmul.u32 %v1537, 2146121005
        %v1794 = vmul.u32 %v1538, 2146121005
        %v1795 = vmul.u32 %v1539, 2146121005
        %v1796 = vmul.u32 %v1540, 2146121005
        %v1797 = vmul.u32 %v1541, 2146121005
        %v1798 = vmul.u32 %v1542, 2146121005
        %v1799 = vmul.u32 %v1543, 2146121005
        %v1800 = vmul.u32 %v1544, 2146121005
        %v1801 = vmul.u32 %v1545, 2146121005
        %v1802 = vmul.u32 %v1546, 2146121005
        %v1803 = vmul.u32 %v1547, 2146121005
        %v1804 = vmul.u32 %v1548, 2146121005
        %v1805 = vmul.u32 %v1549, 2146121005
        %v1806 = vmul.u32 %v1550, 2146121005
        %v1807 = vmul.u32 %v1551, 2146121005
        %v1808 = vmul.u32 %v1552, 2146121005
        %v1809 = vmul.u32 %v1553, 2146121005
        %v1810 = vmul.u32 %v1554, 2146121005
        %v1811 = vmul.u32 %v1555, 2146121005
        %v1812 = vmul.u32 %v1556, 2146121005
        %v1813 = vmul.u32 %v1557, 2146121005
        %v1814 = vmul.u32 %v1558, 2146121005
        %v1815 = vmul.u32 %v1559, 2146121005
        %v1816 = vmul.u32 %v1560, 2146121005
        %v1817 = vmul.u32 %v1561, 2146121005
        %v1818 = vmul.u32 %v1562, 2146121005
        %v1819 = vmul.u32 %v1563, 2146121005
        %v1820 = vmul.u32 %v1564, 2146121005
        %v1821 = vmul.u32 %v1565, 2146121005
        %v1822 = vmul.u32 %v1566, 2146121005
        %v1823 = vmul.u32 %v1567, 2146121005
        %v1824 = vmul.u32 %v1568, 2146121005
        %v1825 = vmul.u32 %v1569, 2146121005
        %v1826 = vmul.u32 %v1570, 2146121005
        %v1827 = vmul.u32 %v1571, 2146121005
        %v1828 = vmul.u32 %v1572, 2146121005
        %v1829 = vmul.u32 %v1573, 2146121005
        %v1830 = vmul.u32 %v1574, 2146121005
        %v1831 = vmul.u32 %v1575, 2146121005
        %v1832 = vmul.u32 %v1576, 2146121005
        %v1833 = vmul.u32 %v1577, 2146121005
        %v1834 = vmul.u32 %v1578, 2146121005
        %v1835 = vmul.u32 %v1579, 2146121005
        %v1836 = vmul.u32 %v1580, 2146121005
        %v1837 = vmul.u32 %v1581, 2146121005
        %v1838 = vmul.u32 %v1582, 2146121005
        %v1839 = vmul.u32 %v1583, 2146121005
        %v1840 = vmul.u32 %v1584, 2146121005
        %v1841 = vmul.u32 %v1585, 2146121005
        %v1842 = vmul.u32 %v1586, 2146121005
        %v1843 = vmul.u32 %v1587, 2146121005
        %v1844 = vmul.u32 %v1588, 2146121005
        %v1845 = vmul.u32 %v1589, 2146121005
        %v1846 = vmul.u32 %v1590, 2146121005
        %v1847 = vmul.u32 %v1591, 2146121005
        %v1848 = vmul.u32 %v1592, 2146121005
        %v1849 = vmul.u32 %v1593, 2146121005
        %v1850 = vmul.u32 %v1594, 2146121005
        %v1851 = vmul.u32 %v1595, 2146121005
        %v1852 = vmul.u32 %v1596, 2146121005
        %v1853 = vmul.u32 %v1597, 2146121005
        %v1854 = vmul.u32 %v1598, 2146121005
        %v1855 = vmul.u32 %v1599, 2146121005
        %v1856 = vmul.u32 %v1600, 2146121005
        %v1857 = vmul.u32 %v1601, 2146121005
        %v1858 = vmul.u32 %v1602, 2146121005
        %v1859 = vmul.u32 %v1603, 2146121005
        %v1860 = vmul.u32 %v1604, 2146121005
        %v1861 = vmul.u32 %v1605, 2146121005
        %v1862 = vmul.u32 %v1606, 2146121005
        %v1863 = vmul.u32 %v1607, 2146121005
        %v1864 = vmul.u32 %v1608, 2146121005
        %v1865 = vmul.u32 %v1609, 2146121005
        %v1866 = vmul.u32 %v1610, 2146121005
        %v1867 = vmul.u32 %v1611, 2146121005
        %v1868 = vmul.u32 %v1612, 2146121005
        %v1869 = vmul.u32 %v1613, 2146121005
        %v1870 = vmul.u32 %v1614, 2146121005
        %v1871 = vmul.u32 %v1615, 2146121005
        %v1872 = vmul.u32 %v1616, 2146121005
        %v1873 = vmul.u32 %v1617, 2146121005
        %v1874 = vmul.u32 %v1618, 2146121005
        %v1875 = vmul.u32 %v1619, 2146121005
        %v1876 = vmul.u32 %v1620, 2146121005
        %v1877 = vmul.u32 %v1621, 2146121005
        %v1878 = vmul.u32 %v1622, 2146121005
        %v1879 = vmul.u32 %v1623, 2146121005
        %v1880 = vmul.u32 %v1624, 2146121005
        %v1881 = vmul.u32 %v1625, 2146121005
        %v1882 = vmul.u32 %v1626, 2146121005
        %v1883 = vmul.u32 %v1627, 2146121005
        %v1884 = vmul.u32 %v1628, 2146121005
        %v1885 = vmul.u32 %v1629, 2146121005
        %v1886 = vmul.u32 %v1630, 2146121005
        %v1887 = vmul.u32 %v1631, 2146121005
        %v1888 = vshra.s32 %v1632, 15
        %v1889 = vshra.s32 %v1633, 15
        %v1890 = vshra.s32 %v1634, 15
        %v1891 = vshra.s32 %v1635, 15
        %v1892 = vshra.s32 %v1636, 15
        %v1893 = vshra.s32 %v1637, 15
        %v1894 = vshra.s32 %v1638, 15
        %v1895 = vshra.s32 %v1639, 15
        %v1896 = vshra.s32 %v1640, 15
        %v1897 = vshra.s32 %v1641, 15
        %v1898 = vshra.s32 %v1642, 15
        %v1899 = vshra.s32 %v1643, 15
        %v1900 = vshra.s32 %v1644, 15
        %v1901 = vshra.s32 %v1645, 15
        %v1902 = vshra.s32 %v1646, 15
        %v1903 = vshra.s32 %v1647, 15
        %v1904 = vshra.s32 %v1648, 15
        %v1905 = vshra.s32 %v1649, 15
        %v1906 = vshra.s32 %v1650, 15
        %v1907 = vshra.s32 %v1651, 15
        %v1908 = vshra.s32 %v1652, 15
        %v1909 = vshra.s32 %v1653, 15
        %v1910 = vshra.s32 %v1654, 15
        %v1911 = vshra.s32 %v1655, 15
        %v1912 = vshra.s32 %v1656, 15
        %v1913 = vshra.s32 %v1657, 15
        %v1914 = vshra.s32 %v1658, 15
        %v1915 = vshra.s32 %v1659, 15
        %v1916 = vshra.s32 %v1660, 15
        %v1917 = vshra.s32 %v1661, 15
        %v1918 = vshra.s32 %v1662, 15
        %v1919 = vshra.s32 %v1663, 15
        %v1920 = vshra.s32 %v1664, 15
        %v1921 = vshra.s32 %v1665, 15
        %v1922 = vshra.s32 %v1666, 15
        %v1923 = vshra.s32 %v1667, 15
        %v1924 = vshra.s32 %v1668, 15
        %v1925 = vshra.s32 %v1669, 15
        %v1926 = vshra.s32 %v1670, 15
        %v1927 = vshra.s32 %v1671, 15
        %v1928 = vshra.s32 %v1672, 15
        %v1929 = vshra.s32 %v1673, 15
        %v1930 = vshra.s32 %v1674, 15
        %v1931 = vshra.s32 %v1675, 15
        %v1932 = vshra.s32 %v1676, 15
        %v1933 = vshra.s32 %v1677, 15
        %v1934 = vshra.s32 %v1678, 15
        %v1935 = vshra.s32 %v1679, 15
        %v1936 = vshra.s32 %v1680, 15
        %v1937 = vshra.s32 %v1681, 15
        %v1938 = vshra.s32 %v1682, 15
        %v1939 = vshra.s32 %v1683, 15
        %v1940 = vshra.s32 %v1684, 15
        %v1941 = vshra.s32 %v1685, 15
        %v1942 = vshra.s32 %v1686, 15
        %v1943 = vshra.s32 %v1687, 15
        %v1944 = vshra.s32 %v1688, 15
        %v1945 = vshra.s32 %v1689, 15
        %v1946 = vshra.s32 %v1690, 15
        %v1947 = vshra.s32 %v1691, 15
        %v1948 = vshra.s32 %v1692, 15
        %v1949 = vshra.s32 %v1693, 15
        %v1950 = vshra.s32 %v1694, 15
        %v1951 = vshra.s32 %v1695, 15
        %v1952 = vshra.s32 %v1696, 15
        %v1953 = vshra.s32 %v1697, 15
        %v1954 = vshra.s32 %v1698, 15
        %v1955 = vshra.s32 %v1699, 15
        %v1956 = vshra.s32 %v1700, 15
        %v1957 = vshra.s32 %v1701, 15
        %v1958 = vshra.s32 %v1702, 15
        %v1959 = vshra.s32 %v1703, 15
        %v1960 = vshra.s32 %v1704, 15
        %v1961 = vshra.s32 %v1705, 15
        %v1962 = vshra.s32 %v1706, 15
        %v1963 = vshra.s32 %v1707, 15
        %v1964 = vshra.s32 %v1708, 15
        %v1965 = vshra.s32 %v1709, 15
        %v1966 = vshra.s32 %v1710, 15
        %v1967 = vshra.s32 %v1711, 15
        %v1968 = vshra.s32 %v1712, 15
        %v1969 = vshra.s32 %v1713, 15
        %v1970 = vshra.s32 %v1714, 15
        %v1971 = vshra.s32 %v1715, 15
        %v1972 = vshra.s32 %v1716, 15
        %v1973 = vshra.s32 %v1717, 15
        %v1974 = vshra.s32 %v1718, 15
        %v1975 = vshra.s32 %v1719, 15
        %v1976 = vshra.s32 %v1720, 15
        %v1977 = vshra.s32 %v1721, 15
        %v1978 = vshra.s32 %v1722, 15
        %v1979 = vshra.s32 %v1723, 15
        %v1980 = vshra.s32 %v1724, 15
        %v1981 = vshra.s32 %v1725, 15
        %v1982 = vshra.s32 %v1726, 15
        %v1983 = vshra.s32 %v1727, 15
        %v1984 = vshra.s32 %v1728, 15
        %v1985 = vshra.s32 %v1729, 15
        %v1986 = vshra.s32 %v1730, 15
        %v1987 = vshra.s32 %v1731, 15
        %v1988 = vshra.s32 %v1732, 15
        %v1989 = vshra.s32 %v1733, 15
        %v1990 = vshra.s32 %v1734, 15
        %v1991 = vshra.s32 %v1735, 15
        %v1992 = vshra.s32 %v1736, 15
        %v1993 = vshra.s32 %v1737, 15
        %v1994 = vshra.s32 %v1738, 15
        %v1995 = vshra.s32 %v1739, 15
        %v1996 = vshra.s32 %v1740, 15
        %v1997 = vshra.s32 %v1741, 15
        %v1998 = vshra.s32 %v1742, 15
        %v1999 = vshra.s32 %v1743, 15
        %v2000 = vshra.s32 %v1744, 15
        %v2001 = vshra.s32 %v1745, 15
        %v2002 = vshra.s32 %v1746, 15
        %v2003 = vshra.s32 %v1747, 15
        %v2004 = vshra.s32 %v1748, 15
        %v2005 = vshra.s32 %v1749, 15
        %v2006 = vshra.s32 %v1750, 15
        %v2007 = vshra.s32 %v1751, 15
        %v2008 = vshra.s32 %v1752, 15
        %v2009 = vshra.s32 %v1753, 15
        %v2010 = vshra.s32 %v1754, 15
        %v2011 = vshra.s32 %v1755, 15
        %v2012 = vshra.s32 %v1756, 15
        %v2013 = vshra.s32 %v1757, 15
        %v2014 = vshra.s32 %v1758, 15
        %v2015 = vshra.s32 %v1759, 15
        %v2016 = vshra.s32 %v1760, 15
        %v2017 = vshra.s32 %v1761, 15
        %v2018 = vshra.s32 %v1762, 15
        %v2019 = vshra.s32 %v1763, 15
        %v2020 = vshra.s32 %v1764, 15
        %v2021 = vshra.s32 %v1765, 15
        %v2022 = vshra.s32 %v1766, 15
        %v2023 = vshra.s32 %v1767, 15
        %v2024 = vshra.s32 %v1768, 15
        %v2025 = vshra.s32 %v1769, 15
        %v2026 = vshra.s32 %v1770, 15
        %v2027 = vshra.s32 %v1771, 15
        %v2028 = vshra.s32 %v1772, 15
        %v2029 = vshra.s32 %v1773, 15
        %v2030 = vshra.s32 %v1774, 15
        %v2031 = vshra.s32 %v1775, 15
        %v2032 = vshra.s32 %v1776, 15
        %v2033 = vshra.s32 %v1777, 15
        %v2034 = vshra.s32 %v1778, 15
        %v2035 = vshra.s32 %v1779, 15
        %v2036 = vshra.s32 %v1780, 15
        %v2037 = vshra.s32 %v1781, 15
        %v2038 = vshra.s32 %v1782, 15
        %v2039 = vshra.s32 %v1783, 15
        %v2040 = vshra.s32 %v1784, 15
        %v2041 = vshra.s32 %v1785, 15
        %v2042 = vshra.s32 %v1786, 15
        %v2043 = vshra.s32 %v1787, 15
        %v2044 = vshra.s32 %v1788, 15
        %v2045 = vshra.s32 %v1789, 15
        %v2046 = vshra.s32 %v1790, 15
        %v2047 = vshra.s32 %v1791, 15
        %v2048 = vshra.s32 %v1792, 15
        %v2049 = vshra.s32 %v1793, 15
        %v2050 = vshra.s32 %v1794, 15
        %v2051 = vshra.s32 %v1795, 15
        %v2052 = vshra.s32 %v1796, 15
        %v2053 = vshra.s32 %v1797, 15
        %v2054 = vshra.s32 %v1798, 15
        %v2055 = vshra.s32 %v1799, 15
        %v2056 = vshra.s32 %v1800, 15
        %v2057 = vshra.s32 %v1801, 15
        %v2058 = vshra.s32 %v1802, 15
        %v2059 = vshra.s32 %v1803, 15
        %v2060 = vshra.s32 %v1804, 15
        %v2061 = vshra.s32 %v1805, 15
        %v2062 = vshra.s32 %v1806, 15
        %v2063 = vshra.s32 %v1807, 15
        %v2064 = vshra.s32 %v1808, 15
        %v2065 = vshra.s32 %v1809, 15
        %v2066 = vshra.s32 %v1810, 15
        %v2067 = vshra.s32 %v1811, 15
        %v2068 = vshra.s32 %v1812, 15
        %v2069 = vshra.s32 %v1813, 15
        %v2070 = vshra.s32 %v1814, 15
        %v2071 = vshra.s32 %v1815, 15
        %v2072 = vshra.s32 %v1816, 15
        %v2073 = vshra.s32 %v1817, 15
        %v2074 = vshra.s32 %v1818, 15
        %v2075 = vshra.s32 %v1819, 15
        %v2076 = vshra.s32 %v1820, 15
        %v2077 = vshra.s32 %v1821, 15
        %v2078 = vshra.s32 %v1822, 15
        %v2079 = vshra.s32 %v1823, 15
        %v2080 = vshra.s32 %v1824, 15
        %v2081 = vshra.s32 %v1825, 15
        %v2082 = vshra.s32 %v1826, 15
        %v2083 = vshra.s32 %v1827, 15
        %v2084 = vshra.s32 %v1828, 15
        %v2085 = vshra.s32 %v1829, 15
        %v2086 = vshra.s32 %v1830, 15
        %v2087 = vshra.s32 %v1831, 15
        %v2088 = vshra.s32 %v1832, 15
        %v2089 = vshra.s32 %v1833, 15
        %v2090 = vshra.s32 %v1834, 15
        %v2091 = vshra.s32 %v1835, 15
        %v2092 = vshra.s32 %v1836, 15
        %v2093 = vshra.s32 %v1837, 15
        %v2094 = vshra.s32 %v1838, 15
        %v2095 = vshra.s32 %v1839, 15
        %v2096 = vshra.s32 %v1840, 15
        %v2097 = vshra.s32 %v1841, 15
        %v2098 = vshra.s32 %v1842, 15
        %v2099 = vshra.s32 %v1843, 15
        %v2100 = vshra.s32 %v1844, 15
        %v2101 = vshra.s32 %v1845, 15
        %v2102 = vshra.s32 %v1846, 15
        %v2103 = vshra.s32 %v1847, 15
        %v2104 = vshra.s32 %v1848, 15
        %v2105 = vshra.s32 %v1849, 15
        %v2106 = vshra.s32 %v1850, 15
        %v2107 = vshra.s32 %v1851, 15
        %v2108 = vshra.s32 %v1852, 15
        %v2109 = vshra.s32 %v1853, 15
        %v2110 = vshra.s32 %v1854, 15
        %v2111 = vshra.s32 %v1855, 15
        %v2112 = vshra.s32 %v1856, 15
        %v2113 = vshra.s32 %v1857, 15
        %v2114 = vshra.s32 %v1858, 15
        %v2115 = vshra.s32 %v1859, 15
        %v2116 = vshra.s32 %v1860, 15
        %v2117 = vshra.s32 %v1861, 15
        %v2118 = vshra.s32 %v1862, 15
        %v2119 = vshra.s32 %v1863, 15
        %v2120 = vshra.s32 %v1864, 15
        %v2121 = vshra.s32 %v1865, 15
        %v2122 = vshra.s32 %v1866, 15
        %v2123 = vshra.s32 %v1867, 15
        %v2124 = vshra.s32 %v1868, 15
        %v2125 = vshra.s32 %v1869, 15
        %v2126 = vshra.s32 %v1870, 15
        %v2127 = vshra.s32 %v1871, 15
        %v2128 = vshra.s32 %v1872, 15
        %v2129 = vshra.s32 %v1873, 15
        %v2130 = vshra.s32 %v1874, 15
        %v2131 = vshra.s32 %v1875, 15
        %v2132 = vshra.s32 %v1876, 15
        %v2133 = vshra.s32 %v1877, 15
        %v2134 = vshra.s32 %v1878, 15
        %v2135 = vshra.s32 %v1879, 15
        %v2136 = vshra.s32 %v1880, 15
        %v2137 = vshra.s32 %v1881, 15
        %v2138 = vshra.s32 %v1882, 15
        %v2139 = vshra.s32 %v1883, 15
        %v2140 = vshra.s32 %v1884, 15
        %v2141 = vshra.s32 %v1885, 15
        %v2142 = vshra.s32 %v1886, 15
        %v2143 = vshra.s32 %v1887, 15
        %v2144 = vand.u32 %v1888, 131071
        %v2145 = vand.u32 %v1889, 131071
        %v2146 = vand.u32 %v1890, 131071
        %v2147 = vand.u32 %v1891, 131071
        %v2148 = vand.u32 %v1892, 131071
        %v2149 = vand.u32 %v1893, 131071
        %v2150 = vand.u32 %v1894, 131071
        %v2151 = vand.u32 %v1895, 131071
        %v2152 = vand.u32 %v1896, 131071
        %v2153 = vand.u32 %v1897, 131071
        %v2154 = vand.u32 %v1898, 131071
        %v2155 = vand.u32 %v1899, 131071
        %v2156 = vand.u32 %v1900, 131071
        %v2157 = vand.u32 %v1901, 131071
        %v2158 = vand.u32 %v1902, 131071
        %v2159 = vand.u32 %v1903, 131071
        %v2160 = vand.u32 %v1904, 131071
        %v2161 = vand.u32 %v1905, 131071
        %v2162 = vand.u32 %v1906, 131071
        %v2163 = vand.u32 %v1907, 131071
        %v2164 = vand.u32 %v1908, 131071
        %v2165 = vand.u32 %v1909, 131071
        %v2166 = vand.u32 %v1910, 131071
        %v2167 = vand.u32 %v1911, 131071
        %v2168 = vand.u32 %v1912, 131071
        %v2169 = vand.u32 %v1913, 131071
        %v2170 = vand.u32 %v1914, 131071
        %v2171 = vand.u32 %v1915, 131071
        %v2172 = vand.u32 %v1916, 131071
        %v2173 = vand.u32 %v1917, 131071
        %v2174 = vand.u32 %v1918, 131071
        %v2175 = vand.u32 %v1919, 131071
        %v2176 = vand.u32 %v1920, 131071
        %v2177 = vand.u32 %v1921, 131071
        %v2178 = vand.u32 %v1922, 131071
        %v2179 = vand.u32 %v1923, 131071
        %v2180 = vand.u32 %v1924, 131071
        %v2181 = vand.u32 %v1925, 131071
        %v2182 = vand.u32 %v1926, 131071
        %v2183 = vand.u32 %v1927, 131071
        %v2184 = vand.u32 %v1928, 131071
        %v2185 = vand.u32 %v1929, 131071
        %v2186 = vand.u32 %v1930, 131071
        %v2187 = vand.u32 %v1931, 131071
        %v2188 = vand.u32 %v1932, 131071
        %v2189 = vand.u32 %v1933, 131071
        %v2190 = vand.u32 %v1934, 131071
        %v2191 = vand.u32 %v1935, 131071
        %v2192 = vand.u32 %v1936, 131071
        %v2193 = vand.u32 %v1937, 131071
        %v2194 = vand.u32 %v1938, 131071
        %v2195 = vand.u32 %v1939, 131071
        %v2196 = vand.u32 %v1940, 131071
        %v2197 = vand.u32 %v1941, 131071
        %v2198 = vand.u32 %v1942, 131071
        %v2199 = vand.u32 %v1943, 131071
        %v2200 = vand.u32 %v1944, 131071
        %v2201 = vand.u32 %v1945, 131071
        %v2202 = vand.u32 %v1946, 131071
        %v2203 = vand.u32 %v1947, 131071
        %v2204 = vand.u32 %v1948, 131071
        %v2205 = vand.u32 %v1949, 131071
        %v2206 = vand.u32 %v1950, 131071
        %v2207 = vand.u32 %v1951, 131071
        %v2208 = vand.u32 %v1952, 131071
        %v2209 = vand.u32 %v1953, 131071
        %v2210 = vand.u32 %v1954, 131071
        %v2211 = vand.u32 %v1955, 131071
        %v2212 = vand.u32 %v1956, 131071
        %v2213 = vand.u32 %v1957, 131071
        %v2214 = vand.u32 %v1958, 131071
        %v2215 = vand.u32 %v1959, 131071
        %v2216 = vand.u32 %v1960, 131071
        %v2217 = vand.u32 %v1961, 131071
        %v2218 = vand.u32 %v1962, 131071
        %v2219 = vand.u32 %v1963, 131071
        %v2220 = vand.u32 %v1964, 131071
        %v2221 = vand.u32 %v1965, 131071
        %v2222 = vand.u32 %v1966, 131071
        %v2223 = vand.u32 %v1967, 131071
        %v2224 = vand.u32 %v1968, 131071
        %v2225 = vand.u32 %v1969, 131071
        %v2226 = vand.u32 %v1970, 131071
        %v2227 = vand.u32 %v1971, 131071
        %v2228 = vand.u32 %v1972, 131071
        %v2229 = vand.u32 %v1973, 131071
        %v2230 = vand.u32 %v1974, 131071
        %v2231 = vand.u32 %v1975, 131071
        %v2232 = vand.u32 %v1976, 131071
        %v2233 = vand.u32 %v1977, 131071
        %v2234 = vand.u32 %v1978, 131071
        %v2235 = vand.u32 %v1979, 131071
        %v2236 = vand.u32 %v1980, 131071
        %v2237 = vand.u32 %v1981, 131071
        %v2238 = vand.u32 %v1982, 131071
        %v2239 = vand.u32 %v1983, 131071
        %v2240 = vand.u32 %v1984, 131071
        %v2241 = vand.u32 %v1985, 131071
        %v2242 = vand.u32 %v1986, 131071
        %v2243 = vand.u32 %v1987, 131071
        %v2244 = vand.u32 %v1988, 131071
        %v2245 = vand.u32 %v1989, 131071
        %v2246 = vand.u32 %v1990, 131071
        %v2247 = vand.u32 %v1991, 131071
        %v2248 = vand.u32 %v1992, 131071
        %v2249 = vand.u32 %v1993, 131071
        %v2250 = vand.u32 %v1994, 131071
        %v2251 = vand.u32 %v1995, 131071
        %v2252 = vand.u32 %v1996, 131071
        %v2253 = vand.u32 %v1997, 131071
        %v2254 = vand.u32 %v1998, 131071
        %v2255 = vand.u32 %v1999, 131071
        %v2256 = vand.u32 %v2000, 131071
        %v2257 = vand.u32 %v2001, 131071
        %v2258 = vand.u32 %v2002, 131071
        %v2259 = vand.u32 %v2003, 131071
        %v2260 = vand.u32 %v2004, 131071
        %v2261 = vand.u32 %v2005, 131071
        %v2262 = vand.u32 %v2006, 131071
        %v2263 = vand.u32 %v2007, 131071
        %v2264 = vand.u32 %v2008, 131071
        %v2265 = vand.u32 %v2009, 131071
        %v2266 = vand.u32 %v2010, 131071
        %v2267 = vand.u32 %v2011, 131071
        %v2268 = vand.u32 %v2012, 131071
        %v2269 = vand.u32 %v2013, 131071
        %v2270 = vand.u32 %v2014, 131071
        %v2271 = vand.u32 %v2015, 131071
        %v2272 = vand.u32 %v2016, 131071
        %v2273 = vand.u32 %v2017, 131071
        %v2274 = vand.u32 %v2018, 131071
        %v2275 = vand.u32 %v2019, 131071
        %v2276 = vand.u32 %v2020, 131071
        %v2277 = vand.u32 %v2021, 131071
        %v2278 = vand.u32 %v2022, 131071
        %v2279 = vand.u32 %v2023, 131071
        %v2280 = vand.u32 %v2024, 131071
        %v2281 = vand.u32 %v2025, 131071
        %v2282 = vand.u32 %v2026, 131071
        %v2283 = vand.u32 %v2027, 131071
        %v2284 = vand.u32 %v2028, 131071
        %v2285 = vand.u32 %v2029, 131071
        %v2286 = vand.u32 %v2030, 131071
        %v2287 = vand.u32 %v2031, 131071
        %v2288 = vand.u32 %v2032, 131071
        %v2289 = vand.u32 %v2033, 131071
        %v2290 = vand.u32 %v2034, 131071
        %v2291 = vand.u32 %v2035, 131071
        %v2292 = vand.u32 %v2036, 131071
        %v2293 = vand.u32 %v2037, 131071
        %v2294 = vand.u32 %v2038, 131071
        %v2295 = vand.u32 %v2039, 131071
        %v2296 = vand.u32 %v2040, 131071
        %v2297 = vand.u32 %v2041, 131071
        %v2298 = vand.u32 %v2042, 131071
        %v2299 = vand.u32 %v2043, 131071
        %v2300 = vand.u32 %v2044, 131071
        %v2301 = vand.u32 %v2045, 131071
        %v2302 = vand.u32 %v2046, 131071
        %v2303 = vand.u32 %v2047, 131071
        %v2304 = vand.u32 %v2048, 131071
        %v2305 = vand.u32 %v2049, 131071
        %v2306 = vand.u32 %v2050, 131071
        %v2307 = vand.u32 %v2051, 131071
        %v2308 = vand.u32 %v2052, 131071
        %v2309 = vand.u32 %v2053, 131071
        %v2310 = vand.u32 %v2054, 131071
        %v2311 = vand.u32 %v2055, 131071
        %v2312 = vand.u32 %v2056, 131071
        %v2313 = vand.u32 %v2057, 131071
        %v2314 = vand.u32 %v2058, 131071
        %v2315 = vand.u32 %v2059, 131071
        %v2316 = vand.u32 %v2060, 131071
        %v2317 = vand.u32 %v2061, 131071
        %v2318 = vand.u32 %v2062, 131071
        %v2319 = vand.u32 %v2063, 131071
        %v2320 = vand.u32 %v2064, 131071
        %v2321 = vand.u32 %v2065, 131071
        %v2322 = vand.u32 %v2066, 131071
        %v2323 = vand.u32 %v2067, 131071
        %v2324 = vand.u32 %v2068, 131071
        %v2325 = vand.u32 %v2069, 131071
        %v2326 = vand.u32 %v2070, 131071
        %v2327 = vand.u32 %v2071, 131071
        %v2328 = vand.u32 %v2072, 131071
        %v2329 = vand.u32 %v2073, 131071
        %v2330 = vand.u32 %v2074, 131071
        %v2331 = vand.u32 %v2075, 131071
        %v2332 = vand.u32 %v2076, 131071
        %v2333 = vand.u32 %v2077, 131071
        %v2334 = vand.u32 %v2078, 131071
        %v2335 = vand.u32 %v2079, 131071
        %v2336 = vand.u32 %v2080, 131071
        %v2337 = vand.u32 %v2081, 131071
        %v2338 = vand.u32 %v2082, 131071
        %v2339 = vand.u32 %v2083, 131071
        %v2340 = vand.u32 %v2084, 131071
        %v2341 = vand.u32 %v2085, 131071
        %v2342 = vand.u32 %v2086, 131071
        %v2343 = vand.u32 %v2087, 131071
        %v2344 = vand.u32 %v2088, 131071
        %v2345 = vand.u32 %v2089, 131071
        %v2346 = vand.u32 %v2090, 131071
        %v2347 = vand.u32 %v2091, 131071
        %v2348 = vand.u32 %v2092, 131071
        %v2349 = vand.u32 %v2093, 131071
        %v2350 = vand.u32 %v2094, 131071
        %v2351 = vand.u32 %v2095, 131071
        %v2352 = vand.u32 %v2096, 131071
        %v2353 = vand.u32 %v2097, 131071
        %v2354 = vand.u32 %v2098, 131071
        %v2355 = vand.u32 %v2099, 131071
        %v2356 = vand.u32 %v2100, 131071
        %v2357 = vand.u32 %v2101, 131071
        %v2358 = vand.u32 %v2102, 131071
        %v2359 = vand.u32 %v2103, 131071
        %v2360 = vand.u32 %v2104, 131071
        %v2361 = vand.u32 %v2105, 131071
        %v2362 = vand.u32 %v2106, 131071
        %v2363 = vand.u32 %v2107, 131071
        %v2364 = vand.u32 %v2108, 131071
        %v2365 = vand.u32 %v2109, 131071
        %v2366 = vand.u32 %v2110, 131071
        %v2367 = vand.u32 %v2111, 131071
        %v2368 = vand.u32 %v2112, 131071
        %v2369 = vand.u32 %v2113, 131071
        %v2370 = vand.u32 %v2114, 131071
        %v2371 = vand.u32 %v2115, 131071
        %v2372 = vand.u32 %v2116, 131071
        %v2373 = vand.u32 %v2117, 131071
        %v2374 = vand.u32 %v2118, 131071
        %v2375 = vand.u32 %v2119, 131071
        %v2376 = vand.u32 %v2120, 131071
        %v2377 = vand.u32 %v2121, 131071
        %v2378 = vand.u32 %v2122, 131071
        %v2379 = vand.u32 %v2123, 131071
        %v2380 = vand.u32 %v2124, 131071
        %v2381 = vand.u32 %v2125, 131071
        %v2382 = vand.u32 %v2126, 131071
        %v2383 = vand.u32 %v2127, 131071
        %v2384 = vand.u32 %v2128, 131071
        %v2385 = vand.u32 %v2129, 131071
        %v2386 = vand.u32 %v2130, 131071
        %v2387 = vand.u32 %v2131, 131071
        %v2388 = vand.u32 %v2132, 131071
        %v2389 = vand.u32 %v2133, 131071
        %v2390 = vand.u32 %v2134, 131071
        %v2391 = vand.u32 %v2135, 131071
        %v2392 = vand.u32 %v2136, 131071
        %v2393 = vand.u32 %v2137, 131071
        %v2394 = vand.u32 %v2138, 131071
        %v2395 = vand.u32 %v2139, 131071
        %v2396 = vand.u32 %v2140, 131071
        %v2397 = vand.u32 %v2141, 131071
        %v2398 = vand.u32 %v2142, 131071
        %v2399 = vand.u32 %v2143, 131071
        %v2400 = vxor.u32 %v1632, %v2144
        %v2401 = vxor.u32 %v1633, %v2145
        %v2402 = vxor.u32 %v1634, %v2146
        %v2403 = vxor.u32 %v1635, %v2147
        %v2404 = vxor.u32 %v1636, %v2148
        %v2405 = vxor.u32 %v1637, %v2149
        %v2406 = vxor.u32 %v1638, %v2150
        %v2407 = vxor.u32 %v1639, %v2151
        %v2408 = vxor.u32 %v1640, %v2152
        %v2409 = vxor.u32 %v1641, %v2153
        %v2410 = vxor.u32 %v1642, %v2154
        %v2411 = vxor.u32 %v1643, %v2155
        %v2412 = vxor.u32 %v1644, %v2156
        %v2413 = vxor.u32 %v1645, %v2157
        %v2414 = vxor.u32 %v1646, %v2158
        %v2415 = vxor.u32 %v1647, %v2159
        %v2416 = vxor.u32 %v1648, %v2160
        %v2417 = vxor.u32 %v1649, %v2161
        %v2418 = vxor.u32 %v1650, %v2162
        %v2419 = vxor.u32 %v1651, %v2163
        %v2420 = vxor.u32 %v1652, %v2164
        %v2421 = vxor.u32 %v1653, %v2165
        %v2422 = vxor.u32 %v1654, %v2166
        %v2423 = vxor.u32 %v1655, %v2167
        %v2424 = vxor.u32 %v1656, %v2168
        %v2425 = vxor.u32 %v1657, %v2169
        %v2426 = vxor.u32 %v1658, %v2170
        %v2427 = vxor.u32 %v1659, %v2171
        %v2428 = vxor.u32 %v1660, %v2172
        %v2429 = vxor.u32 %v1661, %v2173
        %v2430 = vxor.u32 %v1662, %v2174
        %v2431 = vxor.u32 %v1663, %v2175
        %v2432 = vxor.u32 %v1664, %v2176
        %v2433 = vxor.u32 %v1665, %v2177
        %v2434 = vxor.u32 %v1666, %v2178
        %v2435 = vxor.u32 %v1667, %v2179
        %v2436 = vxor.u32 %v1668, %v2180
        %v2437 = vxor.u32 %v1669, %v2181
        %v2438 = vxor.u32 %v1670, %v2182
        %v2439 = vxor.u32 %v1671, %v2183
        %v2440 = vxor.u32 %v1672, %v2184
        %v2441 = vxor.u32 %v1673, %v2185
        %v2442 = vxor.u32 %v1674, %v2186
        %v2443 = vxor.u32 %v1675, %v2187
        %v2444 = vxor.u32 %v1676, %v2188
        %v2445 = vxor.u32 %v1677, %v2189
        %v2446 = vxor.u32 %v1678, %v2190
        %v2447 = vxor.u32 %v1679, %v2191
        %v2448 = vxor.u32 %v1680, %v2192
        %v2449 = vxor.u32 %v1681, %v2193
        %v2450 = vxor.u32 %v1682, %v2194
        %v2451 = vxor.u32 %v1683, %v2195
        %v2452 = vxor.u32 %v1684, %v2196
        %v2453 = vxor.u32 %v1685, %v2197
        %v2454 = vxor.u32 %v1686, %v2198
        %v2455 = vxor.u32 %v1687, %v2199
        %v2456 = vxor.u32 %v1688, %v2200
        %v2457 = vxor.u32 %v1689, %v2201
        %v2458 = vxor.u32 %v1690, %v2202
        %v2459 = vxor.u32 %v1691, %v2203
        %v2460 = vxor.u32 %v1692, %v2204
        %v2461 = vxor.u32 %v1693, %v2205
        %v2462 = vxor.u32 %v1694, %v2206
        %v2463 = vxor.u32 %v1695, %v2207
        %v2464 = vxor.u32 %v1696, %v2208
        %v2465 = vxor.u32 %v1697, %v2209
        %v2466 = vxor.u32 %v1698, %v2210
        %v2467 = vxor.u32 %v1699, %v2211
        %v2468 = vxor.u32 %v1700, %v2212
        %v2469 = vxor.u32 %v1701, %v2213
        %v2470 = vxor.u32 %v1702, %v2214
        %v2471 = vxor.u32 %v1703, %v2215
        %v2472 = vxor.u32 %v1704, %v2216
        %v2473 = vxor.u32 %v1705, %v2217
        %v2474 = vxor.u32 %v1706, %v2218
        %v2475 = vxor.u32 %v1707, %v2219
        %v2476 = vxor.u32 %v1708, %v2220
        %v2477 = vxor.u32 %v1709, %v2221
        %v2478 = vxor.u32 %v1710, %v2222
        %v2479 = vxor.u32 %v1711, %v2223
        %v2480 = vxor.u32 %v1712, %v2224
        %v2481 = vxor.u32 %v1713, %v2225
        %v2482 = vxor.u32 %v1714, %v2226
        %v2483 = vxor.u32 %v1715, %v2227
        %v2484 = vxor.u32 %v1716, %v2228
        %v2485 = vxor.u32 %v1717, %v2229
        %v2486 = vxor.u32 %v1718, %v2230
        %v2487 = vxor.u32 %v1719, %v2231
        %v2488 = vxor.u32 %v1720, %v2232
        %v2489 = vxor.u32 %v1721, %v2233
        %v2490 = vxor.u32 %v1722, %v2234
        %v2491 = vxor.u32 %v1723, %v2235
        %v2492 = vxor.u32 %v1724, %v2236
        %v2493 = vxor.u32 %v1725, %v2237
        %v2494 = vxor.u32 %v1726, %v2238
        %v2495 = vxor.u32 %v1727, %v2239
        %v2496 = vxor.u32 %v1728, %v2240
        %v2497 = vxor.u32 %v1729, %v2241
        %v2498 = vxor.u32 %v1730, %v2242
        %v2499 = vxor.u32 %v1731, %v2243
        %v2500 = vxor.u32 %v1732, %v2244
        %v2501 = vxor.u32 %v1733, %v2245
        %v2502 = vxor.u32 %v1734, %v2246
        %v2503 = vxor.u32 %v1735, %v2247
        %v2504 = vxor.u32 %v1736, %v2248
        %v2505 = vxor.u32 %v1737, %v2249
        %v2506 = vxor.u32 %v1738, %v2250
        %v2507 = vxor.u32 %v1739, %v2251
        %v2508 = vxor.u32 %v1740, %v2252
        %v2509 = vxor.u32 %v1741, %v2253
        %v2510 = vxor.u32 %v1742, %v2254
        %v2511 = vxor.u32 %v1743, %v2255
        %v2512 = vxor.u32 %v1744, %v2256
        %v2513 = vxor.u32 %v1745, %v2257
        %v2514 = vxor.u32 %v1746, %v2258
        %v2515 = vxor.u32 %v1747, %v2259
        %v2516 = vxor.u32 %v1748, %v2260
        %v2517 = vxor.u32 %v1749, %v2261
        %v2518 = vxor.u32 %v1750, %v2262
        %v2519 = vxor.u32 %v1751, %v2263
        %v2520 = vxor.u32 %v1752, %v2264
        %v2521 = vxor.u32 %v1753, %v2265
        %v2522 = vxor.u32 %v1754, %v2266
        %v2523 = vxor.u32 %v1755, %v2267
        %v2524 = vxor.u32 %v1756, %v2268
        %v2525 = vxor.u32 %v1757, %v2269
        %v2526 = vxor.u32 %v1758, %v2270
        %v2527 = vxor.u32 %v1759, %v2271
        %v2528 = vxor.u32 %v1760, %v2272
        %v2529 = vxor.u32 %v1761, %v2273
        %v2530 = vxor.u32 %v1762, %v2274
        %v2531 = vxor.u32 %v1763, %v2275
        %v2532 = vxor.u32 %v1764, %v2276
        %v2533 = vxor.u32 %v1765, %v2277
        %v2534 = vxor.u32 %v1766, %v2278
        %v2535 = vxor.u32 %v1767, %v2279
        %v2536 = vxor.u32 %v1768, %v2280
        %v2537 = vxor.u32 %v1769, %v2281
        %v2538 = vxor.u32 %v1770, %v2282
        %v2539 = vxor.u32 %v1771, %v2283
        %v2540 = vxor.u32 %v1772, %v2284
        %v2541 = vxor.u32 %v1773, %v2285
        %v2542 = vxor.u32 %v1774, %v2286
        %v2543 = vxor.u32 %v1775, %v2287
        %v2544 = vxor.u32 %v1776, %v2288
        %v2545 = vxor.u32 %v1777, %v2289
        %v2546 = vxor.u32 %v1778, %v2290
        %v2547 = vxor.u32 %v1779, %v2291
        %v2548 = vxor.u32 %v1780, %v2292
        %v2549 = vxor.u32 %v1781, %v2293
        %v2550 = vxor.u32 %v1782, %v2294
        %v2551 = vxor.u32 %v1783, %v2295
        %v2552 = vxor.u32 %v1784, %v2296
        %v2553 = vxor.u32 %v1785, %v2297
        %v2554 = vxor.u32 %v1786, %v2298
        %v2555 = vxor.u32 %v1787, %v2299
        %v2556 = vxor.u32 %v1788, %v2300
        %v2557 = vxor.u32 %v1789, %v2301
        %v2558 = vxor.u32 %v1790, %v2302
        %v2559 = vxor.u32 %v1791, %v2303
        %v2560 = vxor.u32 %v1792, %v2304
        %v2561 = vxor.u32 %v1793, %v2305
        %v2562 = vxor.u32 %v1794, %v2306
        %v2563 = vxor.u32 %v1795, %v2307
        %v2564 = vxor.u32 %v1796, %v2308
        %v2565 = vxor.u32 %v1797, %v2309
        %v2566 = vxor.u32 %v1798, %v2310
        %v2567 = vxor.u32 %v1799, %v2311
        %v2568 = vxor.u32 %v1800, %v2312
        %v2569 = vxor.u32 %v1801, %v2313
        %v2570 = vxor.u32 %v1802, %v2314
        %v2571 = vxor.u32 %v1803, %v2315
        %v2572 = vxor.u32 %v1804, %v2316
        %v2573 = vxor.u32 %v1805, %v2317
        %v2574 = vxor.u32 %v1806, %v2318
        %v2575 = vxor.u32 %v1807, %v2319
        %v2576 = vxor.u32 %v1808, %v2320
        %v2577 = vxor.u32 %v1809, %v2321
        %v2578 = vxor.u32 %v1810, %v2322
        %v2579 = vxor.u32 %v1811, %v2323
        %v2580 = vxor.u32 %v1812, %v2324
        %v2581 = vxor.u32 %v1813, %v2325
        %v2582 = vxor.u32 %v1814, %v2326
        %v2583 = vxor.u32 %v1815, %v2327
        %v2584 = vxor.u32 %v1816, %v2328
        %v2585 = vxor.u32 %v1817, %v2329
        %v2586 = vxor.u32 %v1818, %v2330
        %v2587 = vxor.u32 %v1819, %v2331
        %v2588 = vxor.u32 %v1820, %v2332
        %v2589 = vxor.u32 %v1821, %v2333
        %v2590 = vxor.u32 %v1822, %v2334
        %v2591 = vxor.u32 %v1823, %v2335
        %v2592 = vxor.u32 %v1824, %v2336
        %v2593 = vxor.u32 %v1825, %v2337
        %v2594 = vxor.u32 %v1826, %v2338
        %v2595 = vxor.u32 %v1827, %v2339
        %v2596 = vxor.u32 %v1828, %v2340
        %v2597 = vxor.u32 %v1829, %v2341
        %v2598 = vxor.u32 %v1830, %v2342
        %v2599 = vxor.u32 %v1831, %v2343
        %v2600 = vxor.u32 %v1832, %v2344
        %v2601 = vxor.u32 %v1833, %v2345
        %v2602 = vxor.u32 %v1834, %v2346
        %v2603 = vxor.u32 %v1835, %v2347
        %v2604 = vxor.u32 %v1836, %v2348
        %v2605 = vxor.u32 %v1837, %v2349
        %v2606 = vxor.u32 %v1838, %v2350
        %v2607 = vxor.u32 %v1839, %v2351
        %v2608 = vxor.u32 %v1840, %v2352
        %v2609 = vxor.u32 %v1841, %v2353
        %v2610 = vxor.u32 %v1842, %v2354
        %v2611 = vxor.u32 %v1843, %v2355
        %v2612 = vxor.u32 %v1844, %v2356
        %v2613 = vxor.u32 %v1845, %v2357
        %v2614 = vxor.u32 %v1846, %v2358
        %v2615 = vxor.u32 %v1847, %v2359
        %v2616 = vxor.u32 %v1848, %v2360
        %v2617 = vxor.u32 %v1849, %v2361
        %v2618 = vxor.u32 %v1850, %v2362
        %v2619 = vxor.u32 %v1851, %v2363
        %v2620 = vxor.u32 %v1852, %v2364
        %v2621 = vxor.u32 %v1853, %v2365
        %v2622 = vxor.u32 %v1854, %v2366
        %v2623 = vxor.u32 %v1855, %v2367
        %v2624 = vxor.u32 %v1856, %v2368
        %v2625 = vxor.u32 %v1857, %v2369
        %v2626 = vxor.u32 %v1858, %v2370
        %v2627 = vxor.u32 %v1859, %v2371
        %v2628 = vxor.u32 %v1860, %v2372
        %v2629 = vxor.u32 %v1861, %v2373
        %v2630 = vxor.u32 %v1862, %v2374
        %v2631 = vxor.u32 %v1863, %v2375
        %v2632 = vxor.u32 %v1864, %v2376
        %v2633 = vxor.u32 %v1865, %v2377
        %v2634 = vxor.u32 %v1866, %v2378
        %v2635 = vxor.u32 %v1867, %v2379
        %v2636 = vxor.u32 %v1868, %v2380
        %v2637 = vxor.u32 %v1869, %v2381
        %v2638 = vxor.u32 %v1870, %v2382
        %v2639 = vxor.u32 %v1871, %v2383
        %v2640 = vxor.u32 %v1872, %v2384
        %v2641 = vxor.u32 %v1873, %v2385
        %v2642 = vxor.u32 %v1874, %v2386
        %v2643 = vxor.u32 %v1875, %v2387
        %v2644 = vxor.u32 %v1876, %v2388
        %v2645 = vxor.u32 %v1877, %v2389
        %v2646 = vxor.u32 %v1878, %v2390
        %v2647 = vxor.u32 %v1879, %v2391
        %v2648 = vxor.u32 %v1880, %v2392
        %v2649 = vxor.u32 %v1881, %v2393
        %v2650 = vxor.u32 %v1882, %v2394
        %v2651 = vxor.u32 %v1883, %v2395
        %v2652 = vxor.u32 %v1884, %v2396
        %v2653 = vxor.u32 %v1885, %v2397
        %v2654 = vxor.u32 %v1886, %v2398
        %v2655 = vxor.u32 %v1887, %v2399
        %v2656 = vmul.u32 %v2400, 2221713035
        %v2657 = vmul.u32 %v2401, 2221713035
        %v2658 = vmul.u32 %v2402, 2221713035
        %v2659 = vmul.u32 %v2403, 2221713035
        %v2660 = vmul.u32 %v2404, 2221713035
        %v2661 = vmul.u32 %v2405, 2221713035
        %v2662 = vmul.u32 %v2406, 2221713035
        %v2663 = vmul.u32 %v2407, 2221713035
        %v2664 = vmul.u32 %v2408, 2221713035
        %v2665 = vmul.u32 %v2409, 2221713035
        %v2666 = vmul.u32 %v2410, 2221713035
        %v2667 = vmul.u32 %v2411, 2221713035
        %v2668 = vmul.u32 %v2412, 2221713035
        %v2669 = vmul.u32 %v2413, 2221713035
        %v2670 = vmul.u32 %v2414, 2221713035
        %v2671 = vmul.u32 %v2415, 2221713035
        %v2672 = vmul.u32 %v2416, 2221713035
        %v2673 = vmul.u32 %v2417, 2221713035
        %v2674 = vmul.u32 %v2418, 2221713035
        %v2675 = vmul.u32 %v2419, 2221713035
        %v2676 = vmul.u32 %v2420, 2221713035
        %v2677 = vmul.u32 %v2421, 2221713035
        %v2678 = vmul.u32 %v2422, 2221713035
        %v2679 = vmul.u32 %v2423, 2221713035
        %v2680 = vmul.u32 %v2424, 2221713035
        %v2681 = vmul.u32 %v2425, 2221713035
        %v2682 = vmul.u32 %v2426, 2221713035
        %v2683 = vmul.u32 %v2427, 2221713035
        %v2684 = vmul.u32 %v2428, 2221713035
        %v2685 = vmul.u32 %v2429, 2221713035
        %v2686 = vmul.u32 %v2430, 2221713035
        %v2687 = vmul.u32 %v2431, 2221713035
        %v2688 = vmul.u32 %v2432, 2221713035
        %v2689 = vmul.u32 %v2433, 2221713035
        %v2690 = vmul.u32 %v2434, 2221713035
        %v2691 = vmul.u32 %v2435, 2221713035
        %v2692 = vmul.u32 %v2436, 2221713035
        %v2693 = vmul.u32 %v2437, 2221713035
        %v2694 = vmul.u32 %v2438, 2221713035
        %v2695 = vmul.u32 %v2439, 2221713035
        %v2696 = vmul.u32 %v2440, 2221713035
        %v2697 = vmul.u32 %v2441, 2221713035
        %v2698 = vmul.u32 %v2442, 2221713035
        %v2699 = vmul.u32 %v2443, 2221713035
        %v2700 = vmul.u32 %v2444, 2221713035
        %v2701 = vmul.u32 %v2445, 2221713035
        %v2702 = vmul.u32 %v2446, 2221713035
        %v2703 = vmul.u32 %v2447, 2221713035
        %v2704 = vmul.u32 %v2448, 2221713035
        %v2705 = vmul.u32 %v2449, 2221713035
        %v2706 = vmul.u32 %v2450, 2221713035
        %v2707 = vmul.u32 %v2451, 2221713035
        %v2708 = vmul.u32 %v2452, 2221713035
        %v2709 = vmul.u32 %v2453, 2221713035
        %v2710 = vmul.u32 %v2454, 2221713035
        %v2711 = vmul.u32 %v2455, 2221713035
        %v2712 = vmul.u32 %v2456, 2221713035
        %v2713 = vmul.u32 %v2457, 2221713035
        %v2714 = vmul.u32 %v2458, 2221713035
        %v2715 = vmul.u32 %v2459, 2221713035
        %v2716 = vmul.u32 %v2460, 2221713035
        %v2717 = vmul.u32 %v2461, 2221713035
        %v2718 = vmul.u32 %v2462, 2221713035
        %v2719 = vmul.u32 %v2463, 2221713035
        %v2720 = vmul.u32 %v2464, 2221713035
        %v2721 = vmul.u32 %v2465, 2221713035
        %v2722 = vmul.u32 %v2466, 2221713035
        %v2723 = vmul.u32 %v2467, 2221713035
        %v2724 = vmul.u32 %v2468, 2221713035
        %v2725 = vmul.u32 %v2469, 2221713035
        %v2726 = vmul.u32 %v2470, 2221713035
        %v2727 = vmul.u32 %v2471, 2221713035
        %v2728 = vmul.u32 %v2472, 2221713035
        %v2729 = vmul.u32 %v2473, 2221713035
        %v2730 = vmul.u32 %v2474, 2221713035
        %v2731 = vmul.u32 %v2475, 2221713035
        %v2732 = vmul.u32 %v2476, 2221713035
        %v2733 = vmul.u32 %v2477, 2221713035
        %v2734 = vmul.u32 %v2478, 2221713035
        %v2735 = vmul.u32 %v2479, 2221713035
        %v2736 = vmul.u32 %v2480, 2221713035
        %v2737 = vmul.u32 %v2481, 2221713035
        %v2738 = vmul.u32 %v2482, 2221713035
        %v2739 = vmul.u32 %v2483, 2221713035
        %v2740 = vmul.u32 %v2484, 2221713035
        %v2741 = vmul.u32 %v2485, 2221713035
        %v2742 = vmul.u32 %v2486, 2221713035
        %v2743 = vmul.u32 %v2487, 2221713035
        %v2744 = vmul.u32 %v2488, 2221713035
        %v2745 = vmul.u32 %v2489, 2221713035
        %v2746 = vmul.u32 %v2490, 2221713035
        %v2747 = vmul.u32 %v2491, 2221713035
        %v2748 = vmul.u32 %v2492, 2221713035
        %v2749 = vmul.u32 %v2493, 2221713035
        %v2750 = vmul.u32 %v2494, 2221713035
        %v2751 = vmul.u32 %v2495, 2221713035
        %v2752 = vmul.u32 %v2496, 2221713035
        %v2753 = vmul.u32 %v2497, 2221713035
        %v2754 = vmul.u32 %v2498, 2221713035
        %v2755 = vmul.u32 %v2499, 2221713035
        %v2756 = vmul.u32 %v2500, 2221713035
        %v2757 = vmul.u32 %v2501, 2221713035
        %v2758 = vmul.u32 %v2502, 2221713035
        %v2759 = vmul.u32 %v2503, 2221713035
        %v2760 = vmul.u32 %v2504, 2221713035
        %v2761 = vmul.u32 %v2505, 2221713035
        %v2762 = vmul.u32 %v2506, 2221713035
        %v2763 = vmul.u32 %v2507, 2221713035
        %v2764 = vmul.u32 %v2508, 2221713035
        %v2765 = vmul.u32 %v2509, 2221713035
        %v2766 = vmul.u32 %v2510, 2221713035
        %v2767 = vmul.u32 %v2511, 2221713035
        %v2768 = vmul.u32 %v2512, 2221713035
        %v2769 = vmul.u32 %v2513, 2221713035
        %v2770 = vmul.u32 %v2514, 2221713035
        %v2771 = vmul.u32 %v2515, 2221713035
        %v2772 = vmul.u32 %v2516, 2221713035
        %v2773 = vmul.u32 %v2517, 2221713035
        %v2774 = vmul.u32 %v2518, 2221713035
        %v2775 = vmul.u32 %v2519, 2221713035
        %v2776 = vmul.u32 %v2520, 2221713035
        %v2777 = vmul.u32 %v2521, 2221713035
        %v2778 = vmul.u32 %v2522, 2221713035
        %v2779 = vmul.u32 %v2523, 2221713035
        %v2780 = vmul.u32 %v2524, 2221713035
        %v2781 = vmul.u32 %v2525, 2221713035
        %v2782 = vmul.u32 %v2526, 2221713035
        %v2783 = vmul.u32 %v2527, 2221713035
        %v2784 = vmul.u32 %v2528, 2221713035
        %v2785 = vmul.u32 %v2529, 2221713035
        %v2786 = vmul.u32 %v2530, 2221713035
        %v2787 = vmul.u32 %v2531, 2221713035
        %v2788 = vmul.u32 %v2532, 2221713035
        %v2789 = vmul.u32 %v2533, 2221713035
        %v2790 = vmul.u32 %v2534, 2221713035
        %v2791 = vmul.u32 %v2535, 2221713035
        %v2792 = vmul.u32 %v2536, 2221713035
        %v2793 = vmul.u32 %v2537, 2221713035
        %v2794 = vmul.u32 %v2538, 2221713035
        %v2795 = vmul.u32 %v2539, 2221713035
        %v2796 = vmul.u32 %v2540, 2221713035
        %v2797 = vmul.u32 %v2541, 2221713035
        %v2798 = vmul.u32 %v2542, 2221713035
        %v2799 = vmul.u32 %v2543, 2221713035
        %v2800 = vmul.u32 %v2544, 2221713035
        %v2801 = vmul.u32 %v2545, 2221713035
        %v2802 = vmul.u32 %v2546, 2221713035
        %v2803 = vmul.u32 %v2547, 2221713035
        %v2804 = vmul.u32 %v2548, 2221713035
        %v2805 = vmul.u32 %v2549, 2221713035
        %v2806 = vmul.u32 %v2550, 2221713035
        %v2807 = vmul.u32 %v2551, 2221713035
        %v2808 = vmul.u32 %v2552, 2221713035
        %v2809 = vmul.u32 %v2553, 2221713035
        %v2810 = vmul.u32 %v2554, 2221713035
        %v2811 = vmul.u32 %v2555, 2221713035
        %v2812 = vmul.u32 %v2556, 2221713035
        %v2813 = vmul.u32 %v2557, 2221713035
        %v2814 = vmul.u32 %v2558, 2221713035
        %v2815 = vmul.u32 %v2559, 2221713035
        %v2816 = vmul.u32 %v2560, 2221713035
        %v2817 = vmul.u32 %v2561, 2221713035
        %v2818 = vmul.u32 %v2562, 2221713035
        %v2819 = vmul.u32 %v2563, 2221713035
        %v2820 = vmul.u32 %v2564, 2221713035
        %v2821 = vmul.u32 %v2565, 2221713035
        %v2822 = vmul.u32 %v2566, 2221713035
        %v2823 = vmul.u32 %v2567, 2221713035
        %v2824 = vmul.u32 %v2568, 2221713035
        %v2825 = vmul.u32 %v2569, 2221713035
        %v2826 = vmul.u32 %v2570, 2221713035
        %v2827 = vmul.u32 %v2571, 2221713035
        %v2828 = vmul.u32 %v2572, 2221713035
        %v2829 = vmul.u32 %v2573, 2221713035
        %v2830 = vmul.u32 %v2574, 2221713035
        %v2831 = vmul.u32 %v2575, 2221713035
        %v2832 = vmul.u32 %v2576, 2221713035
        %v2833 = vmul.u32 %v2577, 2221713035
        %v2834 = vmul.u32 %v2578, 2221713035
        %v2835 = vmul.u32 %v2579, 2221713035
        %v2836 = vmul.u32 %v2580, 2221713035
        %v2837 = vmul.u32 %v2581, 2221713035
        %v2838 = vmul.u32 %v2582, 2221713035
        %v2839 = vmul.u32 %v2583, 2221713035
        %v2840 = vmul.u32 %v2584, 2221713035
        %v2841 = vmul.u32 %v2585, 2221713035
        %v2842 = vmul.u32 %v2586, 2221713035
        %v2843 = vmul.u32 %v2587, 2221713035
        %v2844 = vmul.u32 %v2588, 2221713035
        %v2845 = vmul.u32 %v2589, 2221713035
        %v2846 = vmul.u32 %v2590, 2221713035
        %v2847 = vmul.u32 %v2591, 2221713035
        %v2848 = vmul.u32 %v2592, 2221713035
        %v2849 = vmul.u32 %v2593, 2221713035
        %v2850 = vmul.u32 %v2594, 2221713035
        %v2851 = vmul.u32 %v2595, 2221713035
        %v2852 = vmul.u32 %v2596, 2221713035
        %v2853 = vmul.u32 %v2597, 2221713035
        %v2854 = vmul.u32 %v2598, 2221713035
        %v2855 = vmul.u32 %v2599, 2221713035
        %v2856 = vmul.u32 %v2600, 2221713035
        %v2857 = vmul.u32 %v2601, 2221713035
        %v2858 = vmul.u32 %v2602, 2221713035
        %v2859 = vmul.u32 %v2603, 2221713035
        %v2860 = vmul.u32 %v2604, 2221713035
        %v2861 = vmul.u32 %v2605, 2221713035
        %v2862 = vmul.u32 %v2606, 2221713035
        %v2863 = vmul.u32 %v2607, 2221713035
        %v2864 = vmul.u32 %v2608, 2221713035
        %v2865 = vmul.u32 %v2609, 2221713035
        %v2866 = vmul.u32 %v2610, 2221713035
        %v2867 = vmul.u32 %v2611, 2221713035
        %v2868 = vmul.u32 %v2612, 2221713035
        %v2869 = vmul.u32 %v2613, 2221713035
        %v2870 = vmul.u32 %v2614, 2221713035
        %v2871 = vmul.u32 %v2615, 2221713035
        %v2872 = vmul.u32 %v2616, 2221713035
        %v2873 = vmul.u32 %v2617, 2221713035
        %v2874 = vmul.u32 %v2618, 2221713035
        %v2875 = vmul.u32 %v2619, 2221713035
        %v2876 = vmul.u32 %v2620, 2221713035
        %v2877 = vmul.u32 %v2621, 2221713035
        %v2878 = vmul.u32 %v2622, 2221713035
        %v2879 = vmul.u32 %v2623, 2221713035
        %v2880 = vmul.u32 %v2624, 2221713035
        %v2881 = vmul.u32 %v2625, 2221713035
        %v2882 = vmul.u32 %v2626, 2221713035
        %v2883 = vmul.u32 %v2627, 2221713035
        %v2884 = vmul.u32 %v2628, 2221713035
        %v2885 = vmul.u32 %v2629, 2221713035
        %v2886 = vmul.u32 %v2630, 2221713035
        %v2887 = vmul.u32 %v2631, 2221713035
        %v2888 = vmul.u32 %v2632, 2221713035
        %v2889 = vmul.u32 %v2633, 2221713035
        %v2890 = vmul.u32 %v2634, 2221713035
        %v2891 = vmul.u32 %v2635, 2221713035
        %v2892 = vmul.u32 %v2636, 2221713035
        %v2893 = vmul.u32 %v2637, 2221713035
        %v2894 = vmul.u32 %v2638, 2221713035
        %v2895 = vmul.u32 %v2639, 2221713035
        %v2896 = vmul.u32 %v2640, 2221713035
        %v2897 = vmul.u32 %v2641, 2221713035
        %v2898 = vmul.u32 %v2642, 2221713035
        %v2899 = vmul.u32 %v2643, 2221713035
        %v2900 = vmul.u32 %v2644, 2221713035
        %v2901 = vmul.u32 %v2645, 2221713035
        %v2902 = vmul.u32 %v2646, 2221713035
        %v2903 = vmul.u32 %v2647, 2221713035
        %v2904 = vmul.u32 %v2648, 2221713035
        %v2905 = vmul.u32 %v2649, 2221713035
        %v2906 = vmul.u32 %v2650, 2221713035
        %v2907 = vmul.u32 %v2651, 2221713035
        %v2908 = vmul.u32 %v2652, 2221713035
        %v2909 = vmul.u32 %v2653, 2221713035
        %v2910 = vmul.u32 %v2654, 2221713035
        %v2911 = vmul.u32 %v2655, 2221713035
        %v2912 = vshra.s32 %v2656, 16
        %v2913 = vshra.s32 %v2657, 16
        %v2914 = vshra.s32 %v2658, 16
        %v2915 = vshra.s32 %v2659, 16
        %v2916 = vshra.s32 %v2660, 16
        %v2917 = vshra.s32 %v2661, 16
        %v2918 = vshra.s32 %v2662, 16
        %v2919 = vshra.s32 %v2663, 16
        %v2920 = vshra.s32 %v2664, 16
        %v2921 = vshra.s32 %v2665, 16
        %v2922 = vshra.s32 %v2666, 16
        %v2923 = vshra.s32 %v2667, 16
        %v2924 = vshra.s32 %v2668, 16
        %v2925 = vshra.s32 %v2669, 16
        %v2926 = vshra.s32 %v2670, 16
        %v2927 = vshra.s32 %v2671, 16
        %v2928 = vshra.s32 %v2672, 16
        %v2929 = vshra.s32 %v2673, 16
        %v2930 = vshra.s32 %v2674, 16
        %v2931 = vshra.s32 %v2675, 16
        %v2932 = vshra.s32 %v2676, 16
        %v2933 = vshra.s32 %v2677, 16
        %v2934 = vshra.s32 %v2678, 16
        %v2935 = vshra.s32 %v2679, 16
        %v2936 = vshra.s32 %v2680, 16
        %v2937 = vshra.s32 %v2681, 16
        %v2938 = vshra.s32 %v2682, 16
        %v2939 = vshra.s32 %v2683, 16
        %v2940 = vshra.s32 %v2684, 16
        %v2941 = vshra.s32 %v2685, 16
        %v2942 = vshra.s32 %v2686, 16
        %v2943 = vshra.s32 %v2687, 16
        %v2944 = vshra.s32 %v2688, 16
        %v2945 = vshra.s32 %v2689, 16
        %v2946 = vshra.s32 %v2690, 16
        %v2947 = vshra.s32 %v2691, 16
        %v2948 = vshra.s32 %v2692, 16
        %v2949 = vshra.s32 %v2693, 16
        %v2950 = vshra.s32 %v2694, 16
        %v2951 = vshra.s32 %v2695, 16
        %v2952 = vshra.s32 %v2696, 16
        %v2953 = vshra.s32 %v2697, 16
        %v2954 = vshra.s32 %v2698, 16
        %v2955 = vshra.s32 %v2699, 16
        %v2956 = vshra.s32 %v2700, 16
        %v2957 = vshra.s32 %v2701, 16
        %v2958 = vshra.s32 %v2702, 16
        %v2959 = vshra.s32 %v2703, 16
        %v2960 = vshra.s32 %v2704, 16
        %v2961 = vshra.s32 %v2705, 16
        %v2962 = vshra.s32 %v2706, 16
        %v2963 = vshra.s32 %v2707, 16
        %v2964 = vshra.s32 %v2708, 16
        %v2965 = vshra.s32 %v2709, 16
        %v2966 = vshra.s32 %v2710, 16
        %v2967 = vshra.s32 %v2711, 16
        %v2968 = vshra.s32 %v2712, 16
        %v2969 = vshra.s32 %v2713, 16
        %v2970 = vshra.s32 %v2714, 16
        %v2971 = vshra.s32 %v2715, 16
        %v2972 = vshra.s32 %v2716, 16
        %v2973 = vshra.s32 %v2717, 16
        %v2974 = vshra.s32 %v2718, 16
        %v2975 = vshra.s32 %v2719, 16
        %v2976 = vshra.s32 %v2720, 16
        %v2977 = vshra.s32 %v2721, 16
        %v2978 = vshra.s32 %v2722, 16
        %v2979 = vshra.s32 %v2723, 16
        %v2980 = vshra.s32 %v2724, 16
        %v2981 = vshra.s32 %v2725, 16
        %v2982 = vshra.s32 %v2726, 16
        %v2983 = vshra.s32 %v2727, 16
        %v2984 = vshra.s32 %v2728, 16
        %v2985 = vshra.s32 %v2729, 16
        %v2986 = vshra.s32 %v2730, 16
        %v2987 = vshra.s32 %v2731, 16
        %v2988 = vshra.s32 %v2732, 16
        %v2989 = vshra.s32 %v2733, 16
        %v2990 = vshra.s32 %v2734, 16
        %v2991 = vshra.s32 %v2735, 16
        %v2992 = vshra.s32 %v2736, 16
        %v2993 = vshra.s32 %v2737, 16
        %v2994 = vshra.s32 %v2738, 16
        %v2995 = vshra.s32 %v2739, 16
        %v2996 = vshra.s32 %v2740, 16
        %v2997 = vshra.s32 %v2741, 16
        %v2998 = vshra.s32 %v2742, 16
        %v2999 = vshra.s32 %v2743, 16
        %v3000 = vshra.s32 %v2744, 16
        %v3001 = vshra.s32 %v2745, 16
        %v3002 = vshra.s32 %v2746, 16
        %v3003 = vshra.s32 %v2747, 16
        %v3004 = vshra.s32 %v2748, 16
        %v3005 = vshra.s32 %v2749, 16
        %v3006 = vshra.s32 %v2750, 16
        %v3007 = vshra.s32 %v2751, 16
        %v3008 = vshra.s32 %v2752, 16
        %v3009 = vshra.s32 %v2753, 16
        %v3010 = vshra.s32 %v2754, 16
        %v3011 = vshra.s32 %v2755, 16
        %v3012 = vshra.s32 %v2756, 16
        %v3013 = vshra.s32 %v2757, 16
        %v3014 = vshra.s32 %v2758, 16
        %v3015 = vshra.s32 %v2759, 16
        %v3016 = vshra.s32 %v2760, 16
        %v3017 = vshra.s32 %v2761, 16
        %v3018 = vshra.s32 %v2762, 16
        %v3019 = vshra.s32 %v2763, 16
        %v3020 = vshra.s32 %v2764, 16
        %v3021 = vshra.s32 %v2765, 16
        %v3022 = vshra.s32 %v2766, 16
        %v3023 = vshra.s32 %v2767, 16
        %v3024 = vshra.s32 %v2768, 16
        %v3025 = vshra.s32 %v2769, 16
        %v3026 = vshra.s32 %v2770, 16
        %v3027 = vshra.s32 %v2771, 16
        %v3028 = vshra.s32 %v2772, 16
        %v3029 = vshra.s32 %v2773, 16
        %v3030 = vshra.s32 %v2774, 16
        %v3031 = vshra.s32 %v2775, 16
        %v3032 = vshra.s32 %v2776, 16
        %v3033 = vshra.s32 %v2777, 16
        %v3034 = vshra.s32 %v2778, 16
        %v3035 = vshra.s32 %v2779, 16
        %v3036 = vshra.s32 %v2780, 16
        %v3037 = vshra.s32 %v2781, 16
        %v3038 = vshra.s32 %v2782, 16
        %v3039 = vshra.s32 %v2783, 16
        %v3040 = vshra.s32 %v2784, 16
        %v3041 = vshra.s32 %v2785, 16
        %v3042 = vshra.s32 %v2786, 16
        %v3043 = vshra.s32 %v2787, 16
        %v3044 = vshra.s32 %v2788, 16
        %v3045 = vshra.s32 %v2789, 16
        %v3046 = vshra.s32 %v2790, 16
        %v3047 = vshra.s32 %v2791, 16
        %v3048 = vshra.s32 %v2792, 16
        %v3049 = vshra.s32 %v2793, 16
        %v3050 = vshra.s32 %v2794, 16
        %v3051 = vshra.s32 %v2795, 16
        %v3052 = vshra.s32 %v2796, 16
        %v3053 = vshra.s32 %v2797, 16
        %v3054 = vshra.s32 %v2798, 16
        %v3055 = vshra.s32 %v2799, 16
        %v3056 = vshra.s32 %v2800, 16
        %v3057 = vshra.s32 %v2801, 16
        %v3058 = vshra.s32 %v2802, 16
        %v3059 = vshra.s32 %v2803, 16
        %v3060 = vshra.s32 %v2804, 16
        %v3061 = vshra.s32 %v2805, 16
        %v3062 = vshra.s32 %v2806, 16
        %v3063 = vshra.s32 %v2807, 16
        %v3064 = vshra.s32 %v2808, 16
        %v3065 = vshra.s32 %v2809, 16
        %v3066 = vshra.s32 %v2810, 16
        %v3067 = vshra.s32 %v2811, 16
        %v3068 = vshra.s32 %v2812, 16
        %v3069 = vshra.s32 %v2813, 16
        %v3070 = vshra.s32 %v2814, 16
        %v3071 = vshra.s32 %v2815, 16
        %v3072 = vshra.s32 %v2816, 16
        %v3073 = vshra.s32 %v2817, 16
        %v3074 = vshra.s32 %v2818, 16
        %v3075 = vshra.s32 %v2819, 16
        %v3076 = vshra.s32 %v2820, 16
        %v3077 = vshra.s32 %v2821, 16
        %v3078 = vshra.s32 %v2822, 16
        %v3079 = vshra.s32 %v2823, 16
        %v3080 = vshra.s32 %v2824, 16
        %v3081 = vshra.s32 %v2825, 16
        %v3082 = vshra.s32 %v2826, 16
        %v3083 = vshra.s32 %v2827, 16
        %v3084 = vshra.s32 %v2828, 16
        %v3085 = vshra.s32 %v2829, 16
        %v3086 = vshra.s32 %v2830, 16
        %v3087 = vshra.s32 %v2831, 16
        %v3088 = vshra.s32 %v2832, 16
        %v3089 = vshra.s32 %v2833, 16
        %v3090 = vshra.s32 %v2834, 16
        %v3091 = vshra.s32 %v2835, 16
        %v3092 = vshra.s32 %v2836, 16
        %v3093 = vshra.s32 %v2837, 16
        %v3094 = vshra.s32 %v2838, 16
        %v3095 = vshra.s32 %v2839, 16
        %v3096 = vshra.s32 %v2840, 16
        %v3097 = vshra.s32 %v2841, 16
        %v3098 = vshra.s32 %v2842, 16
        %v3099 = vshra.s32 %v2843, 16
        %v3100 = vshra.s32 %v2844, 16
        %v3101 = vshra.s32 %v2845, 16
        %v3102 = vshra.s32 %v2846, 16
        %v3103 = vshra.s32 %v2847, 16
        %v3104 = vshra.s32 %v2848, 16
        %v3105 = vshra.s32 %v2849, 16
        %v3106 = vshra.s32 %v2850, 16
        %v3107 = vshra.s32 %v2851, 16
        %v3108 = vshra.s32 %v2852, 16
        %v3109 = vshra.s32 %v2853, 16
        %v3110 = vshra.s32 %v2854, 16
        %v3111 = vshra.s32 %v2855, 16
        %v3112 = vshra.s32 %v2856, 16
        %v3113 = vshra.s32 %v2857, 16
        %v3114 = vshra.s32 %v2858, 16
        %v3115 = vshra.s32 %v2859, 16
        %v3116 = vshra.s32 %v2860, 16
        %v3117 = vshra.s32 %v2861, 16
        %v3118 = vshra.s32 %v2862, 16
        %v3119 = vshra.s32 %v2863, 16
        %v3120 = vshra.s32 %v2864, 16
        %v3121 = vshra.s32 %v2865, 16
        %v3122 = vshra.s32 %v2866, 16
        %v3123 = vshra.s32 %v2867, 16
        %v3124 = vshra.s32 %v2868, 16
        %v3125 = vshra.s32 %v2869, 16
        %v3126 = vshra.s32 %v2870, 16
        %v3127 = vshra.s32 %v2871, 16
        %v3128 = vshra.s32 %v2872, 16
        %v3129 = vshra.s32 %v2873, 16
        %v3130 = vshra.s32 %v2874, 16
        %v3131 = vshra.s32 %v2875, 16
        %v3132 = vshra.s32 %v2876, 16
        %v3133 = vshra.s32 %v2877, 16
        %v3134 = vshra.s32 %v2878, 16
        %v3135 = vshra.s32 %v2879, 16
        %v3136 = vshra.s32 %v2880, 16
        %v3137 = vshra.s32 %v2881, 16
        %v3138 = vshra.s32 %v2882, 16
        %v3139 = vshra.s32 %v2883, 16
        %v3140 = vshra.s32 %v2884, 16
        %v3141 = vshra.s32 %v2885, 16
        %v3142 = vshra.s32 %v2886, 16
        %v3143 = vshra.s32 %v2887, 16
        %v3144 = vshra.s32 %v2888, 16
        %v3145 = vshra.s32 %v2889, 16
        %v3146 = vshra.s32 %v2890, 16
        %v3147 = vshra.s32 %v2891, 16
        %v3148 = vshra.s32 %v2892, 16
        %v3149 = vshra.s32 %v2893, 16
        %v3150 = vshra.s32 %v2894, 16
        %v3151 = vshra.s32 %v2895, 16
        %v3152 = vshra.s32 %v2896, 16
        %v3153 = vshra.s32 %v2897, 16
        %v3154 = vshra.s32 %v2898, 16
        %v3155 = vshra.s32 %v2899, 16
        %v3156 = vshra.s32 %v2900, 16
        %v3157 = vshra.s32 %v2901, 16
        %v3158 = vshra.s32 %v2902, 16
        %v3159 = vshra.s32 %v2903, 16
        %v3160 = vshra.s32 %v2904, 16
        %v3161 = vshra.s32 %v2905, 16
        %v3162 = vshra.s32 %v2906, 16
        %v3163 = vshra.s32 %v2907, 16
        %v3164 = vshra.s32 %v2908, 16
        %v3165 = vshra.s32 %v2909, 16
        %v3166 = vshra.s32 %v2910, 16
        %v3167 = vshra.s32 %v2911, 16
        %v3168 = vand.u32 %v2912, 65535
        %v3169 = vand.u32 %v2913, 65535
        %v3170 = vand.u32 %v2914, 65535
        %v3171 = vand.u32 %v2915, 65535
        %v3172 = vand.u32 %v2916, 65535
        %v3173 = vand.u32 %v2917, 65535
        %v3174 = vand.u32 %v2918, 65535
        %v3175 = vand.u32 %v2919, 65535
        %v3176 = vand.u32 %v2920, 65535
        %v3177 = vand.u32 %v2921, 65535
        %v3178 = vand.u32 %v2922, 65535
        %v3179 = vand.u32 %v2923, 65535
        %v3180 = vand.u32 %v2924, 65535
        %v3181 = vand.u32 %v2925, 65535
        %v3182 = vand.u32 %v2926, 65535
        %v3183 = vand.u32 %v2927, 65535
        %v3184 = vand.u32 %v2928, 65535
        %v3185 = vand.u32 %v2929, 65535
        %v3186 = vand.u32 %v2930, 65535
        %v3187 = vand.u32 %v2931, 65535
        %v3188 = vand.u32 %v2932, 65535
        %v3189 = vand.u32 %v2933, 65535
        %v3190 = vand.u32 %v2934, 65535
        %v3191 = vand.u32 %v2935, 65535
        %v3192 = vand.u32 %v2936, 65535
        %v3193 = vand.u32 %v2937, 65535
        %v3194 = vand.u32 %v2938, 65535
        %v3195 = vand.u32 %v2939, 65535
        %v3196 = vand.u32 %v2940, 65535
        %v3197 = vand.u32 %v2941, 65535
        %v3198 = vand.u32 %v2942, 65535
        %v3199 = vand.u32 %v2943, 65535
        %v3200 = vand.u32 %v2944, 65535
        %v3201 = vand.u32 %v2945, 65535
        %v3202 = vand.u32 %v2946, 65535
        %v3203 = vand.u32 %v2947, 65535
        %v3204 = vand.u32 %v2948, 65535
        %v3205 = vand.u32 %v2949, 65535
        %v3206 = vand.u32 %v2950, 65535
        %v3207 = vand.u32 %v2951, 65535
        %v3208 = vand.u32 %v2952, 65535
        %v3209 = vand.u32 %v2953, 65535
        %v3210 = vand.u32 %v2954, 65535
        %v3211 = vand.u32 %v2955, 65535
        %v3212 = vand.u32 %v2956, 65535
        %v3213 = vand.u32 %v2957, 65535
        %v3214 = vand.u32 %v2958, 65535
        %v3215 = vand.u32 %v2959, 65535
        %v3216 = vand.u32 %v2960, 65535
        %v3217 = vand.u32 %v2961, 65535
        %v3218 = vand.u32 %v2962, 65535
        %v3219 = vand.u32 %v2963, 65535
        %v3220 = vand.u32 %v2964, 65535
        %v3221 = vand.u32 %v2965, 65535
        %v3222 = vand.u32 %v2966, 65535
        %v3223 = vand.u32 %v2967, 65535
        %v3224 = vand.u32 %v2968, 65535
        %v3225 = vand.u32 %v2969, 65535
        %v3226 = vand.u32 %v2970, 65535
        %v3227 = vand.u32 %v2971, 65535
        %v3228 = vand.u32 %v2972, 65535
        %v3229 = vand.u32 %v2973, 65535
        %v3230 = vand.u32 %v2974, 65535
        %v3231 = vand.u32 %v2975, 65535
        %v3232 = vand.u32 %v2976, 65535
        %v3233 = vand.u32 %v2977, 65535
        %v3234 = vand.u32 %v2978, 65535
        %v3235 = vand.u32 %v2979, 65535
        %v3236 = vand.u32 %v2980, 65535
        %v3237 = vand.u32 %v2981, 65535
        %v3238 = vand.u32 %v2982, 65535
        %v3239 = vand.u32 %v2983, 65535
        %v3240 = vand.u32 %v2984, 65535
        %v3241 = vand.u32 %v2985, 65535
        %v3242 = vand.u32 %v2986, 65535
        %v3243 = vand.u32 %v2987, 65535
        %v3244 = vand.u32 %v2988, 65535
        %v3245 = vand.u32 %v2989, 65535
        %v3246 = vand.u32 %v2990, 65535
        %v3247 = vand.u32 %v2991, 65535
        %v3248 = vand.u32 %v2992, 65535
        %v3249 = vand.u32 %v2993, 65535
        %v3250 = vand.u32 %v2994, 65535
        %v3251 = vand.u32 %v2995, 65535
        %v3252 = vand.u32 %v2996, 65535
        %v3253 = vand.u32 %v2997, 65535
        %v3254 = vand.u32 %v2998, 65535
        %v3255 = vand.u32 %v2999, 65535
        %v3256 = vand.u32 %v3000, 65535
        %v3257 = vand.u32 %v3001, 65535
        %v3258 = vand.u32 %v3002, 65535
        %v3259 = vand.u32 %v3003, 65535
        %v3260 = vand.u32 %v3004, 65535
        %v3261 = vand.u32 %v3005, 65535
        %v3262 = vand.u32 %v3006, 65535
        %v3263 = vand.u32 %v3007, 65535
        %v3264 = vand.u32 %v3008, 65535
        %v3265 = vand.u32 %v3009, 65535
        %v3266 = vand.u32 %v3010, 65535
        %v3267 = vand.u32 %v3011, 65535
        %v3268 = vand.u32 %v3012, 65535
        %v3269 = vand.u32 %v3013, 65535
        %v3270 = vand.u32 %v3014, 65535
        %v3271 = vand.u32 %v3015, 65535
        %v3272 = vand.u32 %v3016, 65535
        %v3273 = vand.u32 %v3017, 65535
        %v3274 = vand.u32 %v3018, 65535
        %v3275 = vand.u32 %v3019, 65535
        %v3276 = vand.u32 %v3020, 65535
        %v3277 = vand.u32 %v3021, 65535
        %v3278 = vand.u32 %v3022, 65535
        %v3279 = vand.u32 %v3023, 65535
        %v3280 = vand.u32 %v3024, 65535
        %v3281 = vand.u32 %v3025, 65535
        %v3282 = vand.u32 %v3026, 65535
        %v3283 = vand.u32 %v3027, 65535
        %v3284 = vand.u32 %v3028, 65535
        %v3285 = vand.u32 %v3029, 65535
        %v3286 = vand.u32 %v3030, 65535
        %v3287 = vand.u32 %v3031, 65535
        %v3288 = vand.u32 %v3032, 65535
        %v3289 = vand.u32 %v3033, 65535
        %v3290 = vand.u32 %v3034, 65535
        %v3291 = vand.u32 %v3035, 65535
        %v3292 = vand.u32 %v3036, 65535
        %v3293 = vand.u32 %v3037, 65535
        %v3294 = vand.u32 %v3038, 65535
        %v3295 = vand.u32 %v3039, 65535
        %v3296 = vand.u32 %v3040, 65535
        %v3297 = vand.u32 %v3041, 65535
        %v3298 = vand.u32 %v3042, 65535
        %v3299 = vand.u32 %v3043, 65535
        %v3300 = vand.u32 %v3044, 65535
        %v3301 = vand.u32 %v3045, 65535
        %v3302 = vand.u32 %v3046, 65535
        %v3303 = vand.u32 %v3047, 65535
        %v3304 = vand.u32 %v3048, 65535
        %v3305 = vand.u32 %v3049, 65535
        %v3306 = vand.u32 %v3050, 65535
        %v3307 = vand.u32 %v3051, 65535
        %v3308 = vand.u32 %v3052, 65535
        %v3309 = vand.u32 %v3053, 65535
        %v3310 = vand.u32 %v3054, 65535
        %v3311 = vand.u32 %v3055, 65535
        %v3312 = vand.u32 %v3056, 65535
        %v3313 = vand.u32 %v3057, 65535
        %v3314 = vand.u32 %v3058, 65535
        %v3315 = vand.u32 %v3059, 65535
        %v3316 = vand.u32 %v3060, 65535
        %v3317 = vand.u32 %v3061, 65535
        %v3318 = vand.u32 %v3062, 65535
        %v3319 = vand.u32 %v3063, 65535
        %v3320 = vand.u32 %v3064, 65535
        %v3321 = vand.u32 %v3065, 65535
        %v3322 = vand.u32 %v3066, 65535
        %v3323 = vand.u32 %v3067, 65535
        %v3324 = vand.u32 %v3068, 65535
        %v3325 = vand.u32 %v3069, 65535
        %v3326 = vand.u32 %v3070, 65535
        %v3327 = vand.u32 %v3071, 65535
        %v3328 = vand.u32 %v3072, 65535
        %v3329 = vand.u32 %v3073, 65535
        %v3330 = vand.u32 %v3074, 65535
        %v3331 = vand.u32 %v3075, 65535
        %v3332 = vand.u32 %v3076, 65535
        %v3333 = vand.u32 %v3077, 65535
        %v3334 = vand.u32 %v3078, 65535
        %v3335 = vand.u32 %v3079, 65535
        %v3336 = vand.u32 %v3080, 65535
        %v3337 = vand.u32 %v3081, 65535
        %v3338 = vand.u32 %v3082, 65535
        %v3339 = vand.u32 %v3083, 65535
        %v3340 = vand.u32 %v3084, 65535
        %v3341 = vand.u32 %v3085, 65535
        %v3342 = vand.u32 %v3086, 65535
        %v3343 = vand.u32 %v3087, 65535
        %v3344 = vand.u32 %v3088, 65535
        %v3345 = vand.u32 %v3089, 65535
        %v3346 = vand.u32 %v3090, 65535
        %v3347 = vand.u32 %v3091, 65535
        %v3348 = vand.u32 %v3092, 65535
        %v3349 = vand.u32 %v3093, 65535
        %v3350 = vand.u32 %v3094, 65535
        %v3351 = vand.u32 %v3095, 65535
        %v3352 = vand.u32 %v3096, 65535
        %v3353 = vand.u32 %v3097, 65535
        %v3354 = vand.u32 %v3098, 65535
        %v3355 = vand.u32 %v3099, 65535
        %v3356 = vand.u32 %v3100, 65535
        %v3357 = vand.u32 %v3101, 65535
        %v3358 = vand.u32 %v3102, 65535
        %v3359 = vand.u32 %v3103, 65535
        %v3360 = vand.u32 %v3104, 65535
        %v3361 = vand.u32 %v3105, 65535
        %v3362 = vand.u32 %v3106, 65535
        %v3363 = vand.u32 %v3107, 65535
        %v3364 = vand.u32 %v3108, 65535
        %v3365 = vand.u32 %v3109, 65535
        %v3366 = vand.u32 %v3110, 65535
        %v3367 = vand.u32 %v3111, 65535
        %v3368 = vand.u32 %v3112, 65535
        %v3369 = vand.u32 %v3113, 65535
        %v3370 = vand.u32 %v3114, 65535
        %v3371 = vand.u32 %v3115, 65535
        %v3372 = vand.u32 %v3116, 65535
        %v3373 = vand.u32 %v3117, 65535
        %v3374 = vand.u32 %v3118, 65535
        %v3375 = vand.u32 %v3119, 65535
        %v3376 = vand.u32 %v3120, 65535
        %v3377 = vand.u32 %v3121, 65535
        %v3378 = vand.u32 %v3122, 65535
        %v3379 = vand.u32 %v3123, 65535
        %v3380 = vand.u32 %v3124, 65535
        %v3381 = vand.u32 %v3125, 65535
        %v3382 = vand.u32 %v3126, 65535
        %v3383 = vand.u32 %v3127, 65535
        %v3384 = vand.u32 %v3128, 65535
        %v3385 = vand.u32 %v3129, 65535
        %v3386 = vand.u32 %v3130, 65535
        %v3387 = vand.u32 %v3131, 65535
        %v3388 = vand.u32 %v3132, 65535
        %v3389 = vand.u32 %v3133, 65535
        %v3390 = vand.u32 %v3134, 65535
        %v3391 = vand.u32 %v3135, 65535
        %v3392 = vand.u32 %v3136, 65535
        %v3393 = vand.u32 %v3137, 65535
        %v3394 = vand.u32 %v3138, 65535
        %v3395 = vand.u32 %v3139, 65535
        %v3396 = vand.u32 %v3140, 65535
        %v3397 = vand.u32 %v3141, 65535
        %v3398 = vand.u32 %v3142, 65535
        %v3399 = vand.u32 %v3143, 65535
        %v3400 = vand.u32 %v3144, 65535
        %v3401 = vand.u32 %v3145, 65535
        %v3402 = vand.u32 %v3146, 65535
        %v3403 = vand.u32 %v3147, 65535
        %v3404 = vand.u32 %v3148, 65535
        %v3405 = vand.u32 %v3149, 65535
        %v3406 = vand.u32 %v3150, 65535
        %v3407 = vand.u32 %v3151, 65535
        %v3408 = vand.u32 %v3152, 65535
        %v3409 = vand.u32 %v3153, 65535
        %v3410 = vand.u32 %v3154, 65535
        %v3411 = vand.u32 %v3155, 65535
        %v3412 = vand.u32 %v3156, 65535
        %v3413 = vand.u32 %v3157, 65535
        %v3414 = vand.u32 %v3158, 65535
        %v3415 = vand.u32 %v3159, 65535
        %v3416 = vand.u32 %v3160, 65535
        %v3417 = vand.u32 %v3161, 65535
        %v3418 = vand.u32 %v3162, 65535
        %v3419 = vand.u32 %v3163, 65535
        %v3420 = vand.u32 %v3164, 65535
        %v3421 = vand.u32 %v3165, 65535
        %v3422 = vand.u32 %v3166, 65535
        %v3423 = vand.u32 %v3167, 65535
        %v3424 = vxor.u32 %v2656, %v3168
        %v3425 = vxor.u32 %v2657, %v3169
        %v3426 = vxor.u32 %v2658, %v3170
        %v3427 = vxor.u32 %v2659, %v3171
        %v3428 = vxor.u32 %v2660, %v3172
        %v3429 = vxor.u32 %v2661, %v3173
        %v3430 = vxor.u32 %v2662, %v3174
        %v3431 = vxor.u32 %v2663, %v3175
        %v3432 = vxor.u32 %v2664, %v3176
        %v3433 = vxor.u32 %v2665, %v3177
        %v3434 = vxor.u32 %v2666, %v3178
        %v3435 = vxor.u32 %v2667, %v3179
        %v3436 = vxor.u32 %v2668, %v3180
        %v3437 = vxor.u32 %v2669, %v3181
        %v3438 = vxor.u32 %v2670, %v3182
        %v3439 = vxor.u32 %v2671, %v3183
        %v3440 = vxor.u32 %v2672, %v3184
        %v3441 = vxor.u32 %v2673, %v3185
        %v3442 = vxor.u32 %v2674, %v3186
        %v3443 = vxor.u32 %v2675, %v3187
        %v3444 = vxor.u32 %v2676, %v3188
        %v3445 = vxor.u32 %v2677, %v3189
        %v3446 = vxor.u32 %v2678, %v3190
        %v3447 = vxor.u32 %v2679, %v3191
        %v3448 = vxor.u32 %v2680, %v3192
        %v3449 = vxor.u32 %v2681, %v3193
        %v3450 = vxor.u32 %v2682, %v3194
        %v3451 = vxor.u32 %v2683, %v3195
        %v3452 = vxor.u32 %v2684, %v3196
        %v3453 = vxor.u32 %v2685, %v3197
        %v3454 = vxor.u32 %v2686, %v3198
        %v3455 = vxor.u32 %v2687, %v3199
        %v3456 = vxor.u32 %v2688, %v3200
        %v3457 = vxor.u32 %v2689, %v3201
        %v3458 = vxor.u32 %v2690, %v3202
        %v3459 = vxor.u32 %v2691, %v3203
        %v3460 = vxor.u32 %v2692, %v3204
        %v3461 = vxor.u32 %v2693, %v3205
        %v3462 = vxor.u32 %v2694, %v3206
        %v3463 = vxor.u32 %v2695, %v3207
        %v3464 = vxor.u32 %v2696, %v3208
        %v3465 = vxor.u32 %v2697, %v3209
        %v3466 = vxor.u32 %v2698, %v3210
        %v3467 = vxor.u32 %v2699, %v3211
        %v3468 = vxor.u32 %v2700, %v3212
        %v3469 = vxor.u32 %v2701, %v3213
        %v3470 = vxor.u32 %v2702, %v3214
        %v3471 = vxor.u32 %v2703, %v3215
        %v3472 = vxor.u32 %v2704, %v3216
        %v3473 = vxor.u32 %v2705, %v3217
        %v3474 = vxor.u32 %v2706, %v3218
        %v3475 = vxor.u32 %v2707, %v3219
        %v3476 = vxor.u32 %v2708, %v3220
        %v3477 = vxor.u32 %v2709, %v3221
        %v3478 = vxor.u32 %v2710, %v3222
        %v3479 = vxor.u32 %v2711, %v3223
        %v3480 = vxor.u32 %v2712, %v3224
        %v3481 = vxor.u32 %v2713, %v3225
        %v3482 = vxor.u32 %v2714, %v3226
        %v3483 = vxor.u32 %v2715, %v3227
        %v3484 = vxor.u32 %v2716, %v3228
        %v3485 = vxor.u32 %v2717, %v3229
        %v3486 = vxor.u32 %v2718, %v3230
        %v3487 = vxor.u32 %v2719, %v3231
        %v3488 = vxor.u32 %v2720, %v3232
        %v3489 = vxor.u32 %v2721, %v3233
        %v3490 = vxor.u32 %v2722, %v3234
        %v3491 = vxor.u32 %v2723, %v3235
        %v3492 = vxor.u32 %v2724, %v3236
        %v3493 = vxor.u32 %v2725, %v3237
        %v3494 = vxor.u32 %v2726, %v3238
        %v3495 = vxor.u32 %v2727, %v3239
        %v3496 = vxor.u32 %v2728, %v3240
        %v3497 = vxor.u32 %v2729, %v3241
        %v3498 = vxor.u32 %v2730, %v3242
        %v3499 = vxor.u32 %v2731, %v3243
        %v3500 = vxor.u32 %v2732, %v3244
        %v3501 = vxor.u32 %v2733, %v3245
        %v3502 = vxor.u32 %v2734, %v3246
        %v3503 = vxor.u32 %v2735, %v3247
        %v3504 = vxor.u32 %v2736, %v3248
        %v3505 = vxor.u32 %v2737, %v3249
        %v3506 = vxor.u32 %v2738, %v3250
        %v3507 = vxor.u32 %v2739, %v3251
        %v3508 = vxor.u32 %v2740, %v3252
        %v3509 = vxor.u32 %v2741, %v3253
        %v3510 = vxor.u32 %v2742, %v3254
        %v3511 = vxor.u32 %v2743, %v3255
        %v3512 = vxor.u32 %v2744, %v3256
        %v3513 = vxor.u32 %v2745, %v3257
        %v3514 = vxor.u32 %v2746, %v3258
        %v3515 = vxor.u32 %v2747, %v3259
        %v3516 = vxor.u32 %v2748, %v3260
        %v3517 = vxor.u32 %v2749, %v3261
        %v3518 = vxor.u32 %v2750, %v3262
        %v3519 = vxor.u32 %v2751, %v3263
        %v3520 = vxor.u32 %v2752, %v3264
        %v3521 = vxor.u32 %v2753, %v3265
        %v3522 = vxor.u32 %v2754, %v3266
        %v3523 = vxor.u32 %v2755, %v3267
        %v3524 = vxor.u32 %v2756, %v3268
        %v3525 = vxor.u32 %v2757, %v3269
        %v3526 = vxor.u32 %v2758, %v3270
        %v3527 = vxor.u32 %v2759, %v3271
        %v3528 = vxor.u32 %v2760, %v3272
        %v3529 = vxor.u32 %v2761, %v3273
        %v3530 = vxor.u32 %v2762, %v3274
        %v3531 = vxor.u32 %v2763, %v3275
        %v3532 = vxor.u32 %v2764, %v3276
        %v3533 = vxor.u32 %v2765, %v3277
        %v3534 = vxor.u32 %v2766, %v3278
        %v3535 = vxor.u32 %v2767, %v3279
        %v3536 = vxor.u32 %v2768, %v3280
        %v3537 = vxor.u32 %v2769, %v3281
        %v3538 = vxor.u32 %v2770, %v3282
        %v3539 = vxor.u32 %v2771, %v3283
        %v3540 = vxor.u32 %v2772, %v3284
        %v3541 = vxor.u32 %v2773, %v3285
        %v3542 = vxor.u32 %v2774, %v3286
        %v3543 = vxor.u32 %v2775, %v3287
        %v3544 = vxor.u32 %v2776, %v3288
        %v3545 = vxor.u32 %v2777, %v3289
        %v3546 = vxor.u32 %v2778, %v3290
        %v3547 = vxor.u32 %v2779, %v3291
        %v3548 = vxor.u32 %v2780, %v3292
        %v3549 = vxor.u32 %v2781, %v3293
        %v3550 = vxor.u32 %v2782, %v3294
        %v3551 = vxor.u32 %v2783, %v3295
        %v3552 = vxor.u32 %v2784, %v3296
        %v3553 = vxor.u32 %v2785, %v3297
        %v3554 = vxor.u32 %v2786, %v3298
        %v3555 = vxor.u32 %v2787, %v3299
        %v3556 = vxor.u32 %v2788, %v3300
        %v3557 = vxor.u32 %v2789, %v3301
        %v3558 = vxor.u32 %v2790, %v3302
        %v3559 = vxor.u32 %v2791, %v3303
        %v3560 = vxor.u32 %v2792, %v3304
        %v3561 = vxor.u32 %v2793, %v3305
        %v3562 = vxor.u32 %v2794, %v3306
        %v3563 = vxor.u32 %v2795, %v3307
        %v3564 = vxor.u32 %v2796, %v3308
        %v3565 = vxor.u32 %v2797, %v3309
        %v3566 = vxor.u32 %v2798, %v3310
        %v3567 = vxor.u32 %v2799, %v3311
        %v3568 = vxor.u32 %v2800, %v3312
        %v3569 = vxor.u32 %v2801, %v3313
        %v3570 = vxor.u32 %v2802, %v3314
        %v3571 = vxor.u32 %v2803, %v3315
        %v3572 = vxor.u32 %v2804, %v3316
        %v3573 = vxor.u32 %v2805, %v3317
        %v3574 = vxor.u32 %v2806, %v3318
        %v3575 = vxor.u32 %v2807, %v3319
        %v3576 = vxor.u32 %v2808, %v3320
        %v3577 = vxor.u32 %v2809, %v3321
        %v3578 = vxor.u32 %v2810, %v3322
        %v3579 = vxor.u32 %v2811, %v3323
        %v3580 = vxor.u32 %v2812, %v3324
        %v3581 = vxor.u32 %v2813, %v3325
        %v3582 = vxor.u32 %v2814, %v3326
        %v3583 = vxor.u32 %v2815, %v3327
        %v3584 = vxor.u32 %v2816, %v3328
        %v3585 = vxor.u32 %v2817, %v3329
        %v3586 = vxor.u32 %v2818, %v3330
        %v3587 = vxor.u32 %v2819, %v3331
        %v3588 = vxor.u32 %v2820, %v3332
        %v3589 = vxor.u32 %v2821, %v3333
        %v3590 = vxor.u32 %v2822, %v3334
        %v3591 = vxor.u32 %v2823, %v3335
        %v3592 = vxor.u32 %v2824, %v3336
        %v3593 = vxor.u32 %v2825, %v3337
        %v3594 = vxor.u32 %v2826, %v3338
        %v3595 = vxor.u32 %v2827, %v3339
        %v3596 = vxor.u32 %v2828, %v3340
        %v3597 = vxor.u32 %v2829, %v3341
        %v3598 = vxor.u32 %v2830, %v3342
        %v3599 = vxor.u32 %v2831, %v3343
        %v3600 = vxor.u32 %v2832, %v3344
        %v3601 = vxor.u32 %v2833, %v3345
        %v3602 = vxor.u32 %v2834, %v3346
        %v3603 = vxor.u32 %v2835, %v3347
        %v3604 = vxor.u32 %v2836, %v3348
        %v3605 = vxor.u32 %v2837, %v3349
        %v3606 = vxor.u32 %v2838, %v3350
        %v3607 = vxor.u32 %v2839, %v3351
        %v3608 = vxor.u32 %v2840, %v3352
        %v3609 = vxor.u32 %v2841, %v3353
        %v3610 = vxor.u32 %v2842, %v3354
        %v3611 = vxor.u32 %v2843, %v3355
        %v3612 = vxor.u32 %v2844, %v3356
        %v3613 = vxor.u32 %v2845, %v3357
        %v3614 = vxor.u32 %v2846, %v3358
        %v3615 = vxor.u32 %v2847, %v3359
        %v3616 = vxor.u32 %v2848, %v3360
        %v3617 = vxor.u32 %v2849, %v3361
        %v3618 = vxor.u32 %v2850, %v3362
        %v3619 = vxor.u32 %v2851, %v3363
        %v3620 = vxor.u32 %v2852, %v3364
        %v3621 = vxor.u32 %v2853, %v3365
        %v3622 = vxor.u32 %v2854, %v3366
        %v3623 = vxor.u32 %v2855, %v3367
        %v3624 = vxor.u32 %v2856, %v3368
        %v3625 = vxor.u32 %v2857, %v3369
        %v3626 = vxor.u32 %v2858, %v3370
        %v3627 = vxor.u32 %v2859, %v3371
        %v3628 = vxor.u32 %v2860, %v3372
        %v3629 = vxor.u32 %v2861, %v3373
        %v3630 = vxor.u32 %v2862, %v3374
        %v3631 = vxor.u32 %v2863, %v3375
        %v3632 = vxor.u32 %v2864, %v3376
        %v3633 = vxor.u32 %v2865, %v3377
        %v3634 = vxor.u32 %v2866, %v3378
        %v3635 = vxor.u32 %v2867, %v3379
        %v3636 = vxor.u32 %v2868, %v3380
        %v3637 = vxor.u32 %v2869, %v3381
        %v3638 = vxor.u32 %v2870, %v3382
        %v3639 = vxor.u32 %v2871, %v3383
        %v3640 = vxor.u32 %v2872, %v3384
        %v3641 = vxor.u32 %v2873, %v3385
        %v3642 = vxor.u32 %v2874, %v3386
        %v3643 = vxor.u32 %v2875, %v3387
        %v3644 = vxor.u32 %v2876, %v3388
        %v3645 = vxor.u32 %v2877, %v3389
        %v3646 = vxor.u32 %v2878, %v3390
        %v3647 = vxor.u32 %v2879, %v3391
        %v3648 = vxor.u32 %v2880, %v3392
        %v3649 = vxor.u32 %v2881, %v3393
        %v3650 = vxor.u32 %v2882, %v3394
        %v3651 = vxor.u32 %v2883, %v3395
        %v3652 = vxor.u32 %v2884, %v3396
        %v3653 = vxor.u32 %v2885, %v3397
        %v3654 = vxor.u32 %v2886, %v3398
        %v3655 = vxor.u32 %v2887, %v3399
        %v3656 = vxor.u32 %v2888, %v3400
        %v3657 = vxor.u32 %v2889, %v3401
        %v3658 = vxor.u32 %v2890, %v3402
        %v3659 = vxor.u32 %v2891, %v3403
        %v3660 = vxor.u32 %v2892, %v3404
        %v3661 = vxor.u32 %v2893, %v3405
        %v3662 = vxor.u32 %v2894, %v3406
        %v3663 = vxor.u32 %v2895, %v3407
        %v3664 = vxor.u32 %v2896, %v3408
        %v3665 = vxor.u32 %v2897, %v3409
        %v3666 = vxor.u32 %v2898, %v3410
        %v3667 = vxor.u32 %v2899, %v3411
        %v3668 = vxor.u32 %v2900, %v3412
        %v3669 = vxor.u32 %v2901, %v3413
        %v3670 = vxor.u32 %v2902, %v3414
        %v3671 = vxor.u32 %v2903, %v3415
        %v3672 = vxor.u32 %v2904, %v3416
        %v3673 = vxor.u32 %v2905, %v3417
        %v3674 = vxor.u32 %v2906, %v3418
        %v3675 = vxor.u32 %v2907, %v3419
        %v3676 = vxor.u32 %v2908, %v3420
        %v3677 = vxor.u32 %v2909, %v3421
        %v3678 = vxor.u32 %v2910, %v3422
        %v3679 = vxor.u32 %v2911, %v3423
        %v3680 = vshra.s32 %v3424, 8
        %v3681 = vshra.s32 %v3425, 8
        %v3682 = vshra.s32 %v3426, 8
        %v3683 = vshra.s32 %v3427, 8
        %v3684 = vshra.s32 %v3428, 8
        %v3685 = vshra.s32 %v3429, 8
        %v3686 = vshra.s32 %v3430, 8
        %v3687 = vshra.s32 %v3431, 8
        %v3688 = vshra.s32 %v3432, 8
        %v3689 = vshra.s32 %v3433, 8
        %v3690 = vshra.s32 %v3434, 8
        %v3691 = vshra.s32 %v3435, 8
        %v3692 = vshra.s32 %v3436, 8
        %v3693 = vshra.s32 %v3437, 8
        %v3694 = vshra.s32 %v3438, 8
        %v3695 = vshra.s32 %v3439, 8
        %v3696 = vshra.s32 %v3440, 8
        %v3697 = vshra.s32 %v3441, 8
        %v3698 = vshra.s32 %v3442, 8
        %v3699 = vshra.s32 %v3443, 8
        %v3700 = vshra.s32 %v3444, 8
        %v3701 = vshra.s32 %v3445, 8
        %v3702 = vshra.s32 %v3446, 8
        %v3703 = vshra.s32 %v3447, 8
        %v3704 = vshra.s32 %v3448, 8
        %v3705 = vshra.s32 %v3449, 8
        %v3706 = vshra.s32 %v3450, 8
        %v3707 = vshra.s32 %v3451, 8
        %v3708 = vshra.s32 %v3452, 8
        %v3709 = vshra.s32 %v3453, 8
        %v3710 = vshra.s32 %v3454, 8
        %v3711 = vshra.s32 %v3455, 8
        %v3712 = vshra.s32 %v3456, 8
        %v3713 = vshra.s32 %v3457, 8
        %v3714 = vshra.s32 %v3458, 8
        %v3715 = vshra.s32 %v3459, 8
        %v3716 = vshra.s32 %v3460, 8
        %v3717 = vshra.s32 %v3461, 8
        %v3718 = vshra.s32 %v3462, 8
        %v3719 = vshra.s32 %v3463, 8
        %v3720 = vshra.s32 %v3464, 8
        %v3721 = vshra.s32 %v3465, 8
        %v3722 = vshra.s32 %v3466, 8
        %v3723 = vshra.s32 %v3467, 8
        %v3724 = vshra.s32 %v3468, 8
        %v3725 = vshra.s32 %v3469, 8
        %v3726 = vshra.s32 %v3470, 8
        %v3727 = vshra.s32 %v3471, 8
        %v3728 = vshra.s32 %v3472, 8
        %v3729 = vshra.s32 %v3473, 8
        %v3730 = vshra.s32 %v3474, 8
        %v3731 = vshra.s32 %v3475, 8
        %v3732 = vshra.s32 %v3476, 8
        %v3733 = vshra.s32 %v3477, 8
        %v3734 = vshra.s32 %v3478, 8
        %v3735 = vshra.s32 %v3479, 8
        %v3736 = vshra.s32 %v3480, 8
        %v3737 = vshra.s32 %v3481, 8
        %v3738 = vshra.s32 %v3482, 8
        %v3739 = vshra.s32 %v3483, 8
        %v3740 = vshra.s32 %v3484, 8
        %v3741 = vshra.s32 %v3485, 8
        %v3742 = vshra.s32 %v3486, 8
        %v3743 = vshra.s32 %v3487, 8
        %v3744 = vshra.s32 %v3488, 8
        %v3745 = vshra.s32 %v3489, 8
        %v3746 = vshra.s32 %v3490, 8
        %v3747 = vshra.s32 %v3491, 8
        %v3748 = vshra.s32 %v3492, 8
        %v3749 = vshra.s32 %v3493, 8
        %v3750 = vshra.s32 %v3494, 8
        %v3751 = vshra.s32 %v3495, 8
        %v3752 = vshra.s32 %v3496, 8
        %v3753 = vshra.s32 %v3497, 8
        %v3754 = vshra.s32 %v3498, 8
        %v3755 = vshra.s32 %v3499, 8
        %v3756 = vshra.s32 %v3500, 8
        %v3757 = vshra.s32 %v3501, 8
        %v3758 = vshra.s32 %v3502, 8
        %v3759 = vshra.s32 %v3503, 8
        %v3760 = vshra.s32 %v3504, 8
        %v3761 = vshra.s32 %v3505, 8
        %v3762 = vshra.s32 %v3506, 8
        %v3763 = vshra.s32 %v3507, 8
        %v3764 = vshra.s32 %v3508, 8
        %v3765 = vshra.s32 %v3509, 8
        %v3766 = vshra.s32 %v3510, 8
        %v3767 = vshra.s32 %v3511, 8
        %v3768 = vshra.s32 %v3512, 8
        %v3769 = vshra.s32 %v3513, 8
        %v3770 = vshra.s32 %v3514, 8
        %v3771 = vshra.s32 %v3515, 8
        %v3772 = vshra.s32 %v3516, 8
        %v3773 = vshra.s32 %v3517, 8
        %v3774 = vshra.s32 %v3518, 8
        %v3775 = vshra.s32 %v3519, 8
        %v3776 = vshra.s32 %v3520, 8
        %v3777 = vshra.s32 %v3521, 8
        %v3778 = vshra.s32 %v3522, 8
        %v3779 = vshra.s32 %v3523, 8
        %v3780 = vshra.s32 %v3524, 8
        %v3781 = vshra.s32 %v3525, 8
        %v3782 = vshra.s32 %v3526, 8
        %v3783 = vshra.s32 %v3527, 8
        %v3784 = vshra.s32 %v3528, 8
        %v3785 = vshra.s32 %v3529, 8
        %v3786 = vshra.s32 %v3530, 8
        %v3787 = vshra.s32 %v3531, 8
        %v3788 = vshra.s32 %v3532, 8
        %v3789 = vshra.s32 %v3533, 8
        %v3790 = vshra.s32 %v3534, 8
        %v3791 = vshra.s32 %v3535, 8
        %v3792 = vshra.s32 %v3536, 8
        %v3793 = vshra.s32 %v3537, 8
        %v3794 = vshra.s32 %v3538, 8
        %v3795 = vshra.s32 %v3539, 8
        %v3796 = vshra.s32 %v3540, 8
        %v3797 = vshra.s32 %v3541, 8
        %v3798 = vshra.s32 %v3542, 8
        %v3799 = vshra.s32 %v3543, 8
        %v3800 = vshra.s32 %v3544, 8
        %v3801 = vshra.s32 %v3545, 8
        %v3802 = vshra.s32 %v3546, 8
        %v3803 = vshra.s32 %v3547, 8
        %v3804 = vshra.s32 %v3548, 8
        %v3805 = vshra.s32 %v3549, 8
        %v3806 = vshra.s32 %v3550, 8
        %v3807 = vshra.s32 %v3551, 8
        %v3808 = vshra.s32 %v3552, 8
        %v3809 = vshra.s32 %v3553, 8
        %v3810 = vshra.s32 %v3554, 8
        %v3811 = vshra.s32 %v3555, 8
        %v3812 = vshra.s32 %v3556, 8
        %v3813 = vshra.s32 %v3557, 8
        %v3814 = vshra.s32 %v3558, 8
        %v3815 = vshra.s32 %v3559, 8
        %v3816 = vshra.s32 %v3560, 8
        %v3817 = vshra.s32 %v3561, 8
        %v3818 = vshra.s32 %v3562, 8
        %v3819 = vshra.s32 %v3563, 8
        %v3820 = vshra.s32 %v3564, 8
        %v3821 = vshra.s32 %v3565, 8
        %v3822 = vshra.s32 %v3566, 8
        %v3823 = vshra.s32 %v3567, 8
        %v3824 = vshra.s32 %v3568, 8
        %v3825 = vshra.s32 %v3569, 8
        %v3826 = vshra.s32 %v3570, 8
        %v3827 = vshra.s32 %v3571, 8
        %v3828 = vshra.s32 %v3572, 8
        %v3829 = vshra.s32 %v3573, 8
        %v3830 = vshra.s32 %v3574, 8
        %v3831 = vshra.s32 %v3575, 8
        %v3832 = vshra.s32 %v3576, 8
        %v3833 = vshra.s32 %v3577, 8
        %v3834 = vshra.s32 %v3578, 8
        %v3835 = vshra.s32 %v3579, 8
        %v3836 = vshra.s32 %v3580, 8
        %v3837 = vshra.s32 %v3581, 8
        %v3838 = vshra.s32 %v3582, 8
        %v3839 = vshra.s32 %v3583, 8
        %v3840 = vshra.s32 %v3584, 8
        %v3841 = vshra.s32 %v3585, 8
        %v3842 = vshra.s32 %v3586, 8
        %v3843 = vshra.s32 %v3587, 8
        %v3844 = vshra.s32 %v3588, 8
        %v3845 = vshra.s32 %v3589, 8
        %v3846 = vshra.s32 %v3590, 8
        %v3847 = vshra.s32 %v3591, 8
        %v3848 = vshra.s32 %v3592, 8
        %v3849 = vshra.s32 %v3593, 8
        %v3850 = vshra.s32 %v3594, 8
        %v3851 = vshra.s32 %v3595, 8
        %v3852 = vshra.s32 %v3596, 8
        %v3853 = vshra.s32 %v3597, 8
        %v3854 = vshra.s32 %v3598, 8
        %v3855 = vshra.s32 %v3599, 8
        %v3856 = vshra.s32 %v3600, 8
        %v3857 = vshra.s32 %v3601, 8
        %v3858 = vshra.s32 %v3602, 8
        %v3859 = vshra.s32 %v3603, 8
        %v3860 = vshra.s32 %v3604, 8
        %v3861 = vshra.s32 %v3605, 8
        %v3862 = vshra.s32 %v3606, 8
        %v3863 = vshra.s32 %v3607, 8
        %v3864 = vshra.s32 %v3608, 8
        %v3865 = vshra.s32 %v3609, 8
        %v3866 = vshra.s32 %v3610, 8
        %v3867 = vshra.s32 %v3611, 8
        %v3868 = vshra.s32 %v3612, 8
        %v3869 = vshra.s32 %v3613, 8
        %v3870 = vshra.s32 %v3614, 8
        %v3871 = vshra.s32 %v3615, 8
        %v3872 = vshra.s32 %v3616, 8
        %v3873 = vshra.s32 %v3617, 8
        %v3874 = vshra.s32 %v3618, 8
        %v3875 = vshra.s32 %v3619, 8
        %v3876 = vshra.s32 %v3620, 8
        %v3877 = vshra.s32 %v3621, 8
        %v3878 = vshra.s32 %v3622, 8
        %v3879 = vshra.s32 %v3623, 8
        %v3880 = vshra.s32 %v3624, 8
        %v3881 = vshra.s32 %v3625, 8
        %v3882 = vshra.s32 %v3626, 8
        %v3883 = vshra.s32 %v3627, 8
        %v3884 = vshra.s32 %v3628, 8
        %v3885 = vshra.s32 %v3629, 8
        %v3886 = vshra.s32 %v3630, 8
        %v3887 = vshra.s32 %v3631, 8
        %v3888 = vshra.s32 %v3632, 8
        %v3889 = vshra.s32 %v3633, 8
        %v3890 = vshra.s32 %v3634, 8
        %v3891 = vshra.s32 %v3635, 8
        %v3892 = vshra.s32 %v3636, 8
        %v3893 = vshra.s32 %v3637, 8
        %v3894 = vshra.s32 %v3638, 8
        %v3895 = vshra.s32 %v3639, 8
        %v3896 = vshra.s32 %v3640, 8
        %v3897 = vshra.s32 %v3641, 8
        %v3898 = vshra.s32 %v3642, 8
        %v3899 = vshra.s32 %v3643, 8
        %v3900 = vshra.s32 %v3644, 8
        %v3901 = vshra.s32 %v3645, 8
        %v3902 = vshra.s32 %v3646, 8
        %v3903 = vshra.s32 %v3647, 8
        %v3904 = vshra.s32 %v3648, 8
        %v3905 = vshra.s32 %v3649, 8
        %v3906 = vshra.s32 %v3650, 8
        %v3907 = vshra.s32 %v3651, 8
        %v3908 = vshra.s32 %v3652, 8
        %v3909 = vshra.s32 %v3653, 8
        %v3910 = vshra.s32 %v3654, 8
        %v3911 = vshra.s32 %v3655, 8
        %v3912 = vshra.s32 %v3656, 8
        %v3913 = vshra.s32 %v3657, 8
        %v3914 = vshra.s32 %v3658, 8
        %v3915 = vshra.s32 %v3659, 8
        %v3916 = vshra.s32 %v3660, 8
        %v3917 = vshra.s32 %v3661, 8
        %v3918 = vshra.s32 %v3662, 8
        %v3919 = vshra.s32 %v3663, 8
        %v3920 = vshra.s32 %v3664, 8
        %v3921 = vshra.s32 %v3665, 8
        %v3922 = vshra.s32 %v3666, 8
        %v3923 = vshra.s32 %v3667, 8
        %v3924 = vshra.s32 %v3668, 8
        %v3925 = vshra.s32 %v3669, 8
        %v3926 = vshra.s32 %v3670, 8
        %v3927 = vshra.s32 %v3671, 8
        %v3928 = vshra.s32 %v3672, 8
        %v3929 = vshra.s32 %v3673, 8
        %v3930 = vshra.s32 %v3674, 8
        %v3931 = vshra.s32 %v3675, 8
        %v3932 = vshra.s32 %v3676, 8
        %v3933 = vshra.s32 %v3677, 8
        %v3934 = vshra.s32 %v3678, 8
        %v3935 = vshra.s32 %v3679, 8
        %v3936 = vand.u32 %v3680, 16777215
        %v3937 = vand.u32 %v3681, 16777215
        %v3938 = vand.u32 %v3682, 16777215
        %v3939 = vand.u32 %v3683, 16777215
        %v3940 = vand.u32 %v3684, 16777215
        %v3941 = vand.u32 %v3685, 16777215
        %v3942 = vand.u32 %v3686, 16777215
        %v3943 = vand.u32 %v3687, 16777215
        %v3944 = vand.u32 %v3688, 16777215
        %v3945 = vand.u32 %v3689, 16777215
        %v3946 = vand.u32 %v3690, 16777215
        %v3947 = vand.u32 %v3691, 16777215
        %v3948 = vand.u32 %v3692, 16777215
        %v3949 = vand.u32 %v3693, 16777215
        %v3950 = vand.u32 %v3694, 16777215
        %v3951 = vand.u32 %v3695, 16777215
        %v3952 = vand.u32 %v3696, 16777215
        %v3953 = vand.u32 %v3697, 16777215
        %v3954 = vand.u32 %v3698, 16777215
        %v3955 = vand.u32 %v3699, 16777215
        %v3956 = vand.u32 %v3700, 16777215
        %v3957 = vand.u32 %v3701, 16777215
        %v3958 = vand.u32 %v3702, 16777215
        %v3959 = vand.u32 %v3703, 16777215
        %v3960 = vand.u32 %v3704, 16777215
        %v3961 = vand.u32 %v3705, 16777215
        %v3962 = vand.u32 %v3706, 16777215
        %v3963 = vand.u32 %v3707, 16777215
        %v3964 = vand.u32 %v3708, 16777215
        %v3965 = vand.u32 %v3709, 16777215
        %v3966 = vand.u32 %v3710, 16777215
        %v3967 = vand.u32 %v3711, 16777215
        %v3968 = vand.u32 %v3712, 16777215
        %v3969 = vand.u32 %v3713, 16777215
        %v3970 = vand.u32 %v3714, 16777215
        %v3971 = vand.u32 %v3715, 16777215
        %v3972 = vand.u32 %v3716, 16777215
        %v3973 = vand.u32 %v3717, 16777215
        %v3974 = vand.u32 %v3718, 16777215
        %v3975 = vand.u32 %v3719, 16777215
        %v3976 = vand.u32 %v3720, 16777215
        %v3977 = vand.u32 %v3721, 16777215
        %v3978 = vand.u32 %v3722, 16777215
        %v3979 = vand.u32 %v3723, 16777215
        %v3980 = vand.u32 %v3724, 16777215
        %v3981 = vand.u32 %v3725, 16777215
        %v3982 = vand.u32 %v3726, 16777215
        %v3983 = vand.u32 %v3727, 16777215
        %v3984 = vand.u32 %v3728, 16777215
        %v3985 = vand.u32 %v3729, 16777215
        %v3986 = vand.u32 %v3730, 16777215
        %v3987 = vand.u32 %v3731, 16777215
        %v3988 = vand.u32 %v3732, 16777215
        %v3989 = vand.u32 %v3733, 16777215
        %v3990 = vand.u32 %v3734, 16777215
        %v3991 = vand.u32 %v3735, 16777215
        %v3992 = vand.u32 %v3736, 16777215
        %v3993 = vand.u32 %v3737, 16777215
        %v3994 = vand.u32 %v3738, 16777215
        %v3995 = vand.u32 %v3739, 16777215
        %v3996 = vand.u32 %v3740, 16777215
        %v3997 = vand.u32 %v3741, 16777215
        %v3998 = vand.u32 %v3742, 16777215
        %v3999 = vand.u32 %v3743, 16777215
        %v4000 = vand.u32 %v3744, 16777215
        %v4001 = vand.u32 %v3745, 16777215
        %v4002 = vand.u32 %v3746, 16777215
        %v4003 = vand.u32 %v3747, 16777215
        %v4004 = vand.u32 %v3748, 16777215
        %v4005 = vand.u32 %v3749, 16777215
        %v4006 = vand.u32 %v3750, 16777215
        %v4007 = vand.u32 %v3751, 16777215
        %v4008 = vand.u32 %v3752, 16777215
        %v4009 = vand.u32 %v3753, 16777215
        %v4010 = vand.u32 %v3754, 16777215
        %v4011 = vand.u32 %v3755, 16777215
        %v4012 = vand.u32 %v3756, 16777215
        %v4013 = vand.u32 %v3757, 16777215
        %v4014 = vand.u32 %v3758, 16777215
        %v4015 = vand.u32 %v3759, 16777215
        %v4016 = vand.u32 %v3760, 16777215
        %v4017 = vand.u32 %v3761, 16777215
        %v4018 = vand.u32 %v3762, 16777215
        %v4019 = vand.u32 %v3763, 16777215
        %v4020 = vand.u32 %v3764, 16777215
        %v4021 = vand.u32 %v3765, 16777215
        %v4022 = vand.u32 %v3766, 16777215
        %v4023 = vand.u32 %v3767, 16777215
        %v4024 = vand.u32 %v3768, 16777215
        %v4025 = vand.u32 %v3769, 16777215
        %v4026 = vand.u32 %v3770, 16777215
        %v4027 = vand.u32 %v3771, 16777215
        %v4028 = vand.u32 %v3772, 16777215
        %v4029 = vand.u32 %v3773, 16777215
        %v4030 = vand.u32 %v3774, 16777215
        %v4031 = vand.u32 %v3775, 16777215
        %v4032 = vand.u32 %v3776, 16777215
        %v4033 = vand.u32 %v3777, 16777215
        %v4034 = vand.u32 %v3778, 16777215
        %v4035 = vand.u32 %v3779, 16777215
        %v4036 = vand.u32 %v3780, 16777215
        %v4037 = vand.u32 %v3781, 16777215
        %v4038 = vand.u32 %v3782, 16777215
        %v4039 = vand.u32 %v3783, 16777215
        %v4040 = vand.u32 %v3784, 16777215
        %v4041 = vand.u32 %v3785, 16777215
        %v4042 = vand.u32 %v3786, 16777215
        %v4043 = vand.u32 %v3787, 16777215
        %v4044 = vand.u32 %v3788, 16777215
        %v4045 = vand.u32 %v3789, 16777215
        %v4046 = vand.u32 %v3790, 16777215
        %v4047 = vand.u32 %v3791, 16777215
        %v4048 = vand.u32 %v3792, 16777215
        %v4049 = vand.u32 %v3793, 16777215
        %v4050 = vand.u32 %v3794, 16777215
        %v4051 = vand.u32 %v3795, 16777215
        %v4052 = vand.u32 %v3796, 16777215
        %v4053 = vand.u32 %v3797, 16777215
        %v4054 = vand.u32 %v3798, 16777215
        %v4055 = vand.u32 %v3799, 16777215
        %v4056 = vand.u32 %v3800, 16777215
        %v4057 = vand.u32 %v3801, 16777215
        %v4058 = vand.u32 %v3802, 16777215
        %v4059 = vand.u32 %v3803, 16777215
        %v4060 = vand.u32 %v3804, 16777215
        %v4061 = vand.u32 %v3805, 16777215
        %v4062 = vand.u32 %v3806, 16777215
        %v4063 = vand.u32 %v3807, 16777215
        %v4064 = vand.u32 %v3808, 16777215
        %v4065 = vand.u32 %v3809, 16777215
        %v4066 = vand.u32 %v3810, 16777215
        %v4067 = vand.u32 %v3811, 16777215
        %v4068 = vand.u32 %v3812, 16777215
        %v4069 = vand.u32 %v3813, 16777215
        %v4070 = vand.u32 %v3814, 16777215
        %v4071 = vand.u32 %v3815, 16777215
        %v4072 = vand.u32 %v3816, 16777215
        %v4073 = vand.u32 %v3817, 16777215
        %v4074 = vand.u32 %v3818, 16777215
        %v4075 = vand.u32 %v3819, 16777215
        %v4076 = vand.u32 %v3820, 16777215
        %v4077 = vand.u32 %v3821, 16777215
        %v4078 = vand.u32 %v3822, 16777215
        %v4079 = vand.u32 %v3823, 16777215
        %v4080 = vand.u32 %v3824, 16777215
        %v4081 = vand.u32 %v3825, 16777215
        %v4082 = vand.u32 %v3826, 16777215
        %v4083 = vand.u32 %v3827, 16777215
        %v4084 = vand.u32 %v3828, 16777215
        %v4085 = vand.u32 %v3829, 16777215
        %v4086 = vand.u32 %v3830, 16777215
        %v4087 = vand.u32 %v3831, 16777215
        %v4088 = vand.u32 %v3832, 16777215
        %v4089 = vand.u32 %v3833, 16777215
        %v4090 = vand.u32 %v3834, 16777215
        %v4091 = vand.u32 %v3835, 16777215
        %v4092 = vand.u32 %v3836, 16777215
        %v4093 = vand.u32 %v3837, 16777215
        %v4094 = vand.u32 %v3838, 16777215
        %v4095 = vand.u32 %v3839, 16777215
        %v4096 = vand.u32 %v3840, 16777215
        %v4097 = vand.u32 %v3841, 16777215
        %v4098 = vand.u32 %v3842, 16777215
        %v4099 = vand.u32 %v3843, 16777215
        %v4100 = vand.u32 %v3844, 16777215
        %v4101 = vand.u32 %v3845, 16777215
        %v4102 = vand.u32 %v3846, 16777215
        %v4103 = vand.u32 %v3847, 16777215
        %v4104 = vand.u32 %v3848, 16777215
        %v4105 = vand.u32 %v3849, 16777215
        %v4106 = vand.u32 %v3850, 16777215
        %v4107 = vand.u32 %v3851, 16777215
        %v4108 = vand.u32 %v3852, 16777215
        %v4109 = vand.u32 %v3853, 16777215
        %v4110 = vand.u32 %v3854, 16777215
        %v4111 = vand.u32 %v3855, 16777215
        %v4112 = vand.u32 %v3856, 16777215
        %v4113 = vand.u32 %v3857, 16777215
        %v4114 = vand.u32 %v3858, 16777215
        %v4115 = vand.u32 %v3859, 16777215
        %v4116 = vand.u32 %v3860, 16777215
        %v4117 = vand.u32 %v3861, 16777215
        %v4118 = vand.u32 %v3862, 16777215
        %v4119 = vand.u32 %v3863, 16777215
        %v4120 = vand.u32 %v3864, 16777215
        %v4121 = vand.u32 %v3865, 16777215
        %v4122 = vand.u32 %v3866, 16777215
        %v4123 = vand.u32 %v3867, 16777215
        %v4124 = vand.u32 %v3868, 16777215
        %v4125 = vand.u32 %v3869, 16777215
        %v4126 = vand.u32 %v3870, 16777215
        %v4127 = vand.u32 %v3871, 16777215
        %v4128 = vand.u32 %v3872, 16777215
        %v4129 = vand.u32 %v3873, 16777215
        %v4130 = vand.u32 %v3874, 16777215
        %v4131 = vand.u32 %v3875, 16777215
        %v4132 = vand.u32 %v3876, 16777215
        %v4133 = vand.u32 %v3877, 16777215
        %v4134 = vand.u32 %v3878, 16777215
        %v4135 = vand.u32 %v3879, 16777215
        %v4136 = vand.u32 %v3880, 16777215
        %v4137 = vand.u32 %v3881, 16777215
        %v4138 = vand.u32 %v3882, 16777215
        %v4139 = vand.u32 %v3883, 16777215
        %v4140 = vand.u32 %v3884, 16777215
        %v4141 = vand.u32 %v3885, 16777215
        %v4142 = vand.u32 %v3886, 16777215
        %v4143 = vand.u32 %v3887, 16777215
        %v4144 = vand.u32 %v3888, 16777215
        %v4145 = vand.u32 %v3889, 16777215
        %v4146 = vand.u32 %v3890, 16777215
        %v4147 = vand.u32 %v3891, 16777215
        %v4148 = vand.u32 %v3892, 16777215
        %v4149 = vand.u32 %v3893, 16777215
        %v4150 = vand.u32 %v3894, 16777215
        %v4151 = vand.u32 %v3895, 16777215
        %v4152 = vand.u32 %v3896, 16777215
        %v4153 = vand.u32 %v3897, 16777215
        %v4154 = vand.u32 %v3898, 16777215
        %v4155 = vand.u32 %v3899, 16777215
        %v4156 = vand.u32 %v3900, 16777215
        %v4157 = vand.u32 %v3901, 16777215
        %v4158 = vand.u32 %v3902, 16777215
        %v4159 = vand.u32 %v3903, 16777215
        %v4160 = vand.u32 %v3904, 16777215
        %v4161 = vand.u32 %v3905, 16777215
        %v4162 = vand.u32 %v3906, 16777215
        %v4163 = vand.u32 %v3907, 16777215
        %v4164 = vand.u32 %v3908, 16777215
        %v4165 = vand.u32 %v3909, 16777215
        %v4166 = vand.u32 %v3910, 16777215
        %v4167 = vand.u32 %v3911, 16777215
        %v4168 = vand.u32 %v3912, 16777215
        %v4169 = vand.u32 %v3913, 16777215
        %v4170 = vand.u32 %v3914, 16777215
        %v4171 = vand.u32 %v3915, 16777215
        %v4172 = vand.u32 %v3916, 16777215
        %v4173 = vand.u32 %v3917, 16777215
        %v4174 = vand.u32 %v3918, 16777215
        %v4175 = vand.u32 %v3919, 16777215
        %v4176 = vand.u32 %v3920, 16777215
        %v4177 = vand.u32 %v3921, 16777215
        %v4178 = vand.u32 %v3922, 16777215
        %v4179 = vand.u32 %v3923, 16777215
        %v4180 = vand.u32 %v3924, 16777215
        %v4181 = vand.u32 %v3925, 16777215
        %v4182 = vand.u32 %v3926, 16777215
        %v4183 = vand.u32 %v3927, 16777215
        %v4184 = vand.u32 %v3928, 16777215
        %v4185 = vand.u32 %v3929, 16777215
        %v4186 = vand.u32 %v3930, 16777215
        %v4187 = vand.u32 %v3931, 16777215
        %v4188 = vand.u32 %v3932, 16777215
        %v4189 = vand.u32 %v3933, 16777215
        %v4190 = vand.u32 %v3934, 16777215
        %v4191 = vand.u32 %v3935, 16777215
        %vm4192 = vcmp.ge.s32.totalorder %v3936, 1677722
        %vm4193 = vcmp.ge.s32.totalorder %v3937, 1677722
        %vm4194 = vcmp.ge.s32.totalorder %v3938, 1677722
        %vm4195 = vcmp.ge.s32.totalorder %v3939, 1677722
        %vm4196 = vcmp.ge.s32.totalorder %v3940, 1677722
        %vm4197 = vcmp.ge.s32.totalorder %v3941, 1677722
        %vm4198 = vcmp.ge.s32.totalorder %v3942, 1677722
        %vm4199 = vcmp.ge.s32.totalorder %v3943, 1677722
        %vm4200 = vcmp.ge.s32.totalorder %v3944, 1677722
        %vm4201 = vcmp.ge.s32.totalorder %v3945, 1677722
        %vm4202 = vcmp.ge.s32.totalorder %v3946, 1677722
        %vm4203 = vcmp.ge.s32.totalorder %v3947, 1677722
        %vm4204 = vcmp.ge.s32.totalorder %v3948, 1677722
        %vm4205 = vcmp.ge.s32.totalorder %v3949, 1677722
        %vm4206 = vcmp.ge.s32.totalorder %v3950, 1677722
        %vm4207 = vcmp.ge.s32.totalorder %v3951, 1677722
        %vm4208 = vcmp.ge.s32.totalorder %v3952, 1677722
        %vm4209 = vcmp.ge.s32.totalorder %v3953, 1677722
        %vm4210 = vcmp.ge.s32.totalorder %v3954, 1677722
        %vm4211 = vcmp.ge.s32.totalorder %v3955, 1677722
        %vm4212 = vcmp.ge.s32.totalorder %v3956, 1677722
        %vm4213 = vcmp.ge.s32.totalorder %v3957, 1677722
        %vm4214 = vcmp.ge.s32.totalorder %v3958, 1677722
        %vm4215 = vcmp.ge.s32.totalorder %v3959, 1677722
        %vm4216 = vcmp.ge.s32.totalorder %v3960, 1677722
        %vm4217 = vcmp.ge.s32.totalorder %v3961, 1677722
        %vm4218 = vcmp.ge.s32.totalorder %v3962, 1677722
        %vm4219 = vcmp.ge.s32.totalorder %v3963, 1677722
        %vm4220 = vcmp.ge.s32.totalorder %v3964, 1677722
        %vm4221 = vcmp.ge.s32.totalorder %v3965, 1677722
        %vm4222 = vcmp.ge.s32.totalorder %v3966, 1677722
        %vm4223 = vcmp.ge.s32.totalorder %v3967, 1677722
        %vm4224 = vcmp.ge.s32.totalorder %v3968, 1677722
        %vm4225 = vcmp.ge.s32.totalorder %v3969, 1677722
        %vm4226 = vcmp.ge.s32.totalorder %v3970, 1677722
        %vm4227 = vcmp.ge.s32.totalorder %v3971, 1677722
        %vm4228 = vcmp.ge.s32.totalorder %v3972, 1677722
        %vm4229 = vcmp.ge.s32.totalorder %v3973, 1677722
        %vm4230 = vcmp.ge.s32.totalorder %v3974, 1677722
        %vm4231 = vcmp.ge.s32.totalorder %v3975, 1677722
        %vm4232 = vcmp.ge.s32.totalorder %v3976, 1677722
        %vm4233 = vcmp.ge.s32.totalorder %v3977, 1677722
        %vm4234 = vcmp.ge.s32.totalorder %v3978, 1677722
        %vm4235 = vcmp.ge.s32.totalorder %v3979, 1677722
        %vm4236 = vcmp.ge.s32.totalorder %v3980, 1677722
        %vm4237 = vcmp.ge.s32.totalorder %v3981, 1677722
        %vm4238 = vcmp.ge.s32.totalorder %v3982, 1677722
        %vm4239 = vcmp.ge.s32.totalorder %v3983, 1677722
        %vm4240 = vcmp.ge.s32.totalorder %v3984, 1677722
        %vm4241 = vcmp.ge.s32.totalorder %v3985, 1677722
        %vm4242 = vcmp.ge.s32.totalorder %v3986, 1677722
        %vm4243 = vcmp.ge.s32.totalorder %v3987, 1677722
        %vm4244 = vcmp.ge.s32.totalorder %v3988, 1677722
        %vm4245 = vcmp.ge.s32.totalorder %v3989, 1677722
        %vm4246 = vcmp.ge.s32.totalorder %v3990, 1677722
        %vm4247 = vcmp.ge.s32.totalorder %v3991, 1677722
        %vm4248 = vcmp.ge.s32.totalorder %v3992, 1677722
        %vm4249 = vcmp.ge.s32.totalorder %v3993, 1677722
        %vm4250 = vcmp.ge.s32.totalorder %v3994, 1677722
        %vm4251 = vcmp.ge.s32.totalorder %v3995, 1677722
        %vm4252 = vcmp.ge.s32.totalorder %v3996, 1677722
        %vm4253 = vcmp.ge.s32.totalorder %v3997, 1677722
        %vm4254 = vcmp.ge.s32.totalorder %v3998, 1677722
        %vm4255 = vcmp.ge.s32.totalorder %v3999, 1677722
        %vm4256 = vcmp.ge.s32.totalorder %v4000, 1677722
        %vm4257 = vcmp.ge.s32.totalorder %v4001, 1677722
        %vm4258 = vcmp.ge.s32.totalorder %v4002, 1677722
        %vm4259 = vcmp.ge.s32.totalorder %v4003, 1677722
        %vm4260 = vcmp.ge.s32.totalorder %v4004, 1677722
        %vm4261 = vcmp.ge.s32.totalorder %v4005, 1677722
        %vm4262 = vcmp.ge.s32.totalorder %v4006, 1677722
        %vm4263 = vcmp.ge.s32.totalorder %v4007, 1677722
        %vm4264 = vcmp.ge.s32.totalorder %v4008, 1677722
        %vm4265 = vcmp.ge.s32.totalorder %v4009, 1677722
        %vm4266 = vcmp.ge.s32.totalorder %v4010, 1677722
        %vm4267 = vcmp.ge.s32.totalorder %v4011, 1677722
        %vm4268 = vcmp.ge.s32.totalorder %v4012, 1677722
        %vm4269 = vcmp.ge.s32.totalorder %v4013, 1677722
        %vm4270 = vcmp.ge.s32.totalorder %v4014, 1677722
        %vm4271 = vcmp.ge.s32.totalorder %v4015, 1677722
        %vm4272 = vcmp.ge.s32.totalorder %v4016, 1677722
        %vm4273 = vcmp.ge.s32.totalorder %v4017, 1677722
        %vm4274 = vcmp.ge.s32.totalorder %v4018, 1677722
        %vm4275 = vcmp.ge.s32.totalorder %v4019, 1677722
        %vm4276 = vcmp.ge.s32.totalorder %v4020, 1677722
        %vm4277 = vcmp.ge.s32.totalorder %v4021, 1677722
        %vm4278 = vcmp.ge.s32.totalorder %v4022, 1677722
        %vm4279 = vcmp.ge.s32.totalorder %v4023, 1677722
        %vm4280 = vcmp.ge.s32.totalorder %v4024, 1677722
        %vm4281 = vcmp.ge.s32.totalorder %v4025, 1677722
        %vm4282 = vcmp.ge.s32.totalorder %v4026, 1677722
        %vm4283 = vcmp.ge.s32.totalorder %v4027, 1677722
        %vm4284 = vcmp.ge.s32.totalorder %v4028, 1677722
        %vm4285 = vcmp.ge.s32.totalorder %v4029, 1677722
        %vm4286 = vcmp.ge.s32.totalorder %v4030, 1677722
        %vm4287 = vcmp.ge.s32.totalorder %v4031, 1677722
        %vm4288 = vcmp.ge.s32.totalorder %v4032, 1677722
        %vm4289 = vcmp.ge.s32.totalorder %v4033, 1677722
        %vm4290 = vcmp.ge.s32.totalorder %v4034, 1677722
        %vm4291 = vcmp.ge.s32.totalorder %v4035, 1677722
        %vm4292 = vcmp.ge.s32.totalorder %v4036, 1677722
        %vm4293 = vcmp.ge.s32.totalorder %v4037, 1677722
        %vm4294 = vcmp.ge.s32.totalorder %v4038, 1677722
        %vm4295 = vcmp.ge.s32.totalorder %v4039, 1677722
        %vm4296 = vcmp.ge.s32.totalorder %v4040, 1677722
        %vm4297 = vcmp.ge.s32.totalorder %v4041, 1677722
        %vm4298 = vcmp.ge.s32.totalorder %v4042, 1677722
        %vm4299 = vcmp.ge.s32.totalorder %v4043, 1677722
        %vm4300 = vcmp.ge.s32.totalorder %v4044, 1677722
        %vm4301 = vcmp.ge.s32.totalorder %v4045, 1677722
        %vm4302 = vcmp.ge.s32.totalorder %v4046, 1677722
        %vm4303 = vcmp.ge.s32.totalorder %v4047, 1677722
        %vm4304 = vcmp.ge.s32.totalorder %v4048, 1677722
        %vm4305 = vcmp.ge.s32.totalorder %v4049, 1677722
        %vm4306 = vcmp.ge.s32.totalorder %v4050, 1677722
        %vm4307 = vcmp.ge.s32.totalorder %v4051, 1677722
        %vm4308 = vcmp.ge.s32.totalorder %v4052, 1677722
        %vm4309 = vcmp.ge.s32.totalorder %v4053, 1677722
        %vm4310 = vcmp.ge.s32.totalorder %v4054, 1677722
        %vm4311 = vcmp.ge.s32.totalorder %v4055, 1677722
        %vm4312 = vcmp.ge.s32.totalorder %v4056, 1677722
        %vm4313 = vcmp.ge.s32.totalorder %v4057, 1677722
        %vm4314 = vcmp.ge.s32.totalorder %v4058, 1677722
        %vm4315 = vcmp.ge.s32.totalorder %v4059, 1677722
        %vm4316 = vcmp.ge.s32.totalorder %v4060, 1677722
        %vm4317 = vcmp.ge.s32.totalorder %v4061, 1677722
        %vm4318 = vcmp.ge.s32.totalorder %v4062, 1677722
        %vm4319 = vcmp.ge.s32.totalorder %v4063, 1677722
        %vm4320 = vcmp.ge.s32.totalorder %v4064, 1677722
        %vm4321 = vcmp.ge.s32.totalorder %v4065, 1677722
        %vm4322 = vcmp.ge.s32.totalorder %v4066, 1677722
        %vm4323 = vcmp.ge.s32.totalorder %v4067, 1677722
        %vm4324 = vcmp.ge.s32.totalorder %v4068, 1677722
        %vm4325 = vcmp.ge.s32.totalorder %v4069, 1677722
        %vm4326 = vcmp.ge.s32.totalorder %v4070, 1677722
        %vm4327 = vcmp.ge.s32.totalorder %v4071, 1677722
        %vm4328 = vcmp.ge.s32.totalorder %v4072, 1677722
        %vm4329 = vcmp.ge.s32.totalorder %v4073, 1677722
        %vm4330 = vcmp.ge.s32.totalorder %v4074, 1677722
        %vm4331 = vcmp.ge.s32.totalorder %v4075, 1677722
        %vm4332 = vcmp.ge.s32.totalorder %v4076, 1677722
        %vm4333 = vcmp.ge.s32.totalorder %v4077, 1677722
        %vm4334 = vcmp.ge.s32.totalorder %v4078, 1677722
        %vm4335 = vcmp.ge.s32.totalorder %v4079, 1677722
        %vm4336 = vcmp.ge.s32.totalorder %v4080, 1677722
        %vm4337 = vcmp.ge.s32.totalorder %v4081, 1677722
        %vm4338 = vcmp.ge.s32.totalorder %v4082, 1677722
        %vm4339 = vcmp.ge.s32.totalorder %v4083, 1677722
        %vm4340 = vcmp.ge.s32.totalorder %v4084, 1677722
        %vm4341 = vcmp.ge.s32.totalorder %v4085, 1677722
        %vm4342 = vcmp.ge.s32.totalorder %v4086, 1677722
        %vm4343 = vcmp.ge.s32.totalorder %v4087, 1677722
        %vm4344 = vcmp.ge.s32.totalorder %v4088, 1677722
        %vm4345 = vcmp.ge.s32.totalorder %v4089, 1677722
        %vm4346 = vcmp.ge.s32.totalorder %v4090, 1677722
        %vm4347 = vcmp.ge.s32.totalorder %v4091, 1677722
        %vm4348 = vcmp.ge.s32.totalorder %v4092, 1677722
        %vm4349 = vcmp.ge.s32.totalorder %v4093, 1677722
        %vm4350 = vcmp.ge.s32.totalorder %v4094, 1677722
        %vm4351 = vcmp.ge.s32.totalorder %v4095, 1677722
        %vm4352 = vcmp.ge.s32.totalorder %v4096, 1677722
        %vm4353 = vcmp.ge.s32.totalorder %v4097, 1677722
        %vm4354 = vcmp.ge.s32.totalorder %v4098, 1677722
        %vm4355 = vcmp.ge.s32.totalorder %v4099, 1677722
        %vm4356 = vcmp.ge.s32.totalorder %v4100, 1677722
        %vm4357 = vcmp.ge.s32.totalorder %v4101, 1677722
        %vm4358 = vcmp.ge.s32.totalorder %v4102, 1677722
        %vm4359 = vcmp.ge.s32.totalorder %v4103, 1677722
        %vm4360 = vcmp.ge.s32.totalorder %v4104, 1677722
        %vm4361 = vcmp.ge.s32.totalorder %v4105, 1677722
        %vm4362 = vcmp.ge.s32.totalorder %v4106, 1677722
        %vm4363 = vcmp.ge.s32.totalorder %v4107, 1677722
        %vm4364 = vcmp.ge.s32.totalorder %v4108, 1677722
        %vm4365 = vcmp.ge.s32.totalorder %v4109, 1677722
        %vm4366 = vcmp.ge.s32.totalorder %v4110, 1677722
        %vm4367 = vcmp.ge.s32.totalorder %v4111, 1677722
        %vm4368 = vcmp.ge.s32.totalorder %v4112, 1677722
        %vm4369 = vcmp.ge.s32.totalorder %v4113, 1677722
        %vm4370 = vcmp.ge.s32.totalorder %v4114, 1677722
        %vm4371 = vcmp.ge.s32.totalorder %v4115, 1677722
        %vm4372 = vcmp.ge.s32.totalorder %v4116, 1677722
        %vm4373 = vcmp.ge.s32.totalorder %v4117, 1677722
        %vm4374 = vcmp.ge.s32.totalorder %v4118, 1677722
        %vm4375 = vcmp.ge.s32.totalorder %v4119, 1677722
        %vm4376 = vcmp.ge.s32.totalorder %v4120, 1677722
        %vm4377 = vcmp.ge.s32.totalorder %v4121, 1677722
        %vm4378 = vcmp.ge.s32.totalorder %v4122, 1677722
        %vm4379 = vcmp.ge.s32.totalorder %v4123, 1677722
        %vm4380 = vcmp.ge.s32.totalorder %v4124, 1677722
        %vm4381 = vcmp.ge.s32.totalorder %v4125, 1677722
        %vm4382 = vcmp.ge.s32.totalorder %v4126, 1677722
        %vm4383 = vcmp.ge.s32.totalorder %v4127, 1677722
        %vm4384 = vcmp.ge.s32.totalorder %v4128, 1677722
        %vm4385 = vcmp.ge.s32.totalorder %v4129, 1677722
        %vm4386 = vcmp.ge.s32.totalorder %v4130, 1677722
        %vm4387 = vcmp.ge.s32.totalorder %v4131, 1677722
        %vm4388 = vcmp.ge.s32.totalorder %v4132, 1677722
        %vm4389 = vcmp.ge.s32.totalorder %v4133, 1677722
        %vm4390 = vcmp.ge.s32.totalorder %v4134, 1677722
        %vm4391 = vcmp.ge.s32.totalorder %v4135, 1677722
        %vm4392 = vcmp.ge.s32.totalorder %v4136, 1677722
        %vm4393 = vcmp.ge.s32.totalorder %v4137, 1677722
        %vm4394 = vcmp.ge.s32.totalorder %v4138, 1677722
        %vm4395 = vcmp.ge.s32.totalorder %v4139, 1677722
        %vm4396 = vcmp.ge.s32.totalorder %v4140, 1677722
        %vm4397 = vcmp.ge.s32.totalorder %v4141, 1677722
        %vm4398 = vcmp.ge.s32.totalorder %v4142, 1677722
        %vm4399 = vcmp.ge.s32.totalorder %v4143, 1677722
        %vm4400 = vcmp.ge.s32.totalorder %v4144, 1677722
        %vm4401 = vcmp.ge.s32.totalorder %v4145, 1677722
        %vm4402 = vcmp.ge.s32.totalorder %v4146, 1677722
        %vm4403 = vcmp.ge.s32.totalorder %v4147, 1677722
        %vm4404 = vcmp.ge.s32.totalorder %v4148, 1677722
        %vm4405 = vcmp.ge.s32.totalorder %v4149, 1677722
        %vm4406 = vcmp.ge.s32.totalorder %v4150, 1677722
        %vm4407 = vcmp.ge.s32.totalorder %v4151, 1677722
        %vm4408 = vcmp.ge.s32.totalorder %v4152, 1677722
        %vm4409 = vcmp.ge.s32.totalorder %v4153, 1677722
        %vm4410 = vcmp.ge.s32.totalorder %v4154, 1677722
        %vm4411 = vcmp.ge.s32.totalorder %v4155, 1677722
        %vm4412 = vcmp.ge.s32.totalorder %v4156, 1677722
        %vm4413 = vcmp.ge.s32.totalorder %v4157, 1677722
        %vm4414 = vcmp.ge.s32.totalorder %v4158, 1677722
        %vm4415 = vcmp.ge.s32.totalorder %v4159, 1677722
        %vm4416 = vcmp.ge.s32.totalorder %v4160, 1677722
        %vm4417 = vcmp.ge.s32.totalorder %v4161, 1677722
        %vm4418 = vcmp.ge.s32.totalorder %v4162, 1677722
        %vm4419 = vcmp.ge.s32.totalorder %v4163, 1677722
        %vm4420 = vcmp.ge.s32.totalorder %v4164, 1677722
        %vm4421 = vcmp.ge.s32.totalorder %v4165, 1677722
        %vm4422 = vcmp.ge.s32.totalorder %v4166, 1677722
        %vm4423 = vcmp.ge.s32.totalorder %v4167, 1677722
        %vm4424 = vcmp.ge.s32.totalorder %v4168, 1677722
        %vm4425 = vcmp.ge.s32.totalorder %v4169, 1677722
        %vm4426 = vcmp.ge.s32.totalorder %v4170, 1677722
        %vm4427 = vcmp.ge.s32.totalorder %v4171, 1677722
        %vm4428 = vcmp.ge.s32.totalorder %v4172, 1677722
        %vm4429 = vcmp.ge.s32.totalorder %v4173, 1677722
        %vm4430 = vcmp.ge.s32.totalorder %v4174, 1677722
        %vm4431 = vcmp.ge.s32.totalorder %v4175, 1677722
        %vm4432 = vcmp.ge.s32.totalorder %v4176, 1677722
        %vm4433 = vcmp.ge.s32.totalorder %v4177, 1677722
        %vm4434 = vcmp.ge.s32.totalorder %v4178, 1677722
        %vm4435 = vcmp.ge.s32.totalorder %v4179, 1677722
        %vm4436 = vcmp.ge.s32.totalorder %v4180, 1677722
        %vm4437 = vcmp.ge.s32.totalorder %v4181, 1677722
        %vm4438 = vcmp.ge.s32.totalorder %v4182, 1677722
        %vm4439 = vcmp.ge.s32.totalorder %v4183, 1677722
        %vm4440 = vcmp.ge.s32.totalorder %v4184, 1677722
        %vm4441 = vcmp.ge.s32.totalorder %v4185, 1677722
        %vm4442 = vcmp.ge.s32.totalorder %v4186, 1677722
        %vm4443 = vcmp.ge.s32.totalorder %v4187, 1677722
        %vm4444 = vcmp.ge.s32.totalorder %v4188, 1677722
        %vm4445 = vcmp.ge.s32.totalorder %v4189, 1677722
        %vm4446 = vcmp.ge.s32.totalorder %v4190, 1677722
        %vm4447 = vcmp.ge.s32.totalorder %v4191, 1677722
        %v4448 = vld [vmem:[%s136] sm:$0xff]
        %v4449 = vld [vmem:[%s136 + $0x8] sm:$0xff]
        %v4450 = vld [vmem:[%s136 + $0x10] sm:$0xff]
        %v4451 = vld [vmem:[%s136 + $0x18] sm:$0xff]
        %v4452 = vld [vmem:[%s136 + $0x20] sm:$0xff]
        %v4453 = vld [vmem:[%s136 + $0x28] sm:$0xff]
        %v4454 = vld [vmem:[%s136 + $0x30] sm:$0xff]
        %v4455 = vld [vmem:[%s136 + $0x38] sm:$0xff]
        %v4456 = vld [vmem:[%s136 + $0x40] sm:$0xff]
        %v4457 = vld [vmem:[%s136 + $0x48] sm:$0xff]
        %v4458 = vld [vmem:[%s136 + $0x50] sm:$0xff]
        %v4459 = vld [vmem:[%s136 + $0x58] sm:$0xff]
        %v4460 = vld [vmem:[%s136 + $0x60] sm:$0xff]
        %v4461 = vld [vmem:[%s136 + $0x68] sm:$0xff]
        %v4462 = vld [vmem:[%s136 + $0x70] sm:$0xff]
        %v4463 = vld [vmem:[%s136 + $0x78] sm:$0xff]
        %v4464 = vld [vmem:[%s136 + $0x80] sm:$0xff]
        %v4465 = vld [vmem:[%s136 + $0x88] sm:$0xff]
        %v4466 = vld [vmem:[%s136 + $0x90] sm:$0xff]
        %v4467 = vld [vmem:[%s136 + $0x98] sm:$0xff]
        %v4468 = vld [vmem:[%s136 + $0xa0] sm:$0xff]
        %v4469 = vld [vmem:[%s136 + $0xa8] sm:$0xff]
        %v4470 = vld [vmem:[%s136 + $0xb0] sm:$0xff]
        %v4471 = vld [vmem:[%s136 + $0xb8] sm:$0xff]
        %v4472 = vld [vmem:[%s136 + $0xc0] sm:$0xff]
        %v4473 = vld [vmem:[%s136 + $0xc8] sm:$0xff]
        %v4474 = vld [vmem:[%s136 + $0xd0] sm:$0xff]
        %v4475 = vld [vmem:[%s136 + $0xd8] sm:$0xff]
        %v4476 = vld [vmem:[%s136 + $0xe0] sm:$0xff]
        %v4477 = vld [vmem:[%s136 + $0xe8] sm:$0xff]
        %v4478 = vld [vmem:[%s136 + $0xf0] sm:$0xff]
        %v4479 = vld [vmem:[%s136 + $0xf8] sm:$0xff]
        %v4480 = vld [vmem:[%s136 + $0x100] sm:$0xff]
        %v4481 = vld [vmem:[%s136 + $0x108] sm:$0xff]
        %v4482 = vld [vmem:[%s136 + $0x110] sm:$0xff]
        %v4483 = vld [vmem:[%s136 + $0x118] sm:$0xff]
        %v4484 = vld [vmem:[%s136 + $0x120] sm:$0xff]
        %v4485 = vld [vmem:[%s136 + $0x128] sm:$0xff]
        %v4486 = vld [vmem:[%s136 + $0x130] sm:$0xff]
        %v4487 = vld [vmem:[%s136 + $0x138] sm:$0xff]
        %v4488 = vld [vmem:[%s136 + $0x140] sm:$0xff]
        %v4489 = vld [vmem:[%s136 + $0x148] sm:$0xff]
        %v4490 = vld [vmem:[%s136 + $0x150] sm:$0xff]
        %v4491 = vld [vmem:[%s136 + $0x158] sm:$0xff]
        %v4492 = vld [vmem:[%s136 + $0x160] sm:$0xff]
        %v4493 = vld [vmem:[%s136 + $0x168] sm:$0xff]
        %v4494 = vld [vmem:[%s136 + $0x170] sm:$0xff]
        %v4495 = vld [vmem:[%s136 + $0x178] sm:$0xff]
        %v4496 = vld [vmem:[%s136 + $0x180] sm:$0xff]
        %v4497 = vld [vmem:[%s136 + $0x188] sm:$0xff]
        %v4498 = vld [vmem:[%s136 + $0x190] sm:$0xff]
        %v4499 = vld [vmem:[%s136 + $0x198] sm:$0xff]
        %v4500 = vld [vmem:[%s136 + $0x1a0] sm:$0xff]
        %v4501 = vld [vmem:[%s136 + $0x1a8] sm:$0xff]
        %v4502 = vld [vmem:[%s136 + $0x1b0] sm:$0xff]
        %v4503 = vld [vmem:[%s136 + $0x1b8] sm:$0xff]
        %v4504 = vld [vmem:[%s136 + $0x1c0] sm:$0xff]
        %v4505 = vld [vmem:[%s136 + $0x1c8] sm:$0xff]
        %v4506 = vld [vmem:[%s136 + $0x1d0] sm:$0xff]
        %v4507 = vld [vmem:[%s136 + $0x1d8] sm:$0xff]
        %v4508 = vld [vmem:[%s136 + $0x1e0] sm:$0xff]
        %v4509 = vld [vmem:[%s136 + $0x1e8] sm:$0xff]
        %v4510 = vld [vmem:[%s136 + $0x1f0] sm:$0xff]
        %v4511 = vld [vmem:[%s136 + $0x1f8] sm:$0xff]
        %v4512 = vld [vmem:[%s136 + $0x200] sm:$0xff]
        %v4513 = vld [vmem:[%s136 + $0x208] sm:$0xff]
        %v4514 = vld [vmem:[%s136 + $0x210] sm:$0xff]
        %v4515 = vld [vmem:[%s136 + $0x218] sm:$0xff]
        %v4516 = vld [vmem:[%s136 + $0x220] sm:$0xff]
        %v4517 = vld [vmem:[%s136 + $0x228] sm:$0xff]
        %v4518 = vld [vmem:[%s136 + $0x230] sm:$0xff]
        %v4519 = vld [vmem:[%s136 + $0x238] sm:$0xff]
        %v4520 = vld [vmem:[%s136 + $0x240] sm:$0xff]
        %v4521 = vld [vmem:[%s136 + $0x248] sm:$0xff]
        %v4522 = vld [vmem:[%s136 + $0x250] sm:$0xff]
        %v4523 = vld [vmem:[%s136 + $0x258] sm:$0xff]
        %v4524 = vld [vmem:[%s136 + $0x260] sm:$0xff]
        %v4525 = vld [vmem:[%s136 + $0x268] sm:$0xff]
        %v4526 = vld [vmem:[%s136 + $0x270] sm:$0xff]
        %v4527 = vld [vmem:[%s136 + $0x278] sm:$0xff]
        %v4528 = vld [vmem:[%s136 + $0x280] sm:$0xff]
        %v4529 = vld [vmem:[%s136 + $0x288] sm:$0xff]
        %v4530 = vld [vmem:[%s136 + $0x290] sm:$0xff]
        %v4531 = vld [vmem:[%s136 + $0x298] sm:$0xff]
        %v4532 = vld [vmem:[%s136 + $0x2a0] sm:$0xff]
        %v4533 = vld [vmem:[%s136 + $0x2a8] sm:$0xff]
        %v4534 = vld [vmem:[%s136 + $0x2b0] sm:$0xff]
        %v4535 = vld [vmem:[%s136 + $0x2b8] sm:$0xff]
        %v4536 = vld [vmem:[%s136 + $0x2c0] sm:$0xff]
        %v4537 = vld [vmem:[%s136 + $0x2c8] sm:$0xff]
        %v4538 = vld [vmem:[%s136 + $0x2d0] sm:$0xff]
        %v4539 = vld [vmem:[%s136 + $0x2d8] sm:$0xff]
        %v4540 = vld [vmem:[%s136 + $0x2e0] sm:$0xff]
        %v4541 = vld [vmem:[%s136 + $0x2e8] sm:$0xff]
        %v4542 = vld [vmem:[%s136 + $0x2f0] sm:$0xff]
        %v4543 = vld [vmem:[%s136 + $0x2f8] sm:$0xff]
        %v4544 = vld [vmem:[%s136 + $0x300] sm:$0xff]
        %v4545 = vld [vmem:[%s136 + $0x308] sm:$0xff]
        %v4546 = vld [vmem:[%s136 + $0x310] sm:$0xff]
        %v4547 = vld [vmem:[%s136 + $0x318] sm:$0xff]
        %v4548 = vld [vmem:[%s136 + $0x320] sm:$0xff]
        %v4549 = vld [vmem:[%s136 + $0x328] sm:$0xff]
        %v4550 = vld [vmem:[%s136 + $0x330] sm:$0xff]
        %v4551 = vld [vmem:[%s136 + $0x338] sm:$0xff]
        %v4552 = vld [vmem:[%s136 + $0x340] sm:$0xff]
        %v4553 = vld [vmem:[%s136 + $0x348] sm:$0xff]
        %v4554 = vld [vmem:[%s136 + $0x350] sm:$0xff]
        %v4555 = vld [vmem:[%s136 + $0x358] sm:$0xff]
        %v4556 = vld [vmem:[%s136 + $0x360] sm:$0xff]
        %v4557 = vld [vmem:[%s136 + $0x368] sm:$0xff]
        %v4558 = vld [vmem:[%s136 + $0x370] sm:$0xff]
        %v4559 = vld [vmem:[%s136 + $0x378] sm:$0xff]
        %v4560 = vld [vmem:[%s136 + $0x380] sm:$0xff]
        %v4561 = vld [vmem:[%s136 + $0x388] sm:$0xff]
        %v4562 = vld [vmem:[%s136 + $0x390] sm:$0xff]
        %v4563 = vld [vmem:[%s136 + $0x398] sm:$0xff]
        %v4564 = vld [vmem:[%s136 + $0x3a0] sm:$0xff]
        %v4565 = vld [vmem:[%s136 + $0x3a8] sm:$0xff]
        %v4566 = vld [vmem:[%s136 + $0x3b0] sm:$0xff]
        %v4567 = vld [vmem:[%s136 + $0x3b8] sm:$0xff]
        %v4568 = vld [vmem:[%s136 + $0x3c0] sm:$0xff]
        %v4569 = vld [vmem:[%s136 + $0x3c8] sm:$0xff]
        %v4570 = vld [vmem:[%s136 + $0x3d0] sm:$0xff]
        %v4571 = vld [vmem:[%s136 + $0x3d8] sm:$0xff]
        %v4572 = vld [vmem:[%s136 + $0x3e0] sm:$0xff]
        %v4573 = vld [vmem:[%s136 + $0x3e8] sm:$0xff]
        %v4574 = vld [vmem:[%s136 + $0x3f0] sm:$0xff]
        %v4575 = vld [vmem:[%s136 + $0x3f8] sm:$0xff]
        %v4576 = vld [vmem:[%s136 + $0x400] sm:$0xff]
        %v4577 = vld [vmem:[%s136 + $0x408] sm:$0xff]
        %v4578 = vld [vmem:[%s136 + $0x410] sm:$0xff]
        %v4579 = vld [vmem:[%s136 + $0x418] sm:$0xff]
        %v4580 = vld [vmem:[%s136 + $0x420] sm:$0xff]
        %v4581 = vld [vmem:[%s136 + $0x428] sm:$0xff]
        %v4582 = vld [vmem:[%s136 + $0x430] sm:$0xff]
        %v4583 = vld [vmem:[%s136 + $0x438] sm:$0xff]
        %v4584 = vld [vmem:[%s136 + $0x440] sm:$0xff]
        %v4585 = vld [vmem:[%s136 + $0x448] sm:$0xff]
        %v4586 = vld [vmem:[%s136 + $0x450] sm:$0xff]
        %v4587 = vld [vmem:[%s136 + $0x458] sm:$0xff]
        %v4588 = vld [vmem:[%s136 + $0x460] sm:$0xff]
        %v4589 = vld [vmem:[%s136 + $0x468] sm:$0xff]
        %v4590 = vld [vmem:[%s136 + $0x470] sm:$0xff]
        %v4591 = vld [vmem:[%s136 + $0x478] sm:$0xff]
        %v4592 = vld [vmem:[%s136 + $0x480] sm:$0xff]
        %v4593 = vld [vmem:[%s136 + $0x488] sm:$0xff]
        %v4594 = vld [vmem:[%s136 + $0x490] sm:$0xff]
        %v4595 = vld [vmem:[%s136 + $0x498] sm:$0xff]
        %v4596 = vld [vmem:[%s136 + $0x4a0] sm:$0xff]
        %v4597 = vld [vmem:[%s136 + $0x4a8] sm:$0xff]
        %v4598 = vld [vmem:[%s136 + $0x4b0] sm:$0xff]
        %v4599 = vld [vmem:[%s136 + $0x4b8] sm:$0xff]
        %v4600 = vld [vmem:[%s136 + $0x4c0] sm:$0xff]
        %v4601 = vld [vmem:[%s136 + $0x4c8] sm:$0xff]
        %v4602 = vld [vmem:[%s136 + $0x4d0] sm:$0xff]
        %v4603 = vld [vmem:[%s136 + $0x4d8] sm:$0xff]
        %v4604 = vld [vmem:[%s136 + $0x4e0] sm:$0xff]
        %v4605 = vld [vmem:[%s136 + $0x4e8] sm:$0xff]
        %v4606 = vld [vmem:[%s136 + $0x4f0] sm:$0xff]
        %v4607 = vld [vmem:[%s136 + $0x4f8] sm:$0xff]
        %v4608 = vld [vmem:[%s136 + $0x500] sm:$0xff]
        %v4609 = vld [vmem:[%s136 + $0x508] sm:$0xff]
        %v4610 = vld [vmem:[%s136 + $0x510] sm:$0xff]
        %v4611 = vld [vmem:[%s136 + $0x518] sm:$0xff]
        %v4612 = vld [vmem:[%s136 + $0x520] sm:$0xff]
        %v4613 = vld [vmem:[%s136 + $0x528] sm:$0xff]
        %v4614 = vld [vmem:[%s136 + $0x530] sm:$0xff]
        %v4615 = vld [vmem:[%s136 + $0x538] sm:$0xff]
        %v4616 = vld [vmem:[%s136 + $0x540] sm:$0xff]
        %v4617 = vld [vmem:[%s136 + $0x548] sm:$0xff]
        %v4618 = vld [vmem:[%s136 + $0x550] sm:$0xff]
        %v4619 = vld [vmem:[%s136 + $0x558] sm:$0xff]
        %v4620 = vld [vmem:[%s136 + $0x560] sm:$0xff]
        %v4621 = vld [vmem:[%s136 + $0x568] sm:$0xff]
        %v4622 = vld [vmem:[%s136 + $0x570] sm:$0xff]
        %v4623 = vld [vmem:[%s136 + $0x578] sm:$0xff]
        %v4624 = vld [vmem:[%s136 + $0x580] sm:$0xff]
        %v4625 = vld [vmem:[%s136 + $0x588] sm:$0xff]
        %v4626 = vld [vmem:[%s136 + $0x590] sm:$0xff]
        %v4627 = vld [vmem:[%s136 + $0x598] sm:$0xff]
        %v4628 = vld [vmem:[%s136 + $0x5a0] sm:$0xff]
        %v4629 = vld [vmem:[%s136 + $0x5a8] sm:$0xff]
        %v4630 = vld [vmem:[%s136 + $0x5b0] sm:$0xff]
        %v4631 = vld [vmem:[%s136 + $0x5b8] sm:$0xff]
        %v4632 = vld [vmem:[%s136 + $0x5c0] sm:$0xff]
        %v4633 = vld [vmem:[%s136 + $0x5c8] sm:$0xff]
        %v4634 = vld [vmem:[%s136 + $0x5d0] sm:$0xff]
        %v4635 = vld [vmem:[%s136 + $0x5d8] sm:$0xff]
        %v4636 = vld [vmem:[%s136 + $0x5e0] sm:$0xff]
        %v4637 = vld [vmem:[%s136 + $0x5e8] sm:$0xff]
        %v4638 = vld [vmem:[%s136 + $0x5f0] sm:$0xff]
        %v4639 = vld [vmem:[%s136 + $0x5f8] sm:$0xff]
        %v4640 = vld [vmem:[%s136 + $0x600] sm:$0xff]
        %v4641 = vld [vmem:[%s136 + $0x608] sm:$0xff]
        %v4642 = vld [vmem:[%s136 + $0x610] sm:$0xff]
        %v4643 = vld [vmem:[%s136 + $0x618] sm:$0xff]
        %v4644 = vld [vmem:[%s136 + $0x620] sm:$0xff]
        %v4645 = vld [vmem:[%s136 + $0x628] sm:$0xff]
        %v4646 = vld [vmem:[%s136 + $0x630] sm:$0xff]
        %v4647 = vld [vmem:[%s136 + $0x638] sm:$0xff]
        %v4648 = vld [vmem:[%s136 + $0x640] sm:$0xff]
        %v4649 = vld [vmem:[%s136 + $0x648] sm:$0xff]
        %v4650 = vld [vmem:[%s136 + $0x650] sm:$0xff]
        %v4651 = vld [vmem:[%s136 + $0x658] sm:$0xff]
        %v4652 = vld [vmem:[%s136 + $0x660] sm:$0xff]
        %v4653 = vld [vmem:[%s136 + $0x668] sm:$0xff]
        %v4654 = vld [vmem:[%s136 + $0x670] sm:$0xff]
        %v4655 = vld [vmem:[%s136 + $0x678] sm:$0xff]
        %v4656 = vld [vmem:[%s136 + $0x680] sm:$0xff]
        %v4657 = vld [vmem:[%s136 + $0x688] sm:$0xff]
        %v4658 = vld [vmem:[%s136 + $0x690] sm:$0xff]
        %v4659 = vld [vmem:[%s136 + $0x698] sm:$0xff]
        %v4660 = vld [vmem:[%s136 + $0x6a0] sm:$0xff]
        %v4661 = vld [vmem:[%s136 + $0x6a8] sm:$0xff]
        %v4662 = vld [vmem:[%s136 + $0x6b0] sm:$0xff]
        %v4663 = vld [vmem:[%s136 + $0x6b8] sm:$0xff]
        %v4664 = vld [vmem:[%s136 + $0x6c0] sm:$0xff]
        %v4665 = vld [vmem:[%s136 + $0x6c8] sm:$0xff]
        %v4666 = vld [vmem:[%s136 + $0x6d0] sm:$0xff]
        %v4667 = vld [vmem:[%s136 + $0x6d8] sm:$0xff]
        %v4668 = vld [vmem:[%s136 + $0x6e0] sm:$0xff]
        %v4669 = vld [vmem:[%s136 + $0x6e8] sm:$0xff]
        %v4670 = vld [vmem:[%s136 + $0x6f0] sm:$0xff]
        %v4671 = vld [vmem:[%s136 + $0x6f8] sm:$0xff]
        %v4672 = vld [vmem:[%s136 + $0x700] sm:$0xff]
        %v4673 = vld [vmem:[%s136 + $0x708] sm:$0xff]
        %v4674 = vld [vmem:[%s136 + $0x710] sm:$0xff]
        %v4675 = vld [vmem:[%s136 + $0x718] sm:$0xff]
        %v4676 = vld [vmem:[%s136 + $0x720] sm:$0xff]
        %v4677 = vld [vmem:[%s136 + $0x728] sm:$0xff]
        %v4678 = vld [vmem:[%s136 + $0x730] sm:$0xff]
        %v4679 = vld [vmem:[%s136 + $0x738] sm:$0xff]
        %v4680 = vld [vmem:[%s136 + $0x740] sm:$0xff]
        %v4681 = vld [vmem:[%s136 + $0x748] sm:$0xff]
        %v4682 = vld [vmem:[%s136 + $0x750] sm:$0xff]
        %v4683 = vld [vmem:[%s136 + $0x758] sm:$0xff]
        %v4684 = vld [vmem:[%s136 + $0x760] sm:$0xff]
        %v4685 = vld [vmem:[%s136 + $0x768] sm:$0xff]
        %v4686 = vld [vmem:[%s136 + $0x770] sm:$0xff]
        %v4687 = vld [vmem:[%s136 + $0x778] sm:$0xff]
        %v4688 = vld [vmem:[%s136 + $0x780] sm:$0xff]
        %v4689 = vld [vmem:[%s136 + $0x788] sm:$0xff]
        %v4690 = vld [vmem:[%s136 + $0x790] sm:$0xff]
        %v4691 = vld [vmem:[%s136 + $0x798] sm:$0xff]
        %v4692 = vld [vmem:[%s136 + $0x7a0] sm:$0xff]
        %v4693 = vld [vmem:[%s136 + $0x7a8] sm:$0xff]
        %v4694 = vld [vmem:[%s136 + $0x7b0] sm:$0xff]
        %v4695 = vld [vmem:[%s136 + $0x7b8] sm:$0xff]
        %v4696 = vld [vmem:[%s136 + $0x7c0] sm:$0xff]
        %v4697 = vld [vmem:[%s136 + $0x7c8] sm:$0xff]
        %v4698 = vld [vmem:[%s136 + $0x7d0] sm:$0xff]
        %v4699 = vld [vmem:[%s136 + $0x7d8] sm:$0xff]
        %v4700 = vld [vmem:[%s136 + $0x7e0] sm:$0xff]
        %v4701 = vld [vmem:[%s136 + $0x7e8] sm:$0xff]
        %v4702 = vld [vmem:[%s136 + $0x7f0] sm:$0xff]
        %v4703 = vld [vmem:[%s136 + $0x7f8] sm:$0xff]
        %v4704 = vmul.f32 %v4448, 1.1111112
        %v4705 = vmul.f32 %v4449, 1.1111112
        %v4706 = vmul.f32 %v4450, 1.1111112
        %v4707 = vmul.f32 %v4451, 1.1111112
        %v4708 = vmul.f32 %v4452, 1.1111112
        %v4709 = vmul.f32 %v4453, 1.1111112
        %v4710 = vmul.f32 %v4454, 1.1111112
        %v4711 = vmul.f32 %v4455, 1.1111112
        %v4712 = vmul.f32 %v4456, 1.1111112
        %v4713 = vmul.f32 %v4457, 1.1111112
        %v4714 = vmul.f32 %v4458, 1.1111112
        %v4715 = vmul.f32 %v4459, 1.1111112
        %v4716 = vmul.f32 %v4460, 1.1111112
        %v4717 = vmul.f32 %v4461, 1.1111112
        %v4718 = vmul.f32 %v4462, 1.1111112
        %v4719 = vmul.f32 %v4463, 1.1111112
        %v4720 = vmul.f32 %v4464, 1.1111112
        %v4721 = vmul.f32 %v4465, 1.1111112
        %v4722 = vmul.f32 %v4466, 1.1111112
        %v4723 = vmul.f32 %v4467, 1.1111112
        %v4724 = vmul.f32 %v4468, 1.1111112
        %v4725 = vmul.f32 %v4469, 1.1111112
        %v4726 = vmul.f32 %v4470, 1.1111112
        %v4727 = vmul.f32 %v4471, 1.1111112
        %v4728 = vmul.f32 %v4472, 1.1111112
        %v4729 = vmul.f32 %v4473, 1.1111112
        %v4730 = vmul.f32 %v4474, 1.1111112
        %v4731 = vmul.f32 %v4475, 1.1111112
        %v4732 = vmul.f32 %v4476, 1.1111112
        %v4733 = vmul.f32 %v4477, 1.1111112
        %v4734 = vmul.f32 %v4478, 1.1111112
        %v4735 = vmul.f32 %v4479, 1.1111112
        %v4736 = vmul.f32 %v4480, 1.1111112
        %v4737 = vmul.f32 %v4481, 1.1111112
        %v4738 = vmul.f32 %v4482, 1.1111112
        %v4739 = vmul.f32 %v4483, 1.1111112
        %v4740 = vmul.f32 %v4484, 1.1111112
        %v4741 = vmul.f32 %v4485, 1.1111112
        %v4742 = vmul.f32 %v4486, 1.1111112
        %v4743 = vmul.f32 %v4487, 1.1111112
        %v4744 = vmul.f32 %v4488, 1.1111112
        %v4745 = vmul.f32 %v4489, 1.1111112
        %v4746 = vmul.f32 %v4490, 1.1111112
        %v4747 = vmul.f32 %v4491, 1.1111112
        %v4748 = vmul.f32 %v4492, 1.1111112
        %v4749 = vmul.f32 %v4493, 1.1111112
        %v4750 = vmul.f32 %v4494, 1.1111112
        %v4751 = vmul.f32 %v4495, 1.1111112
        %v4752 = vmul.f32 %v4496, 1.1111112
        %v4753 = vmul.f32 %v4497, 1.1111112
        %v4754 = vmul.f32 %v4498, 1.1111112
        %v4755 = vmul.f32 %v4499, 1.1111112
        %v4756 = vmul.f32 %v4500, 1.1111112
        %v4757 = vmul.f32 %v4501, 1.1111112
        %v4758 = vmul.f32 %v4502, 1.1111112
        %v4759 = vmul.f32 %v4503, 1.1111112
        %v4760 = vmul.f32 %v4504, 1.1111112
        %v4761 = vmul.f32 %v4505, 1.1111112
        %v4762 = vmul.f32 %v4506, 1.1111112
        %v4763 = vmul.f32 %v4507, 1.1111112
        %v4764 = vmul.f32 %v4508, 1.1111112
        %v4765 = vmul.f32 %v4509, 1.1111112
        %v4766 = vmul.f32 %v4510, 1.1111112
        %v4767 = vmul.f32 %v4511, 1.1111112
        %v4768 = vmul.f32 %v4512, 1.1111112
        %v4769 = vmul.f32 %v4513, 1.1111112
        %v4770 = vmul.f32 %v4514, 1.1111112
        %v4771 = vmul.f32 %v4515, 1.1111112
        %v4772 = vmul.f32 %v4516, 1.1111112
        %v4773 = vmul.f32 %v4517, 1.1111112
        %v4774 = vmul.f32 %v4518, 1.1111112
        %v4775 = vmul.f32 %v4519, 1.1111112
        %v4776 = vmul.f32 %v4520, 1.1111112
        %v4777 = vmul.f32 %v4521, 1.1111112
        %v4778 = vmul.f32 %v4522, 1.1111112
        %v4779 = vmul.f32 %v4523, 1.1111112
        %v4780 = vmul.f32 %v4524, 1.1111112
        %v4781 = vmul.f32 %v4525, 1.1111112
        %v4782 = vmul.f32 %v4526, 1.1111112
        %v4783 = vmul.f32 %v4527, 1.1111112
        %v4784 = vmul.f32 %v4528, 1.1111112
        %v4785 = vmul.f32 %v4529, 1.1111112
        %v4786 = vmul.f32 %v4530, 1.1111112
        %v4787 = vmul.f32 %v4531, 1.1111112
        %v4788 = vmul.f32 %v4532, 1.1111112
        %v4789 = vmul.f32 %v4533, 1.1111112
        %v4790 = vmul.f32 %v4534, 1.1111112
        %v4791 = vmul.f32 %v4535, 1.1111112
        %v4792 = vmul.f32 %v4536, 1.1111112
        %v4793 = vmul.f32 %v4537, 1.1111112
        %v4794 = vmul.f32 %v4538, 1.1111112
        %v4795 = vmul.f32 %v4539, 1.1111112
        %v4796 = vmul.f32 %v4540, 1.1111112
        %v4797 = vmul.f32 %v4541, 1.1111112
        %v4798 = vmul.f32 %v4542, 1.1111112
        %v4799 = vmul.f32 %v4543, 1.1111112
        %v4800 = vmul.f32 %v4544, 1.1111112
        %v4801 = vmul.f32 %v4545, 1.1111112
        %v4802 = vmul.f32 %v4546, 1.1111112
        %v4803 = vmul.f32 %v4547, 1.1111112
        %v4804 = vmul.f32 %v4548, 1.1111112
        %v4805 = vmul.f32 %v4549, 1.1111112
        %v4806 = vmul.f32 %v4550, 1.1111112
        %v4807 = vmul.f32 %v4551, 1.1111112
        %v4808 = vmul.f32 %v4552, 1.1111112
        %v4809 = vmul.f32 %v4553, 1.1111112
        %v4810 = vmul.f32 %v4554, 1.1111112
        %v4811 = vmul.f32 %v4555, 1.1111112
        %v4812 = vmul.f32 %v4556, 1.1111112
        %v4813 = vmul.f32 %v4557, 1.1111112
        %v4814 = vmul.f32 %v4558, 1.1111112
        %v4815 = vmul.f32 %v4559, 1.1111112
        %v4816 = vmul.f32 %v4560, 1.1111112
        %v4817 = vmul.f32 %v4561, 1.1111112
        %v4818 = vmul.f32 %v4562, 1.1111112
        %v4819 = vmul.f32 %v4563, 1.1111112
        %v4820 = vmul.f32 %v4564, 1.1111112
        %v4821 = vmul.f32 %v4565, 1.1111112
        %v4822 = vmul.f32 %v4566, 1.1111112
        %v4823 = vmul.f32 %v4567, 1.1111112
        %v4824 = vmul.f32 %v4568, 1.1111112
        %v4825 = vmul.f32 %v4569, 1.1111112
        %v4826 = vmul.f32 %v4570, 1.1111112
        %v4827 = vmul.f32 %v4571, 1.1111112
        %v4828 = vmul.f32 %v4572, 1.1111112
        %v4829 = vmul.f32 %v4573, 1.1111112
        %v4830 = vmul.f32 %v4574, 1.1111112
        %v4831 = vmul.f32 %v4575, 1.1111112
        %v4832 = vmul.f32 %v4576, 1.1111112
        %v4833 = vmul.f32 %v4577, 1.1111112
        %v4834 = vmul.f32 %v4578, 1.1111112
        %v4835 = vmul.f32 %v4579, 1.1111112
        %v4836 = vmul.f32 %v4580, 1.1111112
        %v4837 = vmul.f32 %v4581, 1.1111112
        %v4838 = vmul.f32 %v4582, 1.1111112
        %v4839 = vmul.f32 %v4583, 1.1111112
        %v4840 = vmul.f32 %v4584, 1.1111112
        %v4841 = vmul.f32 %v4585, 1.1111112
        %v4842 = vmul.f32 %v4586, 1.1111112
        %v4843 = vmul.f32 %v4587, 1.1111112
        %v4844 = vmul.f32 %v4588, 1.1111112
        %v4845 = vmul.f32 %v4589, 1.1111112
        %v4846 = vmul.f32 %v4590, 1.1111112
        %v4847 = vmul.f32 %v4591, 1.1111112
        %v4848 = vmul.f32 %v4592, 1.1111112
        %v4849 = vmul.f32 %v4593, 1.1111112
        %v4850 = vmul.f32 %v4594, 1.1111112
        %v4851 = vmul.f32 %v4595, 1.1111112
        %v4852 = vmul.f32 %v4596, 1.1111112
        %v4853 = vmul.f32 %v4597, 1.1111112
        %v4854 = vmul.f32 %v4598, 1.1111112
        %v4855 = vmul.f32 %v4599, 1.1111112
        %v4856 = vmul.f32 %v4600, 1.1111112
        %v4857 = vmul.f32 %v4601, 1.1111112
        %v4858 = vmul.f32 %v4602, 1.1111112
        %v4859 = vmul.f32 %v4603, 1.1111112
        %v4860 = vmul.f32 %v4604, 1.1111112
        %v4861 = vmul.f32 %v4605, 1.1111112
        %v4862 = vmul.f32 %v4606, 1.1111112
        %v4863 = vmul.f32 %v4607, 1.1111112
        %v4864 = vmul.f32 %v4608, 1.1111112
        %v4865 = vmul.f32 %v4609, 1.1111112
        %v4866 = vmul.f32 %v4610, 1.1111112
        %v4867 = vmul.f32 %v4611, 1.1111112
        %v4868 = vmul.f32 %v4612, 1.1111112
        %v4869 = vmul.f32 %v4613, 1.1111112
        %v4870 = vmul.f32 %v4614, 1.1111112
        %v4871 = vmul.f32 %v4615, 1.1111112
        %v4872 = vmul.f32 %v4616, 1.1111112
        %v4873 = vmul.f32 %v4617, 1.1111112
        %v4874 = vmul.f32 %v4618, 1.1111112
        %v4875 = vmul.f32 %v4619, 1.1111112
        %v4876 = vmul.f32 %v4620, 1.1111112
        %v4877 = vmul.f32 %v4621, 1.1111112
        %v4878 = vmul.f32 %v4622, 1.1111112
        %v4879 = vmul.f32 %v4623, 1.1111112
        %v4880 = vmul.f32 %v4624, 1.1111112
        %v4881 = vmul.f32 %v4625, 1.1111112
        %v4882 = vmul.f32 %v4626, 1.1111112
        %v4883 = vmul.f32 %v4627, 1.1111112
        %v4884 = vmul.f32 %v4628, 1.1111112
        %v4885 = vmul.f32 %v4629, 1.1111112
        %v4886 = vmul.f32 %v4630, 1.1111112
        %v4887 = vmul.f32 %v4631, 1.1111112
        %v4888 = vmul.f32 %v4632, 1.1111112
        %v4889 = vmul.f32 %v4633, 1.1111112
        %v4890 = vmul.f32 %v4634, 1.1111112
        %v4891 = vmul.f32 %v4635, 1.1111112
        %v4892 = vmul.f32 %v4636, 1.1111112
        %v4893 = vmul.f32 %v4637, 1.1111112
        %v4894 = vmul.f32 %v4638, 1.1111112
        %v4895 = vmul.f32 %v4639, 1.1111112
        %v4896 = vmul.f32 %v4640, 1.1111112
        %v4897 = vmul.f32 %v4641, 1.1111112
        %v4898 = vmul.f32 %v4642, 1.1111112
        %v4899 = vmul.f32 %v4643, 1.1111112
        %v4900 = vmul.f32 %v4644, 1.1111112
        %v4901 = vmul.f32 %v4645, 1.1111112
        %v4902 = vmul.f32 %v4646, 1.1111112
        %v4903 = vmul.f32 %v4647, 1.1111112
        %v4904 = vmul.f32 %v4648, 1.1111112
        %v4905 = vmul.f32 %v4649, 1.1111112
        %v4906 = vmul.f32 %v4650, 1.1111112
        %v4907 = vmul.f32 %v4651, 1.1111112
        %v4908 = vmul.f32 %v4652, 1.1111112
        %v4909 = vmul.f32 %v4653, 1.1111112
        %v4910 = vmul.f32 %v4654, 1.1111112
        %v4911 = vmul.f32 %v4655, 1.1111112
        %v4912 = vmul.f32 %v4656, 1.1111112
        %v4913 = vmul.f32 %v4657, 1.1111112
        %v4914 = vmul.f32 %v4658, 1.1111112
        %v4915 = vmul.f32 %v4659, 1.1111112
        %v4916 = vmul.f32 %v4660, 1.1111112
        %v4917 = vmul.f32 %v4661, 1.1111112
        %v4918 = vmul.f32 %v4662, 1.1111112
        %v4919 = vmul.f32 %v4663, 1.1111112
        %v4920 = vmul.f32 %v4664, 1.1111112
        %v4921 = vmul.f32 %v4665, 1.1111112
        %v4922 = vmul.f32 %v4666, 1.1111112
        %v4923 = vmul.f32 %v4667, 1.1111112
        %v4924 = vmul.f32 %v4668, 1.1111112
        %v4925 = vmul.f32 %v4669, 1.1111112
        %v4926 = vmul.f32 %v4670, 1.1111112
        %v4927 = vmul.f32 %v4671, 1.1111112
        %v4928 = vmul.f32 %v4672, 1.1111112
        %v4929 = vmul.f32 %v4673, 1.1111112
        %v4930 = vmul.f32 %v4674, 1.1111112
        %v4931 = vmul.f32 %v4675, 1.1111112
        %v4932 = vmul.f32 %v4676, 1.1111112
        %v4933 = vmul.f32 %v4677, 1.1111112
        %v4934 = vmul.f32 %v4678, 1.1111112
        %v4935 = vmul.f32 %v4679, 1.1111112
        %v4936 = vmul.f32 %v4680, 1.1111112
        %v4937 = vmul.f32 %v4681, 1.1111112
        %v4938 = vmul.f32 %v4682, 1.1111112
        %v4939 = vmul.f32 %v4683, 1.1111112
        %v4940 = vmul.f32 %v4684, 1.1111112
        %v4941 = vmul.f32 %v4685, 1.1111112
        %v4942 = vmul.f32 %v4686, 1.1111112
        %v4943 = vmul.f32 %v4687, 1.1111112
        %v4944 = vmul.f32 %v4688, 1.1111112
        %v4945 = vmul.f32 %v4689, 1.1111112
        %v4946 = vmul.f32 %v4690, 1.1111112
        %v4947 = vmul.f32 %v4691, 1.1111112
        %v4948 = vmul.f32 %v4692, 1.1111112
        %v4949 = vmul.f32 %v4693, 1.1111112
        %v4950 = vmul.f32 %v4694, 1.1111112
        %v4951 = vmul.f32 %v4695, 1.1111112
        %v4952 = vmul.f32 %v4696, 1.1111112
        %v4953 = vmul.f32 %v4697, 1.1111112
        %v4954 = vmul.f32 %v4698, 1.1111112
        %v4955 = vmul.f32 %v4699, 1.1111112
        %v4956 = vmul.f32 %v4700, 1.1111112
        %v4957 = vmul.f32 %v4701, 1.1111112
        %v4958 = vmul.f32 %v4702, 1.1111112
        %v4959 = vmul.f32 %v4703, 1.1111112
        %v4960 = vsel %vm4192, %v4704, 0.0
        %v4961 = vsel %vm4193, %v4705, 0.0
        %v4962 = vsel %vm4194, %v4706, 0.0
        %v4963 = vsel %vm4195, %v4707, 0.0
        %v4964 = vsel %vm4196, %v4708, 0.0
        %v4965 = vsel %vm4197, %v4709, 0.0
        %v4966 = vsel %vm4198, %v4710, 0.0
        %v4967 = vsel %vm4199, %v4711, 0.0
        %v4968 = vsel %vm4200, %v4712, 0.0
        %v4969 = vsel %vm4201, %v4713, 0.0
        %v4970 = vsel %vm4202, %v4714, 0.0
        %v4971 = vsel %vm4203, %v4715, 0.0
        %v4972 = vsel %vm4204, %v4716, 0.0
        %v4973 = vsel %vm4205, %v4717, 0.0
        %v4974 = vsel %vm4206, %v4718, 0.0
        %v4975 = vsel %vm4207, %v4719, 0.0
        %v4976 = vsel %vm4208, %v4720, 0.0
        %v4977 = vsel %vm4209, %v4721, 0.0
        %v4978 = vsel %vm4210, %v4722, 0.0
        %v4979 = vsel %vm4211, %v4723, 0.0
        %v4980 = vsel %vm4212, %v4724, 0.0
        %v4981 = vsel %vm4213, %v4725, 0.0
        %v4982 = vsel %vm4214, %v4726, 0.0
        %v4983 = vsel %vm4215, %v4727, 0.0
        %v4984 = vsel %vm4216, %v4728, 0.0
        %v4985 = vsel %vm4217, %v4729, 0.0
        %v4986 = vsel %vm4218, %v4730, 0.0
        %v4987 = vsel %vm4219, %v4731, 0.0
        %v4988 = vsel %vm4220, %v4732, 0.0
        %v4989 = vsel %vm4221, %v4733, 0.0
        %v4990 = vsel %vm4222, %v4734, 0.0
        %v4991 = vsel %vm4223, %v4735, 0.0
        %v4992 = vsel %vm4224, %v4736, 0.0
        %v4993 = vsel %vm4225, %v4737, 0.0
        %v4994 = vsel %vm4226, %v4738, 0.0
        %v4995 = vsel %vm4227, %v4739, 0.0
        %v4996 = vsel %vm4228, %v4740, 0.0
        %v4997 = vsel %vm4229, %v4741, 0.0
        %v4998 = vsel %vm4230, %v4742, 0.0
        %v4999 = vsel %vm4231, %v4743, 0.0
        %v5000 = vsel %vm4232, %v4744, 0.0
        %v5001 = vsel %vm4233, %v4745, 0.0
        %v5002 = vsel %vm4234, %v4746, 0.0
        %v5003 = vsel %vm4235, %v4747, 0.0
        %v5004 = vsel %vm4236, %v4748, 0.0
        %v5005 = vsel %vm4237, %v4749, 0.0
        %v5006 = vsel %vm4238, %v4750, 0.0
        %v5007 = vsel %vm4239, %v4751, 0.0
        %v5008 = vsel %vm4240, %v4752, 0.0
        %v5009 = vsel %vm4241, %v4753, 0.0
        %v5010 = vsel %vm4242, %v4754, 0.0
        %v5011 = vsel %vm4243, %v4755, 0.0
        %v5012 = vsel %vm4244, %v4756, 0.0
        %v5013 = vsel %vm4245, %v4757, 0.0
        %v5014 = vsel %vm4246, %v4758, 0.0
        %v5015 = vsel %vm4247, %v4759, 0.0
        %v5016 = vsel %vm4248, %v4760, 0.0
        %v5017 = vsel %vm4249, %v4761, 0.0
        %v5018 = vsel %vm4250, %v4762, 0.0
        %v5019 = vsel %vm4251, %v4763, 0.0
        %v5020 = vsel %vm4252, %v4764, 0.0
        %v5021 = vsel %vm4253, %v4765, 0.0
        %v5022 = vsel %vm4254, %v4766, 0.0
        %v5023 = vsel %vm4255, %v4767, 0.0
        %v5024 = vsel %vm4256, %v4768, 0.0
        %v5025 = vsel %vm4257, %v4769, 0.0
        %v5026 = vsel %vm4258, %v4770, 0.0
        %v5027 = vsel %vm4259, %v4771, 0.0
        %v5028 = vsel %vm4260, %v4772, 0.0
        %v5029 = vsel %vm4261, %v4773, 0.0
        %v5030 = vsel %vm4262, %v4774, 0.0
        %v5031 = vsel %vm4263, %v4775, 0.0
        %v5032 = vsel %vm4264, %v4776, 0.0
        %v5033 = vsel %vm4265, %v4777, 0.0
        %v5034 = vsel %vm4266, %v4778, 0.0
        %v5035 = vsel %vm4267, %v4779, 0.0
        %v5036 = vsel %vm4268, %v4780, 0.0
        %v5037 = vsel %vm4269, %v4781, 0.0
        %v5038 = vsel %vm4270, %v4782, 0.0
        %v5039 = vsel %vm4271, %v4783, 0.0
        %v5040 = vsel %vm4272, %v4784, 0.0
        %v5041 = vsel %vm4273, %v4785, 0.0
        %v5042 = vsel %vm4274, %v4786, 0.0
        %v5043 = vsel %vm4275, %v4787, 0.0
        %v5044 = vsel %vm4276, %v4788, 0.0
        %v5045 = vsel %vm4277, %v4789, 0.0
        %v5046 = vsel %vm4278, %v4790, 0.0
        %v5047 = vsel %vm4279, %v4791, 0.0
        %v5048 = vsel %vm4280, %v4792, 0.0
        %v5049 = vsel %vm4281, %v4793, 0.0
        %v5050 = vsel %vm4282, %v4794, 0.0
        %v5051 = vsel %vm4283, %v4795, 0.0
        %v5052 = vsel %vm4284, %v4796, 0.0
        %v5053 = vsel %vm4285, %v4797, 0.0
        %v5054 = vsel %vm4286, %v4798, 0.0
        %v5055 = vsel %vm4287, %v4799, 0.0
        %v5056 = vsel %vm4288, %v4800, 0.0
        %v5057 = vsel %vm4289, %v4801, 0.0
        %v5058 = vsel %vm4290, %v4802, 0.0
        %v5059 = vsel %vm4291, %v4803, 0.0
        %v5060 = vsel %vm4292, %v4804, 0.0
        %v5061 = vsel %vm4293, %v4805, 0.0
        %v5062 = vsel %vm4294, %v4806, 0.0
        %v5063 = vsel %vm4295, %v4807, 0.0
        %v5064 = vsel %vm4296, %v4808, 0.0
        %v5065 = vsel %vm4297, %v4809, 0.0
        %v5066 = vsel %vm4298, %v4810, 0.0
        %v5067 = vsel %vm4299, %v4811, 0.0
        %v5068 = vsel %vm4300, %v4812, 0.0
        %v5069 = vsel %vm4301, %v4813, 0.0
        %v5070 = vsel %vm4302, %v4814, 0.0
        %v5071 = vsel %vm4303, %v4815, 0.0
        %v5072 = vsel %vm4304, %v4816, 0.0
        %v5073 = vsel %vm4305, %v4817, 0.0
        %v5074 = vsel %vm4306, %v4818, 0.0
        %v5075 = vsel %vm4307, %v4819, 0.0
        %v5076 = vsel %vm4308, %v4820, 0.0
        %v5077 = vsel %vm4309, %v4821, 0.0
        %v5078 = vsel %vm4310, %v4822, 0.0
        %v5079 = vsel %vm4311, %v4823, 0.0
        %v5080 = vsel %vm4312, %v4824, 0.0
        %v5081 = vsel %vm4313, %v4825, 0.0
        %v5082 = vsel %vm4314, %v4826, 0.0
        %v5083 = vsel %vm4315, %v4827, 0.0
        %v5084 = vsel %vm4316, %v4828, 0.0
        %v5085 = vsel %vm4317, %v4829, 0.0
        %v5086 = vsel %vm4318, %v4830, 0.0
        %v5087 = vsel %vm4319, %v4831, 0.0
        %v5088 = vsel %vm4320, %v4832, 0.0
        %v5089 = vsel %vm4321, %v4833, 0.0
        %v5090 = vsel %vm4322, %v4834, 0.0
        %v5091 = vsel %vm4323, %v4835, 0.0
        %v5092 = vsel %vm4324, %v4836, 0.0
        %v5093 = vsel %vm4325, %v4837, 0.0
        %v5094 = vsel %vm4326, %v4838, 0.0
        %v5095 = vsel %vm4327, %v4839, 0.0
        %v5096 = vsel %vm4328, %v4840, 0.0
        %v5097 = vsel %vm4329, %v4841, 0.0
        %v5098 = vsel %vm4330, %v4842, 0.0
        %v5099 = vsel %vm4331, %v4843, 0.0
        %v5100 = vsel %vm4332, %v4844, 0.0
        %v5101 = vsel %vm4333, %v4845, 0.0
        %v5102 = vsel %vm4334, %v4846, 0.0
        %v5103 = vsel %vm4335, %v4847, 0.0
        %v5104 = vsel %vm4336, %v4848, 0.0
        %v5105 = vsel %vm4337, %v4849, 0.0
        %v5106 = vsel %vm4338, %v4850, 0.0
        %v5107 = vsel %vm4339, %v4851, 0.0
        %v5108 = vsel %vm4340, %v4852, 0.0
        %v5109 = vsel %vm4341, %v4853, 0.0
        %v5110 = vsel %vm4342, %v4854, 0.0
        %v5111 = vsel %vm4343, %v4855, 0.0
        %v5112 = vsel %vm4344, %v4856, 0.0
        %v5113 = vsel %vm4345, %v4857, 0.0
        %v5114 = vsel %vm4346, %v4858, 0.0
        %v5115 = vsel %vm4347, %v4859, 0.0
        %v5116 = vsel %vm4348, %v4860, 0.0
        %v5117 = vsel %vm4349, %v4861, 0.0
        %v5118 = vsel %vm4350, %v4862, 0.0
        %v5119 = vsel %vm4351, %v4863, 0.0
        %v5120 = vsel %vm4352, %v4864, 0.0
        %v5121 = vsel %vm4353, %v4865, 0.0
        %v5122 = vsel %vm4354, %v4866, 0.0
        %v5123 = vsel %vm4355, %v4867, 0.0
        %v5124 = vsel %vm4356, %v4868, 0.0
        %v5125 = vsel %vm4357, %v4869, 0.0
        %v5126 = vsel %vm4358, %v4870, 0.0
        %v5127 = vsel %vm4359, %v4871, 0.0
        %v5128 = vsel %vm4360, %v4872, 0.0
        %v5129 = vsel %vm4361, %v4873, 0.0
        %v5130 = vsel %vm4362, %v4874, 0.0
        %v5131 = vsel %vm4363, %v4875, 0.0
        %v5132 = vsel %vm4364, %v4876, 0.0
        %v5133 = vsel %vm4365, %v4877, 0.0
        %v5134 = vsel %vm4366, %v4878, 0.0
        %v5135 = vsel %vm4367, %v4879, 0.0
        %v5136 = vsel %vm4368, %v4880, 0.0
        %v5137 = vsel %vm4369, %v4881, 0.0
        %v5138 = vsel %vm4370, %v4882, 0.0
        %v5139 = vsel %vm4371, %v4883, 0.0
        %v5140 = vsel %vm4372, %v4884, 0.0
        %v5141 = vsel %vm4373, %v4885, 0.0
        %v5142 = vsel %vm4374, %v4886, 0.0
        %v5143 = vsel %vm4375, %v4887, 0.0
        %v5144 = vsel %vm4376, %v4888, 0.0
        %v5145 = vsel %vm4377, %v4889, 0.0
        %v5146 = vsel %vm4378, %v4890, 0.0
        %v5147 = vsel %vm4379, %v4891, 0.0
        %v5148 = vsel %vm4380, %v4892, 0.0
        %v5149 = vsel %vm4381, %v4893, 0.0
        %v5150 = vsel %vm4382, %v4894, 0.0
        %v5151 = vsel %vm4383, %v4895, 0.0
        %v5152 = vsel %vm4384, %v4896, 0.0
        %v5153 = vsel %vm4385, %v4897, 0.0
        %v5154 = vsel %vm4386, %v4898, 0.0
        %v5155 = vsel %vm4387, %v4899, 0.0
        %v5156 = vsel %vm4388, %v4900, 0.0
        %v5157 = vsel %vm4389, %v4901, 0.0
        %v5158 = vsel %vm4390, %v4902, 0.0
        %v5159 = vsel %vm4391, %v4903, 0.0
        %v5160 = vsel %vm4392, %v4904, 0.0
        %v5161 = vsel %vm4393, %v4905, 0.0
        %v5162 = vsel %vm4394, %v4906, 0.0
        %v5163 = vsel %vm4395, %v4907, 0.0
        %v5164 = vsel %vm4396, %v4908, 0.0
        %v5165 = vsel %vm4397, %v4909, 0.0
        %v5166 = vsel %vm4398, %v4910, 0.0
        %v5167 = vsel %vm4399, %v4911, 0.0
        %v5168 = vsel %vm4400, %v4912, 0.0
        %v5169 = vsel %vm4401, %v4913, 0.0
        %v5170 = vsel %vm4402, %v4914, 0.0
        %v5171 = vsel %vm4403, %v4915, 0.0
        %v5172 = vsel %vm4404, %v4916, 0.0
        %v5173 = vsel %vm4405, %v4917, 0.0
        %v5174 = vsel %vm4406, %v4918, 0.0
        %v5175 = vsel %vm4407, %v4919, 0.0
        %v5176 = vsel %vm4408, %v4920, 0.0
        %v5177 = vsel %vm4409, %v4921, 0.0
        %v5178 = vsel %vm4410, %v4922, 0.0
        %v5179 = vsel %vm4411, %v4923, 0.0
        %v5180 = vsel %vm4412, %v4924, 0.0
        %v5181 = vsel %vm4413, %v4925, 0.0
        %v5182 = vsel %vm4414, %v4926, 0.0
        %v5183 = vsel %vm4415, %v4927, 0.0
        %v5184 = vsel %vm4416, %v4928, 0.0
        %v5185 = vsel %vm4417, %v4929, 0.0
        %v5186 = vsel %vm4418, %v4930, 0.0
        %v5187 = vsel %vm4419, %v4931, 0.0
        %v5188 = vsel %vm4420, %v4932, 0.0
        %v5189 = vsel %vm4421, %v4933, 0.0
        %v5190 = vsel %vm4422, %v4934, 0.0
        %v5191 = vsel %vm4423, %v4935, 0.0
        %v5192 = vsel %vm4424, %v4936, 0.0
        %v5193 = vsel %vm4425, %v4937, 0.0
        %v5194 = vsel %vm4426, %v4938, 0.0
        %v5195 = vsel %vm4427, %v4939, 0.0
        %v5196 = vsel %vm4428, %v4940, 0.0
        %v5197 = vsel %vm4429, %v4941, 0.0
        %v5198 = vsel %vm4430, %v4942, 0.0
        %v5199 = vsel %vm4431, %v4943, 0.0
        %v5200 = vsel %vm4432, %v4944, 0.0
        %v5201 = vsel %vm4433, %v4945, 0.0
        %v5202 = vsel %vm4434, %v4946, 0.0
        %v5203 = vsel %vm4435, %v4947, 0.0
        %v5204 = vsel %vm4436, %v4948, 0.0
        %v5205 = vsel %vm4437, %v4949, 0.0
        %v5206 = vsel %vm4438, %v4950, 0.0
        %v5207 = vsel %vm4439, %v4951, 0.0
        %v5208 = vsel %vm4440, %v4952, 0.0
        %v5209 = vsel %vm4441, %v4953, 0.0
        %v5210 = vsel %vm4442, %v4954, 0.0
        %v5211 = vsel %vm4443, %v4955, 0.0
        %v5212 = vsel %vm4444, %v4956, 0.0
        %v5213 = vsel %vm4445, %v4957, 0.0
        %v5214 = vsel %vm4446, %v4958, 0.0
        %v5215 = vsel %vm4447, %v4959, 0.0
        %5216 = vst [vmem:[%s125] sm:$0xff] %v4960
        %5217 = vst [vmem:[%s125 + $0x8] sm:$0xff] %v4961
        %5218 = vst [vmem:[%s125 + $0x10] sm:$0xff] %v4962
        %5219 = vst [vmem:[%s125 + $0x18] sm:$0xff] %v4963
        %5220 = vst [vmem:[%s125 + $0x20] sm:$0xff] %v4964
        %5221 = vst [vmem:[%s125 + $0x28] sm:$0xff] %v4965
        %5222 = vst [vmem:[%s125 + $0x30] sm:$0xff] %v4966
        %5223 = vst [vmem:[%s125 + $0x38] sm:$0xff] %v4967
        %5224 = vst [vmem:[%s125 + $0x40] sm:$0xff] %v4968
        %5225 = vst [vmem:[%s125 + $0x48] sm:$0xff] %v4969
        %5226 = vst [vmem:[%s125 + $0x50] sm:$0xff] %v4970
        %5227 = vst [vmem:[%s125 + $0x58] sm:$0xff] %v4971
        %5228 = vst [vmem:[%s125 + $0x60] sm:$0xff] %v4972
        %5229 = vst [vmem:[%s125 + $0x68] sm:$0xff] %v4973
        %5230 = vst [vmem:[%s125 + $0x70] sm:$0xff] %v4974
        %5231 = vst [vmem:[%s125 + $0x78] sm:$0xff] %v4975
        %5232 = vst [vmem:[%s125 + $0x80] sm:$0xff] %v4976
        %5233 = vst [vmem:[%s125 + $0x88] sm:$0xff] %v4977
        %5234 = vst [vmem:[%s125 + $0x90] sm:$0xff] %v4978
        %5235 = vst [vmem:[%s125 + $0x98] sm:$0xff] %v4979
        %5236 = vst [vmem:[%s125 + $0xa0] sm:$0xff] %v4980
        %5237 = vst [vmem:[%s125 + $0xa8] sm:$0xff] %v4981
        %5238 = vst [vmem:[%s125 + $0xb0] sm:$0xff] %v4982
        %5239 = vst [vmem:[%s125 + $0xb8] sm:$0xff] %v4983
        %5240 = vst [vmem:[%s125 + $0xc0] sm:$0xff] %v4984
        %5241 = vst [vmem:[%s125 + $0xc8] sm:$0xff] %v4985
        %5242 = vst [vmem:[%s125 + $0xd0] sm:$0xff] %v4986
        %5243 = vst [vmem:[%s125 + $0xd8] sm:$0xff] %v4987
        %5244 = vst [vmem:[%s125 + $0xe0] sm:$0xff] %v4988
        %5245 = vst [vmem:[%s125 + $0xe8] sm:$0xff] %v4989
        %5246 = vst [vmem:[%s125 + $0xf0] sm:$0xff] %v4990
        %5247 = vst [vmem:[%s125 + $0xf8] sm:$0xff] %v4991
        %5248 = vst [vmem:[%s125 + $0x100] sm:$0xff] %v4992
        %5249 = vst [vmem:[%s125 + $0x108] sm:$0xff] %v4993
        %5250 = vst [vmem:[%s125 + $0x110] sm:$0xff] %v4994
        %5251 = vst [vmem:[%s125 + $0x118] sm:$0xff] %v4995
        %5252 = vst [vmem:[%s125 + $0x120] sm:$0xff] %v4996
        %5253 = vst [vmem:[%s125 + $0x128] sm:$0xff] %v4997
        %5254 = vst [vmem:[%s125 + $0x130] sm:$0xff] %v4998
        %5255 = vst [vmem:[%s125 + $0x138] sm:$0xff] %v4999
        %5256 = vst [vmem:[%s125 + $0x140] sm:$0xff] %v5000
        %5257 = vst [vmem:[%s125 + $0x148] sm:$0xff] %v5001
        %5258 = vst [vmem:[%s125 + $0x150] sm:$0xff] %v5002
        %5259 = vst [vmem:[%s125 + $0x158] sm:$0xff] %v5003
        %5260 = vst [vmem:[%s125 + $0x160] sm:$0xff] %v5004
        %5261 = vst [vmem:[%s125 + $0x168] sm:$0xff] %v5005
        %5262 = vst [vmem:[%s125 + $0x170] sm:$0xff] %v5006
        %5263 = vst [vmem:[%s125 + $0x178] sm:$0xff] %v5007
        %5264 = vst [vmem:[%s125 + $0x180] sm:$0xff] %v5008
        %5265 = vst [vmem:[%s125 + $0x188] sm:$0xff] %v5009
        %5266 = vst [vmem:[%s125 + $0x190] sm:$0xff] %v5010
        %5267 = vst [vmem:[%s125 + $0x198] sm:$0xff] %v5011
        %5268 = vst [vmem:[%s125 + $0x1a0] sm:$0xff] %v5012
        %5269 = vst [vmem:[%s125 + $0x1a8] sm:$0xff] %v5013
        %5270 = vst [vmem:[%s125 + $0x1b0] sm:$0xff] %v5014
        %5271 = vst [vmem:[%s125 + $0x1b8] sm:$0xff] %v5015
        %5272 = vst [vmem:[%s125 + $0x1c0] sm:$0xff] %v5016
        %5273 = vst [vmem:[%s125 + $0x1c8] sm:$0xff] %v5017
        %5274 = vst [vmem:[%s125 + $0x1d0] sm:$0xff] %v5018
        %5275 = vst [vmem:[%s125 + $0x1d8] sm:$0xff] %v5019
        %5276 = vst [vmem:[%s125 + $0x1e0] sm:$0xff] %v5020
        %5277 = vst [vmem:[%s125 + $0x1e8] sm:$0xff] %v5021
        %5278 = vst [vmem:[%s125 + $0x1f0] sm:$0xff] %v5022
        %5279 = vst [vmem:[%s125 + $0x1f8] sm:$0xff] %v5023
        %5280 = vst [vmem:[%s125 + $0x200] sm:$0xff] %v5024
        %5281 = vst [vmem:[%s125 + $0x208] sm:$0xff] %v5025
        %5282 = vst [vmem:[%s125 + $0x210] sm:$0xff] %v5026
        %5283 = vst [vmem:[%s125 + $0x218] sm:$0xff] %v5027
        %5284 = vst [vmem:[%s125 + $0x220] sm:$0xff] %v5028
        %5285 = vst [vmem:[%s125 + $0x228] sm:$0xff] %v5029
        %5286 = vst [vmem:[%s125 + $0x230] sm:$0xff] %v5030
        %5287 = vst [vmem:[%s125 + $0x238] sm:$0xff] %v5031
        %5288 = vst [vmem:[%s125 + $0x240] sm:$0xff] %v5032
        %5289 = vst [vmem:[%s125 + $0x248] sm:$0xff] %v5033
        %5290 = vst [vmem:[%s125 + $0x250] sm:$0xff] %v5034
        %5291 = vst [vmem:[%s125 + $0x258] sm:$0xff] %v5035
        %5292 = vst [vmem:[%s125 + $0x260] sm:$0xff] %v5036
        %5293 = vst [vmem:[%s125 + $0x268] sm:$0xff] %v5037
        %5294 = vst [vmem:[%s125 + $0x270] sm:$0xff] %v5038
        %5295 = vst [vmem:[%s125 + $0x278] sm:$0xff] %v5039
        %5296 = vst [vmem:[%s125 + $0x280] sm:$0xff] %v5040
        %5297 = vst [vmem:[%s125 + $0x288] sm:$0xff] %v5041
        %5298 = vst [vmem:[%s125 + $0x290] sm:$0xff] %v5042
        %5299 = vst [vmem:[%s125 + $0x298] sm:$0xff] %v5043
        %5300 = vst [vmem:[%s125 + $0x2a0] sm:$0xff] %v5044
        %5301 = vst [vmem:[%s125 + $0x2a8] sm:$0xff] %v5045
        %5302 = vst [vmem:[%s125 + $0x2b0] sm:$0xff] %v5046
        %5303 = vst [vmem:[%s125 + $0x2b8] sm:$0xff] %v5047
        %5304 = vst [vmem:[%s125 + $0x2c0] sm:$0xff] %v5048
        %5305 = vst [vmem:[%s125 + $0x2c8] sm:$0xff] %v5049
        %5306 = vst [vmem:[%s125 + $0x2d0] sm:$0xff] %v5050
        %5307 = vst [vmem:[%s125 + $0x2d8] sm:$0xff] %v5051
        %5308 = vst [vmem:[%s125 + $0x2e0] sm:$0xff] %v5052
        %5309 = vst [vmem:[%s125 + $0x2e8] sm:$0xff] %v5053
        %5310 = vst [vmem:[%s125 + $0x2f0] sm:$0xff] %v5054
        %5311 = vst [vmem:[%s125 + $0x2f8] sm:$0xff] %v5055
        %5312 = vst [vmem:[%s125 + $0x300] sm:$0xff] %v5056
        %5313 = vst [vmem:[%s125 + $0x308] sm:$0xff] %v5057
        %5314 = vst [vmem:[%s125 + $0x310] sm:$0xff] %v5058
        %5315 = vst [vmem:[%s125 + $0x318] sm:$0xff] %v5059
        %5316 = vst [vmem:[%s125 + $0x320] sm:$0xff] %v5060
        %5317 = vst [vmem:[%s125 + $0x328] sm:$0xff] %v5061
        %5318 = vst [vmem:[%s125 + $0x330] sm:$0xff] %v5062
        %5319 = vst [vmem:[%s125 + $0x338] sm:$0xff] %v5063
        %5320 = vst [vmem:[%s125 + $0x340] sm:$0xff] %v5064
        %5321 = vst [vmem:[%s125 + $0x348] sm:$0xff] %v5065
        %5322 = vst [vmem:[%s125 + $0x350] sm:$0xff] %v5066
        %5323 = vst [vmem:[%s125 + $0x358] sm:$0xff] %v5067
        %5324 = vst [vmem:[%s125 + $0x360] sm:$0xff] %v5068
        %5325 = vst [vmem:[%s125 + $0x368] sm:$0xff] %v5069
        %5326 = vst [vmem:[%s125 + $0x370] sm:$0xff] %v5070
        %5327 = vst [vmem:[%s125 + $0x378] sm:$0xff] %v5071
        %5328 = vst [vmem:[%s125 + $0x380] sm:$0xff] %v5072
        %5329 = vst [vmem:[%s125 + $0x388] sm:$0xff] %v5073
        %5330 = vst [vmem:[%s125 + $0x390] sm:$0xff] %v5074
        %5331 = vst [vmem:[%s125 + $0x398] sm:$0xff] %v5075
        %5332 = vst [vmem:[%s125 + $0x3a0] sm:$0xff] %v5076
        %5333 = vst [vmem:[%s125 + $0x3a8] sm:$0xff] %v5077
        %5334 = vst [vmem:[%s125 + $0x3b0] sm:$0xff] %v5078
        %5335 = vst [vmem:[%s125 + $0x3b8] sm:$0xff] %v5079
        %5336 = vst [vmem:[%s125 + $0x3c0] sm:$0xff] %v5080
        %5337 = vst [vmem:[%s125 + $0x3c8] sm:$0xff] %v5081
        %5338 = vst [vmem:[%s125 + $0x3d0] sm:$0xff] %v5082
        %5339 = vst [vmem:[%s125 + $0x3d8] sm:$0xff] %v5083
        %5340 = vst [vmem:[%s125 + $0x3e0] sm:$0xff] %v5084
        %5341 = vst [vmem:[%s125 + $0x3e8] sm:$0xff] %v5085
        %5342 = vst [vmem:[%s125 + $0x3f0] sm:$0xff] %v5086
        %5343 = vst [vmem:[%s125 + $0x3f8] sm:$0xff] %v5087
        %5344 = vst [vmem:[%s125 + $0x400] sm:$0xff] %v5088
        %5345 = vst [vmem:[%s125 + $0x408] sm:$0xff] %v5089
        %5346 = vst [vmem:[%s125 + $0x410] sm:$0xff] %v5090
        %5347 = vst [vmem:[%s125 + $0x418] sm:$0xff] %v5091
        %5348 = vst [vmem:[%s125 + $0x420] sm:$0xff] %v5092
        %5349 = vst [vmem:[%s125 + $0x428] sm:$0xff] %v5093
        %5350 = vst [vmem:[%s125 + $0x430] sm:$0xff] %v5094
        %5351 = vst [vmem:[%s125 + $0x438] sm:$0xff] %v5095
        %5352 = vst [vmem:[%s125 + $0x440] sm:$0xff] %v5096
        %5353 = vst [vmem:[%s125 + $0x448] sm:$0xff] %v5097
        %5354 = vst [vmem:[%s125 + $0x450] sm:$0xff] %v5098
        %5355 = vst [vmem:[%s125 + $0x458] sm:$0xff] %v5099
        %5356 = vst [vmem:[%s125 + $0x460] sm:$0xff] %v5100
        %5357 = vst [vmem:[%s125 + $0x468] sm:$0xff] %v5101
        %5358 = vst [vmem:[%s125 + $0x470] sm:$0xff] %v5102
        %5359 = vst [vmem:[%s125 + $0x478] sm:$0xff] %v5103
        %5360 = vst [vmem:[%s125 + $0x480] sm:$0xff] %v5104
        %5361 = vst [vmem:[%s125 + $0x488] sm:$0xff] %v5105
        %5362 = vst [vmem:[%s125 + $0x490] sm:$0xff] %v5106
        %5363 = vst [vmem:[%s125 + $0x498] sm:$0xff] %v5107
        %5364 = vst [vmem:[%s125 + $0x4a0] sm:$0xff] %v5108
        %5365 = vst [vmem:[%s125 + $0x4a8] sm:$0xff] %v5109
        %5366 = vst [vmem:[%s125 + $0x4b0] sm:$0xff] %v5110
        %5367 = vst [vmem:[%s125 + $0x4b8] sm:$0xff] %v5111
        %5368 = vst [vmem:[%s125 + $0x4c0] sm:$0xff] %v5112
        %5369 = vst [vmem:[%s125 + $0x4c8] sm:$0xff] %v5113
        %5370 = vst [vmem:[%s125 + $0x4d0] sm:$0xff] %v5114
        %5371 = vst [vmem:[%s125 + $0x4d8] sm:$0xff] %v5115
        %5372 = vst [vmem:[%s125 + $0x4e0] sm:$0xff] %v5116
        %5373 = vst [vmem:[%s125 + $0x4e8] sm:$0xff] %v5117
        %5374 = vst [vmem:[%s125 + $0x4f0] sm:$0xff] %v5118
        %5375 = vst [vmem:[%s125 + $0x4f8] sm:$0xff] %v5119
        %5376 = vst [vmem:[%s125 + $0x500] sm:$0xff] %v5120
        %5377 = vst [vmem:[%s125 + $0x508] sm:$0xff] %v5121
        %5378 = vst [vmem:[%s125 + $0x510] sm:$0xff] %v5122
        %5379 = vst [vmem:[%s125 + $0x518] sm:$0xff] %v5123
        %5380 = vst [vmem:[%s125 + $0x520] sm:$0xff] %v5124
        %5381 = vst [vmem:[%s125 + $0x528] sm:$0xff] %v5125
        %5382 = vst [vmem:[%s125 + $0x530] sm:$0xff] %v5126
        %5383 = vst [vmem:[%s125 + $0x538] sm:$0xff] %v5127
        %5384 = vst [vmem:[%s125 + $0x540] sm:$0xff] %v5128
        %5385 = vst [vmem:[%s125 + $0x548] sm:$0xff] %v5129
        %5386 = vst [vmem:[%s125 + $0x550] sm:$0xff] %v5130
        %5387 = vst [vmem:[%s125 + $0x558] sm:$0xff] %v5131
        %5388 = vst [vmem:[%s125 + $0x560] sm:$0xff] %v5132
        %5389 = vst [vmem:[%s125 + $0x568] sm:$0xff] %v5133
        %5390 = vst [vmem:[%s125 + $0x570] sm:$0xff] %v5134
        %5391 = vst [vmem:[%s125 + $0x578] sm:$0xff] %v5135
        %5392 = vst [vmem:[%s125 + $0x580] sm:$0xff] %v5136
        %5393 = vst [vmem:[%s125 + $0x588] sm:$0xff] %v5137
        %5394 = vst [vmem:[%s125 + $0x590] sm:$0xff] %v5138
        %5395 = vst [vmem:[%s125 + $0x598] sm:$0xff] %v5139
        %5396 = vst [vmem:[%s125 + $0x5a0] sm:$0xff] %v5140
        %5397 = vst [vmem:[%s125 + $0x5a8] sm:$0xff] %v5141
        %5398 = vst [vmem:[%s125 + $0x5b0] sm:$0xff] %v5142
        %5399 = vst [vmem:[%s125 + $0x5b8] sm:$0xff] %v5143
        %5400 = vst [vmem:[%s125 + $0x5c0] sm:$0xff] %v5144
        %5401 = vst [vmem:[%s125 + $0x5c8] sm:$0xff] %v5145
        %5402 = vst [vmem:[%s125 + $0x5d0] sm:$0xff] %v5146
        %5403 = vst [vmem:[%s125 + $0x5d8] sm:$0xff] %v5147
        %5404 = vst [vmem:[%s125 + $0x5e0] sm:$0xff] %v5148
        %5405 = vst [vmem:[%s125 + $0x5e8] sm:$0xff] %v5149
        %5406 = vst [vmem:[%s125 + $0x5f0] sm:$0xff] %v5150
        %5407 = vst [vmem:[%s125 + $0x5f8] sm:$0xff] %v5151
        %5408 = vst [vmem:[%s125 + $0x600] sm:$0xff] %v5152
        %5409 = vst [vmem:[%s125 + $0x608] sm:$0xff] %v5153
        %5410 = vst [vmem:[%s125 + $0x610] sm:$0xff] %v5154
        %5411 = vst [vmem:[%s125 + $0x618] sm:$0xff] %v5155
        %5412 = vst [vmem:[%s125 + $0x620] sm:$0xff] %v5156
        %5413 = vst [vmem:[%s125 + $0x628] sm:$0xff] %v5157
        %5414 = vst [vmem:[%s125 + $0x630] sm:$0xff] %v5158
        %5415 = vst [vmem:[%s125 + $0x638] sm:$0xff] %v5159
        %5416 = vst [vmem:[%s125 + $0x640] sm:$0xff] %v5160
        %5417 = vst [vmem:[%s125 + $0x648] sm:$0xff] %v5161
        %5418 = vst [vmem:[%s125 + $0x650] sm:$0xff] %v5162
        %5419 = vst [vmem:[%s125 + $0x658] sm:$0xff] %v5163
        %5420 = vst [vmem:[%s125 + $0x660] sm:$0xff] %v5164
        %5421 = vst [vmem:[%s125 + $0x668] sm:$0xff] %v5165
        %5422 = vst [vmem:[%s125 + $0x670] sm:$0xff] %v5166
        %5423 = vst [vmem:[%s125 + $0x678] sm:$0xff] %v5167
        %5424 = vst [vmem:[%s125 + $0x680] sm:$0xff] %v5168
        %5425 = vst [vmem:[%s125 + $0x688] sm:$0xff] %v5169
        %5426 = vst [vmem:[%s125 + $0x690] sm:$0xff] %v5170
        %5427 = vst [vmem:[%s125 + $0x698] sm:$0xff] %v5171
        %5428 = vst [vmem:[%s125 + $0x6a0] sm:$0xff] %v5172
        %5429 = vst [vmem:[%s125 + $0x6a8] sm:$0xff] %v5173
        %5430 = vst [vmem:[%s125 + $0x6b0] sm:$0xff] %v5174
        %5431 = vst [vmem:[%s125 + $0x6b8] sm:$0xff] %v5175
        %5432 = vst [vmem:[%s125 + $0x6c0] sm:$0xff] %v5176
        %5433 = vst [vmem:[%s125 + $0x6c8] sm:$0xff] %v5177
        %5434 = vst [vmem:[%s125 + $0x6d0] sm:$0xff] %v5178
        %5435 = vst [vmem:[%s125 + $0x6d8] sm:$0xff] %v5179
        %5436 = vst [vmem:[%s125 + $0x6e0] sm:$0xff] %v5180
        %5437 = vst [vmem:[%s125 + $0x6e8] sm:$0xff] %v5181
        %5438 = vst [vmem:[%s125 + $0x6f0] sm:$0xff] %v5182
        %5439 = vst [vmem:[%s125 + $0x6f8] sm:$0xff] %v5183
        %5440 = vst [vmem:[%s125 + $0x700] sm:$0xff] %v5184
        %5441 = vst [vmem:[%s125 + $0x708] sm:$0xff] %v5185
        %5442 = vst [vmem:[%s125 + $0x710] sm:$0xff] %v5186
        %5443 = vst [vmem:[%s125 + $0x718] sm:$0xff] %v5187
        %5444 = vst [vmem:[%s125 + $0x720] sm:$0xff] %v5188
        %5445 = vst [vmem:[%s125 + $0x728] sm:$0xff] %v5189
        %5446 = vst [vmem:[%s125 + $0x730] sm:$0xff] %v5190
        %5447 = vst [vmem:[%s125 + $0x738] sm:$0xff] %v5191
        %5448 = vst [vmem:[%s125 + $0x740] sm:$0xff] %v5192
        %5449 = vst [vmem:[%s125 + $0x748] sm:$0xff] %v5193
        %5450 = vst [vmem:[%s125 + $0x750] sm:$0xff] %v5194
        %5451 = vst [vmem:[%s125 + $0x758] sm:$0xff] %v5195
        %5452 = vst [vmem:[%s125 + $0x760] sm:$0xff] %v5196
        %5453 = vst [vmem:[%s125 + $0x768] sm:$0xff] %v5197
        %5454 = vst [vmem:[%s125 + $0x770] sm:$0xff] %v5198
        %5455 = vst [vmem:[%s125 + $0x778] sm:$0xff] %v5199
        %5456 = vst [vmem:[%s125 + $0x780] sm:$0xff] %v5200
        %5457 = vst [vmem:[%s125 + $0x788] sm:$0xff] %v5201
        %5458 = vst [vmem:[%s125 + $0x790] sm:$0xff] %v5202
        %5459 = vst [vmem:[%s125 + $0x798] sm:$0xff] %v5203
        %5460 = vst [vmem:[%s125 + $0x7a0] sm:$0xff] %v5204
        %5461 = vst [vmem:[%s125 + $0x7a8] sm:$0xff] %v5205
        %5462 = vst [vmem:[%s125 + $0x7b0] sm:$0xff] %v5206
        %5463 = vst [vmem:[%s125 + $0x7b8] sm:$0xff] %v5207
        %5464 = vst [vmem:[%s125 + $0x7c0] sm:$0xff] %v5208
        %5465 = vst [vmem:[%s125 + $0x7c8] sm:$0xff] %v5209
        %5466 = vst [vmem:[%s125 + $0x7d0] sm:$0xff] %v5210
        %5467 = vst [vmem:[%s125 + $0x7d8] sm:$0xff] %v5211
        %5468 = vst [vmem:[%s125 + $0x7e0] sm:$0xff] %v5212
        %5469 = vst [vmem:[%s125 + $0x7e8] sm:$0xff] %v5213
        %5470 = vst [vmem:[%s125 + $0x7f0] sm:$0xff] %v5214
        %5471 = vst [vmem:[%s125 + $0x7f8] sm:$0xff] %v5215
        %s5472 = sand.u32 %s48, 1
        %s5473 = sand.u32 %s48, 1
        %s5474 = smul.addr %s5473, 2048
        %s5475 = scalar_lea.vmem [#allocation4], %s5474
        // Predicated region
        $region25: #{dropout_pallas.1} parent=23 // pred_check
          %p5476 = pneg %p58
        $region26: #{dropout_pallas.1} parent=23 // pred_check_branch
          %5478 = sbr.rel (%p5476) target = $region28
        $region27: #{dropout_pallas.1} parent=23 // pred_region
          %s5479 = smul.u32 64, %s14
          %s5480 = ssub.s32 96, %s5479
          %p5481 = scmp.lt.s32.totalorder %s5480, 64
          %s5482 = scalar_select %p5481, %s5480, 64
          %s5483 = smul.u32 128, %s5482
          %s5484 = smul.u32 %s5483, 4
          %p5485 = scmp.ne.s32.totalorder 0, %s5484
          %s5486 = smul.addr %s5479, 4
          %s5487 = smul.addr %s5486, 8
          %s5488 = scalar_lea.vmem %s2, %s5487
          // Predicated region
          $region29: #{dropout_pallas.1} parent=27 // pred_check
            %p5489 = pneg %p5485
          $region30: #{dropout_pallas.1} parent=27 // pred_check_branch
            %5491 = sbr.rel (%p5489) target = $region32
          $region31: #{dropout_pallas.1} parent=27 // pred_region
            // Predicated region
            $region33: #{dropout_pallas.1} parent=31 // pred_check
              _
            $region34: #{dropout_pallas.1} parent=31 // pred_check_branch
              %5493 = sbr.rel (0) target = $region36
            $region35: #{dropout_pallas.1} parent=31 // pred_region
              %s5494 = sshrl.u32 %s5482, 4
              // While loop
              $region37: #{dropout_pallas.1} parent=35 // loop_pre_header
                _
              $region38: #{dropout_pallas.1} parent=35 // loop_header
                %s5496 = sphi 0, %s5498
                %p5497 = scmp.ge.s32.totalorder %s5496, %s5494
                %s5501 = sphi 0, %s5634
                %s5502 = sphi %s5475, %s5637
                %s5503 = sphi %s5488, %s5638
              $region39: #{dropout_pallas.1} parent=35 // loop_header_branch
                %5500 = sbr.rel (%p5497) target = $region43
              $region40: #{dropout_pallas.1} parent=35 // loop_body
                %v5504 = vld [vmem:[%s5502] sm:$0xff]
                %5505 = vst [vmem:[%s5503] sm:$0xff] %v5504
                %v5506 = vld [vmem:[%s5502 + $0x20] sm:$0xff]
                %5507 = vst [vmem:[%s5503 + $0x20] sm:$0xff] %v5506
                %v5508 = vld [vmem:[%s5502 + $0x40] sm:$0xff]
                %5509 = vst [vmem:[%s5503 + $0x40] sm:$0xff] %v5508
                %v5510 = vld [vmem:[%s5502 + $0x60] sm:$0xff]
                %5511 = vst [vmem:[%s5503 + $0x60] sm:$0xff] %v5510
                %v5512 = vld [vmem:[%s5502 + $0x80] sm:$0xff]
                %5513 = vst [vmem:[%s5503 + $0x80] sm:$0xff] %v5512
                %v5514 = vld [vmem:[%s5502 + $0xa0] sm:$0xff]
                %5515 = vst [vmem:[%s5503 + $0xa0] sm:$0xff] %v5514
                %v5516 = vld [vmem:[%s5502 + $0xc0] sm:$0xff]
                %5517 = vst [vmem:[%s5503 + $0xc0] sm:$0xff] %v5516
                %v5518 = vld [vmem:[%s5502 + $0xe0] sm:$0xff]
                %5519 = vst [vmem:[%s5503 + $0xe0] sm:$0xff] %v5518
                %v5520 = vld [vmem:[%s5502 + $0x100] sm:$0xff]
                %5521 = vst [vmem:[%s5503 + $0x100] sm:$0xff] %v5520
                %v5522 = vld [vmem:[%s5502 + $0x120] sm:$0xff]
                %5523 = vst [vmem:[%s5503 + $0x120] sm:$0xff] %v5522
                %v5524 = vld [vmem:[%s5502 + $0x140] sm:$0xff]
                %5525 = vst [vmem:[%s5503 + $0x140] sm:$0xff] %v5524
                %v5526 = vld [vmem:[%s5502 + $0x160] sm:$0xff]
                %5527 = vst [vmem:[%s5503 + $0x160] sm:$0xff] %v5526
                %v5528 = vld [vmem:[%s5502 + $0x180] sm:$0xff]
                %5529 = vst [vmem:[%s5503 + $0x180] sm:$0xff] %v5528
                %v5530 = vld [vmem:[%s5502 + $0x1a0] sm:$0xff]
                %5531 = vst [vmem:[%s5503 + $0x1a0] sm:$0xff] %v5530
                %v5532 = vld [vmem:[%s5502 + $0x1c0] sm:$0xff]
                %5533 = vst [vmem:[%s5503 + $0x1c0] sm:$0xff] %v5532
                %v5534 = vld [vmem:[%s5502 + $0x1e0] sm:$0xff]
                %5535 = vst [vmem:[%s5503 + $0x1e0] sm:$0xff] %v5534
                %v5536 = vld [vmem:[%s5502 + $0x8] sm:$0xff]
                %5537 = vst [vmem:[%s5503 + $0x8] sm:$0xff] %v5536
                %v5538 = vld [vmem:[%s5502 + $0x28] sm:$0xff]
                %5539 = vst [vmem:[%s5503 + $0x28] sm:$0xff] %v5538
                %v5540 = vld [vmem:[%s5502 + $0x48] sm:$0xff]
                %5541 = vst [vmem:[%s5503 + $0x48] sm:$0xff] %v5540
                %v5542 = vld [vmem:[%s5502 + $0x68] sm:$0xff]
                %5543 = vst [vmem:[%s5503 + $0x68] sm:$0xff] %v5542
                %v5544 = vld [vmem:[%s5502 + $0x88] sm:$0xff]
                %5545 = vst [vmem:[%s5503 + $0x88] sm:$0xff] %v5544
                %v5546 = vld [vmem:[%s5502 + $0xa8] sm:$0xff]
                %5547 = vst [vmem:[%s5503 + $0xa8] sm:$0xff] %v5546
                %v5548 = vld [vmem:[%s5502 + $0xc8] sm:$0xff]
                %5549 = vst [vmem:[%s5503 + $0xc8] sm:$0xff] %v5548
                %v5550 = vld [vmem:[%s5502 + $0xe8] sm:$0xff]
                %5551 = vst [vmem:[%s5503 + $0xe8] sm:$0xff] %v5550
                %v5552 = vld [vmem:[%s5502 + $0x108] sm:$0xff]
                %5553 = vst [vmem:[%s5503 + $0x108] sm:$0xff] %v5552
                %v5554 = vld [vmem:[%s5502 + $0x128] sm:$0xff]
                %5555 = vst [vmem:[%s5503 + $0x128] sm:$0xff] %v5554
                %v5556 = vld [vmem:[%s5502 + $0x148] sm:$0xff]
                %5557 = vst [vmem:[%s5503 + $0x148] sm:$0xff] %v5556
                %v5558 = vld [vmem:[%s5502 + $0x168] sm:$0xff]
                %5559 = vst [vmem:[%s5503 + $0x168] sm:$0xff] %v5558
                %v5560 = vld [vmem:[%s5502 + $0x188] sm:$0xff]
                %5561 = vst [vmem:[%s5503 + $0x188] sm:$0xff] %v5560
                %v5562 = vld [vmem:[%s5502 + $0x1a8] sm:$0xff]
                %5563 = vst [vmem:[%s5503 + $0x1a8] sm:$0xff] %v5562
                %v5564 = vld [vmem:[%s5502 + $0x1c8] sm:$0xff]
                %5565 = vst [vmem:[%s5503 + $0x1c8] sm:$0xff] %v5564
                %v5566 = vld [vmem:[%s5502 + $0x1e8] sm:$0xff]
                %5567 = vst [vmem:[%s5503 + $0x1e8] sm:$0xff] %v5566
                %v5568 = vld [vmem:[%s5502 + $0x10] sm:$0xff]
                %5569 = vst [vmem:[%s5503 + $0x10] sm:$0xff] %v5568
                %v5570 = vld [vmem:[%s5502 + $0x30] sm:$0xff]
                %5571 = vst [vmem:[%s5503 + $0x30] sm:$0xff] %v5570
                %v5572 = vld [vmem:[%s5502 + $0x50] sm:$0xff]
                %5573 = vst [vmem:[%s5503 + $0x50] sm:$0xff] %v5572
                %v5574 = vld [vmem:[%s5502 + $0x70] sm:$0xff]
                %5575 = vst [vmem:[%s5503 + $0x70] sm:$0xff] %v5574
                %v5576 = vld [vmem:[%s5502 + $0x90] sm:$0xff]
                %5577 = vst [vmem:[%s5503 + $0x90] sm:$0xff] %v5576
                %v5578 = vld [vmem:[%s5502 + $0xb0] sm:$0xff]
                %5579 = vst [vmem:[%s5503 + $0xb0] sm:$0xff] %v5578
                %v5580 = vld [vmem:[%s5502 + $0xd0] sm:$0xff]
                %5581 = vst [vmem:[%s5503 + $0xd0] sm:$0xff] %v5580
                %v5582 = vld [vmem:[%s5502 + $0xf0] sm:$0xff]
                %5583 = vst [vmem:[%s5503 + $0xf0] sm:$0xff] %v5582
                %v5584 = vld [vmem:[%s5502 + $0x110] sm:$0xff]
                %5585 = vst [vmem:[%s5503 + $0x110] sm:$0xff] %v5584
                %v5586 = vld [vmem:[%s5502 + $0x130] sm:$0xff]
                %5587 = vst [vmem:[%s5503 + $0x130] sm:$0xff] %v5586
                %v5588 = vld [vmem:[%s5502 + $0x150] sm:$0xff]
                %5589 = vst [vmem:[%s5503 + $0x150] sm:$0xff] %v5588
                %v5590 = vld [vmem:[%s5502 + $0x170] sm:$0xff]
                %5591 = vst [vmem:[%s5503 + $0x170] sm:$0xff] %v5590
                %v5592 = vld [vmem:[%s5502 + $0x190] sm:$0xff]
                %5593 = vst [vmem:[%s5503 + $0x190] sm:$0xff] %v5592
                %v5594 = vld [vmem:[%s5502 + $0x1b0] sm:$0xff]
                %5595 = vst [vmem:[%s5503 + $0x1b0] sm:$0xff] %v5594
                %v5596 = vld [vmem:[%s5502 + $0x1d0] sm:$0xff]
                %5597 = vst [vmem:[%s5503 + $0x1d0] sm:$0xff] %v5596
                %v5598 = vld [vmem:[%s5502 + $0x1f0] sm:$0xff]
                %5599 = vst [vmem:[%s5503 + $0x1f0] sm:$0xff] %v5598
                %v5600 = vld [vmem:[%s5502 + $0x18] sm:$0xff]
                %5601 = vst [vmem:[%s5503 + $0x18] sm:$0xff] %v5600
                %v5602 = vld [vmem:[%s5502 + $0x38] sm:$0xff]
                %5603 = vst [vmem:[%s5503 + $0x38] sm:$0xff] %v5602
                %v5604 = vld [vmem:[%s5502 + $0x58] sm:$0xff]
                %5605 = vst [vmem:[%s5503 + $0x58] sm:$0xff] %v5604
                %v5606 = vld [vmem:[%s5502 + $0x78] sm:$0xff]
                %5607 = vst [vmem:[%s5503 + $0x78] sm:$0xff] %v5606
                %v5608 = vld [vmem:[%s5502 + $0x98] sm:$0xff]
                %5609 = vst [vmem:[%s5503 + $0x98] sm:$0xff] %v5608
                %v5610 = vld [vmem:[%s5502 + $0xb8] sm:$0xff]
                %5611 = vst [vmem:[%s5503 + $0xb8] sm:$0xff] %v5610
                %v5612 = vld [vmem:[%s5502 + $0xd8] sm:$0xff]
                %5613 = vst [vmem:[%s5503 + $0xd8] sm:$0xff] %v5612
                %v5614 = vld [vmem:[%s5502 + $0xf8] sm:$0xff]
                %5615 = vst [vmem:[%s5503 + $0xf8] sm:$0xff] %v5614
                %v5616 = vld [vmem:[%s5502 + $0x118] sm:$0xff]
                %5617 = vst [vmem:[%s5503 + $0x118] sm:$0xff] %v5616
                %v5618 = vld [vmem:[%s5502 + $0x138] sm:$0xff]
                %5619 = vst [vmem:[%s5503 + $0x138] sm:$0xff] %v5618
                %v5620 = vld [vmem:[%s5502 + $0x158] sm:$0xff]
                %5621 = vst [vmem:[%s5503 + $0x158] sm:$0xff] %v5620
                %v5622 = vld [vmem:[%s5502 + $0x178] sm:$0xff]
                %5623 = vst [vmem:[%s5503 + $0x178] sm:$0xff] %v5622
                %v5624 = vld [vmem:[%s5502 + $0x198] sm:$0xff]
                %5625 = vst [vmem:[%s5503 + $0x198] sm:$0xff] %v5624
                %v5626 = vld [vmem:[%s5502 + $0x1b8] sm:$0xff]
                %5627 = vst [vmem:[%s5503 + $0x1b8] sm:$0xff] %v5626
                %v5628 = vld [vmem:[%s5502 + $0x1d8] sm:$0xff]
                %5629 = vst [vmem:[%s5503 + $0x1d8] sm:$0xff] %v5628
                %v5630 = vld [vmem:[%s5502 + $0x1f8] sm:$0xff]
                %5631 = vst [vmem:[%s5503 + $0x1f8] sm:$0xff] %v5630
                %s5632 = sadd.s32 1, %s5501
                %p5633 = scmp.ge.s32.totalorder %s5632, %s5494
                %s5634 = scalar_select %p5633, 0, %s5632
                %s5635 = smul.u32 %s5634, 512
                %s5636 = smul.u32 %s5634, 512
                %s5637 = scalar_lea.vmem %s5475, %s5635 [#allocation4]
                %s5638 = scalar_lea.vmem %s5488, %s5636
              $region41: #{dropout_pallas.1} parent=35 // loop_footer
                %s5498 = sadd.s32 %s5496, 1
              $region42: #{dropout_pallas.1} parent=35 // loop_footer_branch
                %5495 = sbr.rel target = $region38
              $region43: #{dropout_pallas.1} parent=35 // loop_exit
                _
              %s5639 = sshrl.u32 %s5482, 4
              %s5640 = sand.u32 %s5482, 15
              %s5641 = smul.u32 %s5639, 16
              %s5642 = smul.u32 32, %s5641
              %s5643 = scalar_lea.vmem %s5475, %s5642 [#allocation4]
              %s5644 = smul.u32 32, %s5641
              %s5645 = scalar_lea.vmem %s5488, %s5644
              // While loop
              $region44: #{dropout_pallas.1} parent=35 // loop_pre_header
                _
              $region45: #{dropout_pallas.1} parent=35 // loop_header
                %s5647 = sphi 0, %s5649
                %p5648 = scmp.ge.s32.totalorder %s5647, %s5640
                %s5652 = sphi 0, %s5665
                %s5653 = sphi %s5643, %s5668
                %s5654 = sphi %s5645, %s5669
              $region46: #{dropout_pallas.1} parent=35 // loop_header_branch
                %5651 = sbr.rel (%p5648) target = $region50
              $region47: #{dropout_pallas.1} parent=35 // loop_body
                %v5655 = vld [vmem:[%s5653] sm:$0xff]
                %5656 = vst [vmem:[%s5654] sm:$0xff] %v5655
                %v5657 = vld [vmem:[%s5653 + $0x8] sm:$0xff]
                %5658 = vst [vmem:[%s5654 + $0x8] sm:$0xff] %v5657
                %v5659 = vld [vmem:[%s5653 + $0x10] sm:$0xff]
                %5660 = vst [vmem:[%s5654 + $0x10] sm:$0xff] %v5659
                %v5661 = vld [vmem:[%s5653 + $0x18] sm:$0xff]
                %5662 = vst [vmem:[%s5654 + $0x18] sm:$0xff] %v5661
                %s5663 = sadd.s32 1, %s5652
                %p5664 = scmp.ge.s32.totalorder %s5663, %s5640
                %s5665 = scalar_select %p5664, 0, %s5663
                %s5666 = smul.u32 %s5665, 32
                %s5667 = smul.u32 %s5665, 32
                %s5668 = scalar_lea.vmem %s5643, %s5666 [#allocation4]
                %s5669 = scalar_lea.vmem %s5645, %s5667
              $region48: #{dropout_pallas.1} parent=35 // loop_footer
                %s5649 = sadd.s32 %s5647, 1
              $region49: #{dropout_pallas.1} parent=35 // loop_footer_branch
                %5646 = sbr.rel target = $region45
              $region50: #{dropout_pallas.1} parent=35 // loop_exit
                _
            $region36: #{dropout_pallas.1} parent=31 // pred_fallthru
              _
            // Predicated region
            $region51: #{dropout_pallas.1} parent=31 // pred_check
              _
            $region52: #{dropout_pallas.1} parent=31 // pred_check_branch
              %5671 = sbr.rel target = $region54
            $region53: #{dropout_pallas.1} parent=31 // pred_region
              _
            $region54: #{dropout_pallas.1} parent=31 // pred_fallthru
              _
          $region32: #{dropout_pallas.1} parent=27 // pred_fallthru
            _
          %5672 = vnop
        $region28: #{dropout_pallas.1} parent=23 // pred_fallthru
          _
      $region24: #{dropout_pallas.1} parent=5 // pred_fallthru
        _
      %p5673 = scmp.le.s32.totalorder 2, %s9
      // Predicated region
      $region55: #{dropout_pallas.1} parent=5 // pred_check
        %p5674 = pneg %p5673
      $region56: #{dropout_pallas.1} parent=5 // pred_check_branch
        %5676 = sbr.rel (%p5674) target = $region58
      $region57: #{dropout_pallas.1} parent=5 // pred_region
        %s5677 = ssub.s32 %s9, 2
        // Predicated region
        $region59: #{dropout_pallas.1} parent=57 // pred_check
          %p5678 = pneg %p64
        $region60: #{dropout_pallas.1} parent=57 // pred_check_branch
          %5680 = sbr.rel (%p5678) target = $region62
        $region61: #{dropout_pallas.1} parent=57 // pred_region
          %s5681 = sand.u32 %s49, 1
          %s5682 = sand.u32 %s49, 1
          %s5683 = smul.addr %s5682, 2048
          %s5684 = scalar_lea.vmem [#allocation4], %s5683
        $region62: #{dropout_pallas.1} parent=57 // pred_fallthru
          _
      $region58: #{dropout_pallas.1} parent=5 // pred_fallthru
        _
    $region6: #{dropout_pallas.1} parent=1 // loop_footer
      %s13 = sadd.s32 1, %s9
    $region7: #{dropout_pallas.1} parent=1 // loop_footer_branch
      %8 = sbr.rel target = $region3
    $region8: #{dropout_pallas.1} parent=1 // loop_exit
      _

</llo_original>
